<compile_context>
chip_gen: v7x
topology: tpu7x:2x2x1
jax: 0.10.0
libtpu: 0.0.40
codegen_flags: <defaults>
</compile_context>

<pallas_src>
import functools

import jax
import jax.numpy as jnp
from jax import lax
from jax.experimental import pallas as pl
from jax.experimental.pallas import tpu as pltpu

EPS = 1e-5                    # nn.BatchNorm2d default
DOT_DTYPE = jnp.bfloat16      # MXU operand dtype (keep bf16 on v7x: no int MXU)
ACT_DTYPE = jnp.bfloat16      # HBM storage dtype for inter-stage activations


def _cparams(n_par_axes, step_bytes=0):
    """dimension_semantics (+ a raised VMEM limit only when actually needed)."""
    kwargs = dict(dimension_semantics=("parallel",) * n_par_axes)
    need = 2 * int(step_bytes) + (2 << 20)          # ~double-buffered blocks
    if need > (12 << 20):                           # beyond v5e default scoped VMEM
        kwargs["vmem_limit_bytes"] = int(min(max(need, 32 << 20), 56 << 20))
    return pltpu.CompilerParams(**kwargs)


def _partial_stats(y):
    """(rows, C) f32 -> (1, 2, C) [sum, sum-of-squares] partial BN stats."""
    return jnp.concatenate([jnp.sum(y, axis=0, keepdims=True),
                            jnp.sum(y * y, axis=0, keepdims=True)], axis=0)[None]


# --------------------------------------------------------------------------
# Pallas kernels
# --------------------------------------------------------------------------
def _conv1_kernel(x_ref, w_ref, y_ref, st_ref, *, tm, m_total, mask_tail):
    """conv1 (1x1): (TM, Cin) @ (Cin, P) -> bf16 y tile + f32 (sum, sumsq)."""
    y = jnp.dot(x_ref[...].astype(w_ref.dtype), w_ref[...],
                preferred_element_type=jnp.float32)
    y_ref[...] = y.astype(y_ref.dtype)
    if mask_tail:  # only emitted when M % tm != 0; NaN-safe select
        row = lax.broadcasted_iota(jnp.int32, (tm, 1), 0) + pl.program_id(0) * tm
        y = jnp.where(row < m_total, y, 0.0)
    st_ref[...] = _partial_stats(y)


def _conv2_kernel(y1_ref, bn1_ref, w2_ref, y2_ref, st_ref, h_scr,
                  *, hh, ww, d, margin):
    """Per image: BN1-apply + ReLU, stage a height-padded plane in VMEM, then
    the 3x3 dilated conv as 9 shifted taps (width wrap killed by column masks)
    accumulated on the MXU; dense (H*W, P) bf16 output + f32 BN2 partial stats."""
    hw = hh * ww
    p = y1_ref.shape[-1]
    base = margin + d * ww
    lpad = h_scr.shape[0]

    # BN1 affine (f32 math on the bf16-stored y1) + ReLU.
    h = y1_ref[0].astype(jnp.float32) * bn1_ref[0:1, :] + bn1_ref[1:2, :]
    h = jnp.maximum(h, 0.0)

    # Height-padded plane in VMEM: zero bands + one (aligned) interior store.
    h_scr[0:base, :] = jnp.zeros((base, p), h_scr.dtype)
    h_scr[base + hw:lpad, :] = jnp.zeros((lpad - base - hw, p), h_scr.dtype)
    h_scr[base:base + hw, :] = h

    # Column index (in-kernel iota; no mask DMA streams).
    wcol = lax.broadcasted_iota(jnp.int32, (hw, 1), 0) % ww

    taps = []
    for t in range(9):                                   # static 3x3 tap loop
        kh, kw = divmod(t, 3)
        start = margin + kh * d * ww + (kw - 1) * d      # row/col shifted window
        tap = h_scr[start:start + hw, :]
        if kw == 0:
            tap = jnp.where(wcol >= d, tap, 0.0)         # left width-pad columns
        elif kw == 2:
            tap = jnp.where(wcol < ww - d, tap, 0.0)     # right width-pad columns
        taps.append(tap)

    if p % 128 == 0:
        # Lane-aligned channels: single (HW, 9P) @ (9P, P) MXU matmul (deep K).
        x_col = jnp.concatenate([tp.astype(w2_ref.dtype) for tp in taps], axis=1)
        acc = jnp.dot(x_col, w2_ref[...].reshape(9 * p, p),
                      preferred_element_type=jnp.float32)
    else:
        # Small / unaligned channel count: 9 accumulated K=P dots.
        acc = jnp.zeros((hw, w2_ref.shape[-1]), jnp.float32)
        for t, tp in enumerate(taps):
            acc = acc + jnp.dot(tp.astype(w2_ref.dtype), w2_ref[t],
                                preferred_element_type=jnp.float32)

    y2_ref[0] = acc.astype(y2_ref.dtype)
    st_ref[...] = _partial_stats(acc)                    # dense output -> exact stats


def _conv3_kernel(y2_ref, bn2_ref, w3_ref, y3_ref, st_ref,
                  *, tm, m_total, mask_tail):
    """Fused BN2-apply + ReLU + conv3 (1x1) + partial BN3 stats."""
    h = jnp.maximum(
        y2_ref[...].astype(jnp.float32) * bn2_ref[0:1, :] + bn2_ref[1:2, :], 0.0)
    y3 = jnp.dot(h.astype(w3_ref.dtype), w3_ref[...],
                 preferred_element_type=jnp.float32)
    y3_ref[...] = y3.astype(y3_ref.dtype)
    if mask_tail:
        row = lax.broadcasted_iota(jnp.int32, (tm, 1), 0) + pl.program_id(0) * tm
        y3 = jnp.where(row < m_total, y3, 0.0)
    st_ref[...] = _partial_stats(y3)


def _bn_add_relu_kernel(y3_ref, res_ref, bn3_ref, o_ref):
    """Final epilogue: BN3-apply + residual add + ReLU."""
    o_ref[...] = jnp.maximum(
        y3_ref[...].astype(jnp.float32) * bn3_ref[0:1, :] + bn3_ref[1:2, :]
        + res_ref[...], 0.0)


# --------------------------------------------------------------------------
# BN finalize: partial (sum, sumsq) -> fused (scale, shift)   [tiny (C,) glue]
# --------------------------------------------------------------------------
def _bn_scale_shift(partial_stats, count, gamma, beta):
    s = jnp.sum(partial_stats, axis=0)                    # (2, C)
    mean = s[0] / count
    var = jnp.maximum(s[1] / count - mean * mean, 0.0)    # biased var (train-mode BN)
    scale = gamma * lax.rsqrt(var + EPS)
    shift = beta - mean * scale
    return jnp.stack([scale, shift]).astype(jnp.float32)  # (2, C)


# --------------------------------------------------------------------------
# Bottleneck forward (stride=1, downsample=None)
# --------------------------------------------------------------------------
def bottleneck_forward(x, params, dilation, row_tile=1024):
    """x: (N, H, W, Cin) float32 NHWC, Cin == 4 * planes.

    row_tile guidance: ~1024-2048 (v6e), ~512-1024 (v7x), ~256-512 (v5e).
    """
    n, hh, ww, cin = x.shape
    p = params["w1"].shape[1]
    c4 = 4 * p
    d = int(dilation)
    assert cin == c4, "residual add requires inplanes == planes * 4"

    hw = hh * ww
    m = n * hw
    if m <= row_tile:
        tm = m                                            # single full block
    else:
        tm = max(128, (min(int(row_tile), m) // 128) * 128)  # lane/MXU friendly
    g = -(-m // tm)
    mask_tail = (m % tm) != 0

    x2d = x.reshape(m, cin)                               # free reshape, no pad
    # Weights pre-cast to the MXU dtype once (tiny, resident operands).
    w1b = params["w1"].astype(DOT_DTYPE)                   # (Cin, P)
    w2b = params["w2"].reshape(9, p, p).astype(DOT_DTYPE)  # (3,3,P,P) -> (9,P,P)
    w3b = params["w3"].astype(DOT_DTYPE)                   # (P, 4P)

    # ---- stage 1: conv1 (1x1) + partial BN1 stats, tiled over M -------------
    y1, st1 = pl.pallas_call(
        functools.partial(_conv1_kernel, tm=tm, m_total=m, mask_tail=mask_tail),
        grid=(g,),
        in_specs=[pl.BlockSpec((tm, cin), lambda i: (i, 0)),
                  pl.BlockSpec((cin, p), lambda i: (0, 0))],
        out_specs=(pl.BlockSpec((tm, p), lambda i: (i, 0)),
                   pl.BlockSpec((1, 2, p), lambda i: (i, 0, 0))),
        out_shape=(jax.ShapeDtypeStruct((m, p), ACT_DTYPE),
                   jax.ShapeDtypeStruct((g, 2, p), jnp.float32)),
        compiler_params=_cparams(1, tm * (cin * 4 + p * 2) + cin * p * 2),
    )(x2d, w1b)
    bn1 = _bn_scale_shift(st1, m, params["g1"], params["b1"])

    # ---- stage 2: BN1+ReLU fused into conv2 (3x3 dilated), per image --------
    margin = max(8, ((d + 7) // 8) * 8)                   # aligned centre taps
    lpad = 2 * margin + (hh + 2 * d) * ww
    y1_3d = y1.reshape(n, hw, p)                          # free reshape
    y2, st2 = pl.pallas_call(
        functools.partial(_conv2_kernel, hh=hh, ww=ww, d=d, margin=margin),
        grid=(n,),
        in_specs=[pl.BlockSpec((1, hw, p), lambda b: (b, 0, 0)),
                  pl.BlockSpec((2, p), lambda b: (0, 0)),
                  pl.BlockSpec((9, p, p), lambda b: (0, 0, 0))],
        out_specs=(pl.BlockSpec((1, hw, p), lambda b: (b, 0, 0)),
                   pl.BlockSpec((1, 2, p), lambda b: (b, 0, 0))),
        out_shape=(jax.ShapeDtypeStruct((n, hw, p), ACT_DTYPE),
                   jax.ShapeDtypeStruct((n, 2, p), jnp.float32)),
        scratch_shapes=[pltpu.VMEM((lpad, p), jnp.float32)],
        compiler_params=_cparams(1, hw * p * 4 + lpad * p * 4 + 9 * p * p * 2),
    )(y1_3d, bn1, w2b)
    bn2 = _bn_scale_shift(st2, m, params["g2"], params["b2"])

    # ---- stage 3: BN2+ReLU fused into conv3 (1x1) + partial BN3 stats -------
    y2_2d = y2.reshape(m, p)                              # free reshape (dense)
    y3, st3 = pl.pallas_call(
        functools.partial(_conv3_kernel, tm=tm, m_total=m, mask_tail=mask_tail),
        grid=(g,),
        in_specs=[pl.BlockSpec((tm, p), lambda i: (i, 0)),
                  pl.BlockSpec((2, p), lambda i: (0, 0)),
                  pl.BlockSpec((p, c4), lambda i: (0, 0))],
        out_specs=(pl.BlockSpec((tm, c4), lambda i: (i, 0)),
                   pl.BlockSpec((1, 2, c4), lambda i: (i, 0, 0))),
        out_shape=(jax.ShapeDtypeStruct((m, c4), ACT_DTYPE),
                   jax.ShapeDtypeStruct((g, 2, c4), jnp.float32)),
        compiler_params=_cparams(1, tm * (p * 2 + c4 * 2) + p * c4 * 2),
    )(y2_2d, bn2, w3b)
    bn3 = _bn_scale_shift(st3, m, params["g3"], params["b3"])

    # ---- stage 4: BN3-apply + residual + ReLU --------------------------------
    out = pl.pallas_call(
        _bn_add_relu_kernel,
        grid=(g,),
        in_specs=[pl.BlockSpec((tm, c4), lambda i: (i, 0)),
                  pl.BlockSpec((tm, c4), lambda i: (i, 0)),
                  pl.BlockSpec((2, c4), lambda i: (0, 0))],
        out_specs=pl.BlockSpec((tm, c4), lambda i: (i, 0)),
        out_shape=jax.ShapeDtypeStruct((m, c4), jnp.float32),
        compiler_params=_cparams(1, tm * c4 * (2 + 4 + 4)),
    )(y3, x2d, bn3)

    return out.reshape(n, hh, ww, c4)


# --------------------------------------------------------------------------
# Pure-JAX reference reproducing the kernel's numerical contract
# (bf16 conv operands, f32 accumulation, f32 BN stats on the f32 conv output,
#  activations round-tripped through bf16 storage between stages).
# --------------------------------------------------------------------------
def bottleneck_reference(x, params, dilation):
    dn = ("NHWC", "HWIO", "NHWC")
    d = int(dilation)

    def conv(v, w, **kw):
        return lax.conv_general_dilated(
            v.astype(DOT_DTYPE), w.astype(DOT_DTYPE), (1, 1),
            dimension_numbers=dn, preferred_element_type=jnp.float32, **kw)

    def bn(y, g, b, relu=True):
        mean = jnp.mean(y, axis=(0, 1, 2), keepdims=True)
        var = jnp.mean((y - mean) ** 2, axis=(0, 1, 2), keepdims=True)
        scale = g * lax.rsqrt(var + EPS)
        shift = b - mean * scale
        ys = y.astype(ACT_DTYPE).astype(jnp.float32)       # bf16 storage round-trip
        out = ys * scale + shift
        return jnp.maximum(out, 0.0) if relu else out

    cin, p = params["w1"].shape
    y = conv(x, params["w1"].reshape(1, 1, cin, p), padding="VALID")
    y = bn(y, params["g1"], params["b1"])
    y = conv(y, params["w2"], padding=[(d, d), (d, d)], rhs_dilation=(d, d))
    y = bn(y, params["g2"], params["b2"])
    y = conv(y, params["w3"].reshape(1, 1, p, 4 * p), padding="VALID")
    y = bn(y, params["g3"], params["b3"], relu=False) + x
    return jnp.maximum(y, 0.0)


# --------------------------------------------------------------------------
if __name__ == "__main__":
    # Small shapes: planes=4 -> inplanes = 4*planes = 16, N=2, H=W=16, dilation=2
    N, H, W = 2, 16, 16
    planes = 4
    inplanes = planes * 4
    dilation = 2

    key = jax.random.PRNGKey(0)
    kx, k1, k2, k3 = jax.random.split(key, 4)

    x = jax.random.normal(kx, (N, H, W, inplanes), dtype=jnp.float32)

    params = {
        # conv weights, channels-last friendly:
        #   w1: (Cin, P)      <- torch conv1.weight (P, Cin, 1, 1)
        #   w2: (3, 3, P, P)  <- torch conv2.weight (P, P, 3, 3) -> (kh, kw, in, out)
        #   w3: (P, 4P)       <- torch conv3.weight (4P, P, 1, 1)
        "w1": 0.2 * jax.random.normal(k1, (inplanes, planes), dtype=jnp.float32),
        "w2": 0.2 * jax.random.normal(k2, (3, 3, planes, planes), dtype=jnp.float32),
        "w3": 0.2 * jax.random.normal(k3, (planes, planes * 4), dtype=jnp.float32),
        # BatchNorm affine params (PyTorch default init: weight=1, bias=0, frozen)
        "g1": jnp.ones((planes,), jnp.float32), "b1": jnp.zeros((planes,), jnp.float32),
        "g2": jnp.ones((planes,), jnp.float32), "b2": jnp.zeros((planes,), jnp.float32),
        "g3": jnp.ones((planes * 4,), jnp.float32), "b3": jnp.zeros((planes * 4,), jnp.float32),
    }

    # row_tile=128 -> 4 M-tiles for M=512, so the cross-tile BN stats path is exercised.
    fwd = jax.jit(functools.partial(bottleneck_forward, dilation=dilation, row_tile=128))
    out = jax.block_until_ready(fwd(x, params))
    ref = jax.block_until_ready(bottleneck_reference(x, params, dilation))

    assert out.shape == (N, H, W, planes * 4), out.shape
    err = float(jnp.max(jnp.abs(out - ref)))
    assert jnp.allclose(out, ref, rtol=1e-2, atol=1e-2), f"max abs err = {err}"

    print("KERNEL_OK")
</pallas_src>

<mosaic_0001>
module attributes {stable_mosaic.version = 11 : i64} {
  func.func @_conv1_kernel(%arg0: i32, %arg1: memref<128x16xf32, #tpu.memory_space<vmem>>, %arg2: memref<16x4xbf16, #tpu.memory_space<vmem>>, %arg3: memref<128x4xbf16, #tpu.memory_space<vmem>>, %arg4: memref<1x2x4xf32, #tpu.memory_space<vmem>>) attributes {dimension_semantics = [#tpu.dimension_semantics<parallel>], iteration_bounds = array<i64: 4>, scalar_prefetch = 0 : i64, scratch_operands = 0 : i64, tpu.core_type = #tpu.core_type<tc>, window_params = [{transform_indices = @transform_0, window_bounds = array<i64: 128, 16>}, {pipeline_mode = #tpu.pipeline_mode<synchronous>, transform_indices = @transform_1, window_bounds = array<i64: 16, 4>}, {transform_indices = @transform_2, window_bounds = array<i64: 128, 4>}, {transform_indices = @transform_3, window_bounds = array<i64: 1, 2, 4>}]} {
    %c0 = arith.constant 0 : index
    %c0_0 = arith.constant 0 : index
    %0 = vector.load %arg1[%c0, %c0_0] : memref<128x16xf32, #tpu.memory_space<vmem>>, vector<128x16xf32>
    %1 = arith.truncf %0 : vector<128x16xf32> to vector<128x16xbf16>
    %c0_1 = arith.constant 0 : index
    %c0_2 = arith.constant 0 : index
    %2 = vector.load %arg2[%c0_1, %c0_2] : memref<16x4xbf16, #tpu.memory_space<vmem>>, vector<16x4xbf16>
    %cst = arith.constant dense<0.000000e+00> : vector<128x4xf32>
    %3 = tpu.matmul %1, %2, %cst {dimension_numbers = #tpu.dot_dimension_numbers<[1], [0], [0], [1], [0, 0, 1, 1], [], []>} : vector<128x16xbf16>, vector<16x4xbf16>, vector<128x4xf32> -> vector<128x4xf32>
    %4 = arith.truncf %3 : vector<128x4xf32> to vector<128x4xbf16>
    %c0_3 = arith.constant 0 : index
    %c0_4 = arith.constant 0 : index
    %5 = vector.load %arg3[%c0_3, %c0_4] : memref<128x4xbf16, #tpu.memory_space<vmem>>, vector<128x4xbf16>
    tpu.vector_store %arg3[%c0_3, %c0_4], %4 {strides = array<i32>} : memref<128x4xbf16, #tpu.memory_space<vmem>>, vector<128x4xbf16>,
    %cst_5 = arith.constant dense<0.000000e+00> : vector<4xf32>
    %6 = vector.multi_reduction <add>, %3, %cst_5 [0] : vector<128x4xf32> to vector<4xf32>
    %7 = vector.shape_cast %6 : vector<4xf32> to vector<1x4xf32>
    %8 = arith.mulf %3, %3 : vector<128x4xf32>
    %cst_6 = arith.constant dense<0.000000e+00> : vector<4xf32>
    %9 = vector.multi_reduction <add>, %8, %cst_6 [0] : vector<128x4xf32> to vector<4xf32>
    %10 = vector.shape_cast %9 : vector<4xf32> to vector<1x4xf32>
    %11 = tpu.concatenate %7, %10 in 0 : vector<1x4xf32>, vector<1x4xf32> -> vector<2x4xf32>
    %12 = vector.shape_cast %11 : vector<2x4xf32> to vector<1x2x4xf32>
    %c0_7 = arith.constant 0 : index
    %c0_8 = arith.constant 0 : index
    %c0_9 = arith.constant 0 : index
    %13 = vector.load %arg4[%c0_7, %c0_8, %c0_9] : memref<1x2x4xf32, #tpu.memory_space<vmem>>, vector<1x2x4xf32>
    tpu.vector_store %arg4[%c0_7, %c0_8, %c0_9], %12 {strides = array<i32>} : memref<1x2x4xf32, #tpu.memory_space<vmem>>, vector<1x2x4xf32>,
    return
  }
  func.func @transform_0(%arg0: i32) -> (i32, i32) {
    %c0_i32 = arith.constant 0 : i32
    %c0_i32_0 = arith.constant 0 : i32
    return %arg0, %c0_i32 : i32, i32
  }
  func.func @transform_1(%arg0: i32) -> (i32, i32) {
    %c0_i32 = arith.constant 0 : i32
    %c0_i32_0 = arith.constant 0 : i32
    %c0_i32_1 = arith.constant 0 : i32
    return %c0_i32, %c0_i32_0 : i32, i32
  }
  func.func @transform_2(%arg0: i32) -> (i32, i32) {
    %c0_i32 = arith.constant 0 : i32
    %c0_i32_0 = arith.constant 0 : i32
    return %arg0, %c0_i32 : i32, i32
  }
  func.func @transform_3(%arg0: i32) -> (i32, i32, i32) {
    %c0_i32 = arith.constant 0 : i32
    %c0_i32_0 = arith.constant 0 : i32
    %c0_i32_1 = arith.constant 0 : i32
    return %arg0, %c0_i32, %c0_i32_0 : i32, i32, i32
  }
}

module attributes {stable_mosaic.version = 11 : i64} {
  func.func @_conv3_kernel(%arg0: i32, %arg1: memref<128x4xbf16, #tpu.memory_space<vmem>>, %arg2: memref<2x4xf32, #tpu.memory_space<vmem>>, %arg3: memref<4x16xbf16, #tpu.memory_space<vmem>>, %arg4: memref<128x16xbf16, #tpu.memory_space<vmem>>, %arg5: memref<1x2x16xf32, #tpu.memory_space<vmem>>) attributes {dimension_semantics = [#tpu.dimension_semantics<parallel>], iteration_bounds = array<i64: 4>, scalar_prefetch = 0 : i64, scratch_operands = 0 : i64, tpu.core_type = #tpu.core_type<tc>, window_params = [{transform_indices = @transform_0, window_bounds = array<i64: 128, 4>}, {pipeline_mode = #tpu.pipeline_mode<synchronous>, transform_indices = @transform_1, window_bounds = array<i64: 2, 4>}, {pipeline_mode = #tpu.pipeline_mode<synchronous>, transform_indices = @transform_2, window_bounds = array<i64: 4, 16>}, {transform_indices = @transform_3, window_bounds = array<i64: 128, 16>}, {transform_indices = @transform_4, window_bounds = array<i64: 1, 2, 16>}]} {
    %c0 = arith.constant 0 : index
    %c0_0 = arith.constant 0 : index
    %0 = vector.load %arg1[%c0, %c0_0] : memref<128x4xbf16, #tpu.memory_space<vmem>>, vector<128x4xbf16>
    %1 = arith.extf %0 : vector<128x4xbf16> to vector<128x4xf32>
    %c0_1 = arith.constant 0 : index
    %c0_2 = arith.constant 0 : index
    %2 = vector.load %arg2[%c0_1, %c0_2] : memref<2x4xf32, #tpu.memory_space<vmem>>, vector<1x4xf32>
    %3 = vector.broadcast %2 : vector<1x4xf32> to vector<128x4xf32>
    %4 = arith.mulf %1, %3 : vector<128x4xf32>
    %c1 = arith.constant 1 : index
    %c0_3 = arith.constant 0 : index
    %5 = vector.load %arg2[%c1, %c0_3] : memref<2x4xf32, #tpu.memory_space<vmem>>, vector<1x4xf32>
    %6 = vector.broadcast %5 : vector<1x4xf32> to vector<128x4xf32>
    %7 = arith.addf %4, %6 : vector<128x4xf32>
    %cst = arith.constant 0.000000e+00 : f32
    %8 = vector.broadcast %cst : f32 to vector<128x4xf32>
    %9 = arith.maximumf %7, %8 : vector<128x4xf32>
    %10 = arith.truncf %9 : vector<128x4xf32> to vector<128x4xbf16>
    %c0_4 = arith.constant 0 : index
    %c0_5 = arith.constant 0 : index
    %11 = vector.load %arg3[%c0_4, %c0_5] : memref<4x16xbf16, #tpu.memory_space<vmem>>, vector<4x16xbf16>
    %cst_6 = arith.constant dense<0.000000e+00> : vector<128x16xf32>
    %12 = tpu.matmul %10, %11, %cst_6 {dimension_numbers = #tpu.dot_dimension_numbers<[1], [0], [0], [1], [0, 0, 1, 1], [], []>} : vector<128x4xbf16>, vector<4x16xbf16>, vector<128x16xf32> -> vector<128x16xf32>
    %13 = arith.truncf %12 : vector<128x16xf32> to vector<128x16xbf16>
    %c0_7 = arith.constant 0 : index
    %c0_8 = arith.constant 0 : index
    %14 = vector.load %arg4[%c0_7, %c0_8] : memref<128x16xbf16, #tpu.memory_space<vmem>>, vector<128x16xbf16>
    tpu.vector_store %arg4[%c0_7, %c0_8], %13 {strides = array<i32>} : memref<128x16xbf16, #tpu.memory_space<vmem>>, vector<128x16xbf16>,
    %cst_9 = arith.constant dense<0.000000e+00> : vector<16xf32>
    %15 = vector.multi_reduction <add>, %12, %cst_9 [0] : vector<128x16xf32> to vector<16xf32>
    %16 = vector.shape_cast %15 : vector<16xf32> to vector<1x16xf32>
    %17 = arith.mulf %12, %12 : vector<128x16xf32>
    %cst_10 = arith.constant dense<0.000000e+00> : vector<16xf32>
    %18 = vector.multi_reduction <add>, %17, %cst_10 [0] : vector<128x16xf32> to vector<16xf32>
    %19 = vector.shape_cast %18 : vector<16xf32> to vector<1x16xf32>
    %20 = tpu.concatenate %16, %19 in 0 : vector<1x16xf32>, vector<1x16xf32> -> vector<2x16xf32>
    %21 = vector.shape_cast %20 : vector<2x16xf32> to vector<1x2x16xf32>
    %c0_11 = arith.constant 0 : index
    %c0_12 = arith.constant 0 : index
    %c0_13 = arith.constant 0 : index
    %22 = vector.load %arg5[%c0_11, %c0_12, %c0_13] : memref<1x2x16xf32, #tpu.memory_space<vmem>>, vector<1x2x16xf32>
    tpu.vector_store %arg5[%c0_11, %c0_12, %c0_13], %21 {strides = array<i32>} : memref<1x2x16xf32, #tpu.memory_space<vmem>>, vector<1x2x16xf32>,
    return
  }
  func.func @transform_0(%arg0: i32) -> (i32, i32) {
    %c0_i32 = arith.constant 0 : i32
    %c0_i32_0 = arith.constant 0 : i32
    return %arg0, %c0_i32 : i32, i32
  }
  func.func @transform_1(%arg0: i32) -> (i32, i32) {
    %c0_i32 = arith.constant 0 : i32
    %c0_i32_0 = arith.constant 0 : i32
    %c0_i32_1 = arith.constant 0 : i32
    return %c0_i32, %c0_i32_0 : i32, i32
  }
  func.func @transform_2(%arg0: i32) -> (i32, i32) {
    %c0_i32 = arith.constant 0 : i32
    %c0_i32_0 = arith.constant 0 : i32
    %c0_i32_1 = arith.constant 0 : i32
    return %c0_i32, %c0_i32_0 : i32, i32
  }
  func.func @transform_3(%arg0: i32) -> (i32, i32) {
    %c0_i32 = arith.constant 0 : i32
    %c0_i32_0 = arith.constant 0 : i32
    return %arg0, %c0_i32 : i32, i32
  }
  func.func @transform_4(%arg0: i32) -> (i32, i32, i32) {
    %c0_i32 = arith.constant 0 : i32
    %c0_i32_0 = arith.constant 0 : i32
    %c0_i32_1 = arith.constant 0 : i32
    return %arg0, %c0_i32, %c0_i32_0 : i32, i32, i32
  }
}

module attributes {stable_mosaic.version = 11 : i64} {
  func.func @_conv2_kernel(%arg0: i32, %arg1: memref<1x256x4xbf16, #tpu.memory_space<vmem>>, %arg2: memref<2x4xf32, #tpu.memory_space<vmem>>, %arg3: memref<9x4x4xbf16, #tpu.memory_space<vmem>>, %arg4: memref<1x256x4xbf16, #tpu.memory_space<vmem>>, %arg5: memref<1x2x4xf32, #tpu.memory_space<vmem>>, %arg6: memref<336x4xf32, #tpu.memory_space<vmem>>) attributes {dimension_semantics = [#tpu.dimension_semantics<parallel>], iteration_bounds = array<i64: 2>, scalar_prefetch = 0 : i64, scratch_operands = 1 : i64, tpu.core_type = #tpu.core_type<tc>, window_params = [{transform_indices = @transform_0, window_bounds = array<i64: 1, 256, 4>}, {pipeline_mode = #tpu.pipeline_mode<synchronous>, transform_indices = @transform_1, window_bounds = array<i64: 2, 4>}, {pipeline_mode = #tpu.pipeline_mode<synchronous>, transform_indices = @transform_2, window_bounds = array<i64: 9, 4, 4>}, {transform_indices = @transform_3, window_bounds = array<i64: 1, 256, 4>}, {transform_indices = @transform_4, window_bounds = array<i64: 1, 2, 4>}]} {
    %c0 = arith.constant 0 : index
    %c0_0 = arith.constant 0 : index
    %c0_1 = arith.constant 0 : index
    %0 = vector.load %arg1[%c0, %c0_0, %c0_1] : memref<1x256x4xbf16, #tpu.memory_space<vmem>>, vector<1x256x4xbf16>
    %1 = vector.shape_cast %0 : vector<1x256x4xbf16> to vector<256x4xbf16>
    %2 = arith.extf %1 : vector<256x4xbf16> to vector<256x4xf32>
    %c0_2 = arith.constant 0 : index
    %c0_3 = arith.constant 0 : index
    %3 = vector.load %arg2[%c0_2, %c0_3] : memref<2x4xf32, #tpu.memory_space<vmem>>, vector<1x4xf32>
    %4 = vector.broadcast %3 : vector<1x4xf32> to vector<256x4xf32>
    %5 = arith.mulf %2, %4 : vector<256x4xf32>
    %c1 = arith.constant 1 : index
    %c0_4 = arith.constant 0 : index
    %6 = vector.load %arg2[%c1, %c0_4] : memref<2x4xf32, #tpu.memory_space<vmem>>, vector<1x4xf32>
    %7 = vector.broadcast %6 : vector<1x4xf32> to vector<256x4xf32>
    %8 = arith.addf %5, %7 : vector<256x4xf32>
    %cst = arith.constant 0.000000e+00 : f32
    %9 = vector.broadcast %cst : f32 to vector<256x4xf32>
    %10 = arith.maximumf %8, %9 : vector<256x4xf32>
    %cst_5 = arith.constant 0.000000e+00 : f32
    %11 = vector.broadcast %cst_5 : f32 to vector<40x4xf32>
    %c0_6 = arith.constant 0 : index
    %c0_7 = arith.constant 0 : index
    %12 = vector.load %arg6[%c0_6, %c0_7] : memref<336x4xf32, #tpu.memory_space<vmem>>, vector<40x4xf32>
    tpu.vector_store %arg6[%c0_6, %c0_7], %11 {strides = array<i32>} : memref<336x4xf32, #tpu.memory_space<vmem>>, vector<40x4xf32>,
    %cst_8 = arith.constant 0.000000e+00 : f32
    %13 = vector.broadcast %cst_8 : f32 to vector<40x4xf32>
    %c296 = arith.constant 296 : index
    %c0_9 = arith.constant 0 : index
    %14 = vector.load %arg6[%c296, %c0_9] : memref<336x4xf32, #tpu.memory_space<vmem>>, vector<40x4xf32>
    tpu.vector_store %arg6[%c296, %c0_9], %13 {strides = array<i32>} : memref<336x4xf32, #tpu.memory_space<vmem>>, vector<40x4xf32>,
    %c40 = arith.constant 40 : index
    %c0_10 = arith.constant 0 : index
    %15 = vector.load %arg6[%c40, %c0_10] : memref<336x4xf32, #tpu.memory_space<vmem>>, vector<256x4xf32>
    tpu.vector_store %arg6[%c40, %c0_10], %10 {strides = array<i32>} : memref<336x4xf32, #tpu.memory_space<vmem>>, vector<256x4xf32>,
    %16 = tpu.iota {dimensions = array<i32: 0>} : vector<256x1xi32>
    %c16_i32 = arith.constant 16 : i32
    %c0_i32 = arith.constant 0 : i32
    %17 = arith.cmpi eq, %c16_i32, %c0_i32 : i32
    %c1_i32 = arith.constant 1 : i32
    %18 = arith.select %17, %c1_i32, %c16_i32 : i32
    %19 = vector.broadcast %18 : i32 to vector<256x1xi32>
    %20 = arith.remsi %16, %19 : vector<256x1xi32>
    %c0_i32_11 = arith.constant 0 : i32
    %21 = vector.broadcast %c0_i32_11 : i32 to vector<256x1xi32>
    %22 = arith.cmpi ne, %20, %21 : vector<256x1xi32>
    %c0_i32_12 = arith.constant 0 : i32
    %23 = vector.broadcast %c0_i32_12 : i32 to vector<256x1xi32>
    %24 = arith.cmpi slt, %20, %23 : vector<256x1xi32>
    %c0_i32_13 = arith.constant 0 : i32
    %25 = arith.cmpi slt, %18, %c0_i32_13 : i32
    %26 = vector.broadcast %25 : i1 to vector<256x1xi1>
    %27 = vector.broadcast %26 : vector<256x1xi1> to vector<256x1xi1>
    %28 = arith.xori %24, %27 : vector<256x1xi1>
    %29 = arith.andi %28, %22 : vector<256x1xi1>
    %30 = vector.broadcast %18 : i32 to vector<256x1xi32>
    %31 = arith.addi %20, %30 : vector<256x1xi32>
    %32 = arith.select %29, %31, %20 : vector<256x1xi1>, vector<256x1xi32>
    %c6 = arith.constant 6 : index
    %c0_14 = arith.constant 0 : index
    %33 = vector.load %arg6[%c6, %c0_14] : memref<336x4xf32, #tpu.memory_space<vmem>>, vector<256x4xf32>
    %c2_i32 = arith.constant 2 : i32
    %34 = vector.broadcast %c2_i32 : i32 to vector<256x1xi32>
    %35 = arith.cmpi sge, %32, %34 : vector<256x1xi32>
    %cst_15 = arith.constant 0.000000e+00 : f32
    %36 = vector.shape_cast %35 : vector<256x1xi1> to vector<256x1xi1>
    %37 = vector.broadcast %36 : vector<256x1xi1> to vector<256x4xi1>
    %38 = vector.broadcast %cst_15 : f32 to vector<256x4xf32>
    %39 = arith.select %37, %33, %38 : vector<256x4xi1>, vector<256x4xf32>
    %c8 = arith.constant 8 : index
    %c0_16 = arith.constant 0 : index
    %40 = vector.load %arg6[%c8, %c0_16] : memref<336x4xf32, #tpu.memory_space<vmem>>, vector<256x4xf32>
    %c10 = arith.constant 10 : index
    %c0_17 = arith.constant 0 : index
    %41 = vector.load %arg6[%c10, %c0_17] : memref<336x4xf32, #tpu.memory_space<vmem>>, vector<256x4xf32>
    %c14_i32 = arith.constant 14 : i32
    %42 = vector.broadcast %c14_i32 : i32 to vector<256x1xi32>
    %43 = arith.cmpi slt, %32, %42 : vector<256x1xi32>
    %cst_18 = arith.constant 0.000000e+00 : f32
    %44 = vector.shape_cast %43 : vector<256x1xi1> to vector<256x1xi1>
    %45 = vector.broadcast %44 : vector<256x1xi1> to vector<256x4xi1>
    %46 = vector.broadcast %cst_18 : f32 to vector<256x4xf32>
    %47 = arith.select %45, %41, %46 : vector<256x4xi1>, vector<256x4xf32>
    %c38 = arith.constant 38 : index
    %c0_19 = arith.constant 0 : index
    %48 = vector.load %arg6[%c38, %c0_19] : memref<336x4xf32, #tpu.memory_space<vmem>>, vector<256x4xf32>
    %c2_i32_20 = arith.constant 2 : i32
    %49 = vector.broadcast %c2_i32_20 : i32 to vector<256x1xi32>
    %50 = arith.cmpi sge, %32, %49 : vector<256x1xi32>
    %cst_21 = arith.constant 0.000000e+00 : f32
    %51 = vector.shape_cast %50 : vector<256x1xi1> to vector<256x1xi1>
    %52 = vector.broadcast %51 : vector<256x1xi1> to vector<256x4xi1>
    %53 = vector.broadcast %cst_21 : f32 to vector<256x4xf32>
    %54 = arith.select %52, %48, %53 : vector<256x4xi1>, vector<256x4xf32>
    %c40_22 = arith.constant 40 : index
    %c0_23 = arith.constant 0 : index
    %55 = vector.load %arg6[%c40_22, %c0_23] : memref<336x4xf32, #tpu.memory_space<vmem>>, vector<256x4xf32>
    %c42 = arith.constant 42 : index
    %c0_24 = arith.constant 0 : index
    %56 = vector.load %arg6[%c42, %c0_24] : memref<336x4xf32, #tpu.memory_space<vmem>>, vector<256x4xf32>
    %c14_i32_25 = arith.constant 14 : i32
    %57 = vector.broadcast %c14_i32_25 : i32 to vector<256x1xi32>
    %58 = arith.cmpi slt, %32, %57 : vector<256x1xi32>
    %cst_26 = arith.constant 0.000000e+00 : f32
    %59 = vector.shape_cast %58 : vector<256x1xi1> to vector<256x1xi1>
    %60 = vector.broadcast %59 : vector<256x1xi1> to vector<256x4xi1>
    %61 = vector.broadcast %cst_26 : f32 to vector<256x4xf32>
    %62 = arith.select %60, %56, %61 : vector<256x4xi1>, vector<256x4xf32>
    %c70 = arith.constant 70 : index
    %c0_27 = arith.constant 0 : index
    %63 = vector.load %arg6[%c70, %c0_27] : memref<336x4xf32, #tpu.memory_space<vmem>>, vector<256x4xf32>
    %c2_i32_28 = arith.constant 2 : i32
    %64 = vector.broadcast %c2_i32_28 : i32 to vector<256x1xi32>
    %65 = arith.cmpi sge, %32, %64 : vector<256x1xi32>
    %cst_29 = arith.constant 0.000000e+00 : f32
    %66 = vector.shape_cast %65 : vector<256x1xi1> to vector<256x1xi1>
    %67 = vector.broadcast %66 : vector<256x1xi1> to vector<256x4xi1>
    %68 = vector.broadcast %cst_29 : f32 to vector<256x4xf32>
    %69 = arith.select %67, %63, %68 : vector<256x4xi1>, vector<256x4xf32>
    %c72 = arith.constant 72 : index
    %c0_30 = arith.constant 0 : index
    %70 = vector.load %arg6[%c72, %c0_30] : memref<336x4xf32, #tpu.memory_space<vmem>>, vector<256x4xf32>
    %c74 = arith.constant 74 : index
    %c0_31 = arith.constant 0 : index
    %71 = vector.load %arg6[%c74, %c0_31] : memref<336x4xf32, #tpu.memory_space<vmem>>, vector<256x4xf32>
    %c14_i32_32 = arith.constant 14 : i32
    %72 = vector.broadcast %c14_i32_32 : i32 to vector<256x1xi32>
    %73 = arith.cmpi slt, %32, %72 : vector<256x1xi32>
    %cst_33 = arith.constant 0.000000e+00 : f32
    %74 = vector.shape_cast %73 : vector<256x1xi1> to vector<256x1xi1>
    %75 = vector.broadcast %74 : vector<256x1xi1> to vector<256x4xi1>
    %76 = vector.broadcast %cst_33 : f32 to vector<256x4xf32>
    %77 = arith.select %75, %71, %76 : vector<256x4xi1>, vector<256x4xf32>
    %cst_34 = arith.constant 0.000000e+00 : f32
    %78 = vector.broadcast %cst_34 : f32 to vector<256x4xf32>
    %79 = arith.truncf %39 : vector<256x4xf32> to vector<256x4xbf16>
    %c0_35 = arith.constant 0 : index
    %c0_36 = arith.constant 0 : index
    %c0_37 = arith.constant 0 : index
    %80 = vector.load %arg3[%c0_35, %c0_36, %c0_37] : memref<9x4x4xbf16, #tpu.memory_space<vmem>>, vector<1x4x4xbf16>
    %81 = vector.shape_cast %80 : vector<1x4x4xbf16> to vector<4x4xbf16>
    %cst_38 = arith.constant dense<0.000000e+00> : vector<256x4xf32>
    %82 = tpu.matmul %79, %81, %cst_38 {dimension_numbers = #tpu.dot_dimension_numbers<[1], [0], [0], [1], [0, 0, 1, 1], [], []>} : vector<256x4xbf16>, vector<4x4xbf16>, vector<256x4xf32> -> vector<256x4xf32>
    %83 = arith.addf %78, %82 : vector<256x4xf32>
    %84 = arith.truncf %40 : vector<256x4xf32> to vector<256x4xbf16>
    %c1_39 = arith.constant 1 : index
    %c0_40 = arith.constant 0 : index
    %c0_41 = arith.constant 0 : index
    %85 = vector.load %arg3[%c1_39, %c0_40, %c0_41] : memref<9x4x4xbf16, #tpu.memory_space<vmem>>, vector<1x4x4xbf16>
    %86 = vector.shape_cast %85 : vector<1x4x4xbf16> to vector<4x4xbf16>
    %cst_42 = arith.constant dense<0.000000e+00> : vector<256x4xf32>
    %87 = tpu.matmul %84, %86, %cst_42 {dimension_numbers = #tpu.dot_dimension_numbers<[1], [0], [0], [1], [0, 0, 1, 1], [], []>} : vector<256x4xbf16>, vector<4x4xbf16>, vector<256x4xf32> -> vector<256x4xf32>
    %88 = arith.addf %83, %87 : vector<256x4xf32>
    %89 = arith.truncf %47 : vector<256x4xf32> to vector<256x4xbf16>
    %c2 = arith.constant 2 : index
    %c0_43 = arith.constant 0 : index
    %c0_44 = arith.constant 0 : index
    %90 = vector.load %arg3[%c2, %c0_43, %c0_44] : memref<9x4x4xbf16, #tpu.memory_space<vmem>>, vector<1x4x4xbf16>
    %91 = vector.shape_cast %90 : vector<1x4x4xbf16> to vector<4x4xbf16>
    %cst_45 = arith.constant dense<0.000000e+00> : vector<256x4xf32>
    %92 = tpu.matmul %89, %91, %cst_45 {dimension_numbers = #tpu.dot_dimension_numbers<[1], [0], [0], [1], [0, 0, 1, 1], [], []>} : vector<256x4xbf16>, vector<4x4xbf16>, vector<256x4xf32> -> vector<256x4xf32>
    %93 = arith.addf %88, %92 : vector<256x4xf32>
    %94 = arith.truncf %54 : vector<256x4xf32> to vector<256x4xbf16>
    %c3 = arith.constant 3 : index
    %c0_46 = arith.constant 0 : index
    %c0_47 = arith.constant 0 : index
    %95 = vector.load %arg3[%c3, %c0_46, %c0_47] : memref<9x4x4xbf16, #tpu.memory_space<vmem>>, vector<1x4x4xbf16>
    %96 = vector.shape_cast %95 : vector<1x4x4xbf16> to vector<4x4xbf16>
    %cst_48 = arith.constant dense<0.000000e+00> : vector<256x4xf32>
    %97 = tpu.matmul %94, %96, %cst_48 {dimension_numbers = #tpu.dot_dimension_numbers<[1], [0], [0], [1], [0, 0, 1, 1], [], []>} : vector<256x4xbf16>, vector<4x4xbf16>, vector<256x4xf32> -> vector<256x4xf32>
    %98 = arith.addf %93, %97 : vector<256x4xf32>
    %99 = arith.truncf %55 : vector<256x4xf32> to vector<256x4xbf16>
    %c4 = arith.constant 4 : index
    %c0_49 = arith.constant 0 : index
    %c0_50 = arith.constant 0 : index
    %100 = vector.load %arg3[%c4, %c0_49, %c0_50] : memref<9x4x4xbf16, #tpu.memory_space<vmem>>, vector<1x4x4xbf16>
    %101 = vector.shape_cast %100 : vector<1x4x4xbf16> to vector<4x4xbf16>
    %cst_51 = arith.constant dense<0.000000e+00> : vector<256x4xf32>
    %102 = tpu.matmul %99, %101, %cst_51 {dimension_numbers = #tpu.dot_dimension_numbers<[1], [0], [0], [1], [0, 0, 1, 1], [], []>} : vector<256x4xbf16>, vector<4x4xbf16>, vector<256x4xf32> -> vector<256x4xf32>
    %103 = arith.addf %98, %102 : vector<256x4xf32>
    %104 = arith.truncf %62 : vector<256x4xf32> to vector<256x4xbf16>
    %c5 = arith.constant 5 : index
    %c0_52 = arith.constant 0 : index
    %c0_53 = arith.constant 0 : index
    %105 = vector.load %arg3[%c5, %c0_52, %c0_53] : memref<9x4x4xbf16, #tpu.memory_space<vmem>>, vector<1x4x4xbf16>
    %106 = vector.shape_cast %105 : vector<1x4x4xbf16> to vector<4x4xbf16>
    %cst_54 = arith.constant dense<0.000000e+00> : vector<256x4xf32>
    %107 = tpu.matmul %104, %106, %cst_54 {dimension_numbers = #tpu.dot_dimension_numbers<[1], [0], [0], [1], [0, 0, 1, 1], [], []>} : vector<256x4xbf16>, vector<4x4xbf16>, vector<256x4xf32> -> vector<256x4xf32>
    %108 = arith.addf %103, %107 : vector<256x4xf32>
    %109 = arith.truncf %69 : vector<256x4xf32> to vector<256x4xbf16>
    %c6_55 = arith.constant 6 : index
    %c0_56 = arith.constant 0 : index
    %c0_57 = arith.constant 0 : index
    %110 = vector.load %arg3[%c6_55, %c0_56, %c0_57] : memref<9x4x4xbf16, #tpu.memory_space<vmem>>, vector<1x4x4xbf16>
    %111 = vector.shape_cast %110 : vector<1x4x4xbf16> to vector<4x4xbf16>
    %cst_58 = arith.constant dense<0.000000e+00> : vector<256x4xf32>
    %112 = tpu.matmul %109, %111, %cst_58 {dimension_numbers = #tpu.dot_dimension_numbers<[1], [0], [0], [1], [0, 0, 1, 1], [], []>} : vector<256x4xbf16>, vector<4x4xbf16>, vector<256x4xf32> -> vector<256x4xf32>
    %113 = arith.addf %108, %112 : vector<256x4xf32>
    %114 = arith.truncf %70 : vector<256x4xf32> to vector<256x4xbf16>
    %c7 = arith.constant 7 : index
    %c0_59 = arith.constant 0 : index
    %c0_60 = arith.constant 0 : index
    %115 = vector.load %arg3[%c7, %c0_59, %c0_60] : memref<9x4x4xbf16, #tpu.memory_space<vmem>>, vector<1x4x4xbf16>
    %116 = vector.shape_cast %115 : vector<1x4x4xbf16> to vector<4x4xbf16>
    %cst_61 = arith.constant dense<0.000000e+00> : vector<256x4xf32>
    %117 = tpu.matmul %114, %116, %cst_61 {dimension_numbers = #tpu.dot_dimension_numbers<[1], [0], [0], [1], [0, 0, 1, 1], [], []>} : vector<256x4xbf16>, vector<4x4xbf16>, vector<256x4xf32> -> vector<256x4xf32>
    %118 = arith.addf %113, %117 : vector<256x4xf32>
    %119 = arith.truncf %77 : vector<256x4xf32> to vector<256x4xbf16>
    %c8_62 = arith.constant 8 : index
    %c0_63 = arith.constant 0 : index
    %c0_64 = arith.constant 0 : index
    %120 = vector.load %arg3[%c8_62, %c0_63, %c0_64] : memref<9x4x4xbf16, #tpu.memory_space<vmem>>, vector<1x4x4xbf16>
    %121 = vector.shape_cast %120 : vector<1x4x4xbf16> to vector<4x4xbf16>
    %cst_65 = arith.constant dense<0.000000e+00> : vector<256x4xf32>
    %122 = tpu.matmul %119, %121, %cst_65 {dimension_numbers = #tpu.dot_dimension_numbers<[1], [0], [0], [1], [0, 0, 1, 1], [], []>} : vector<256x4xbf16>, vector<4x4xbf16>, vector<256x4xf32> -> vector<256x4xf32>
    %123 = arith.addf %118, %122 : vector<256x4xf32>
    %124 = arith.truncf %123 : vector<256x4xf32> to vector<256x4xbf16>
    %c0_66 = arith.constant 0 : index
    %c0_67 = arith.constant 0 : index
    %c0_68 = arith.constant 0 : index
    %125 = vector.load %arg4[%c0_66, %c0_67, %c0_68] : memref<1x256x4xbf16, #tpu.memory_space<vmem>>, vector<1x256x4xbf16>
    %126 = vector.shape_cast %125 : vector<1x256x4xbf16> to vector<256x4xbf16>
    %127 = vector.shape_cast %124 : vector<256x4xbf16> to vector<1x256x4xbf16>
    tpu.vector_store %arg4[%c0_66, %c0_67, %c0_68], %127 {strides = array<i32>} : memref<1x256x4xbf16, #tpu.memory_space<vmem>>, vector<1x256x4xbf16>,
    %cst_69 = arith.constant dense<0.000000e+00> : vector<4xf32>
    %128 = vector.multi_reduction <add>, %123, %cst_69 [0] : vector<256x4xf32> to vector<4xf32>
    %129 = vector.shape_cast %128 : vector<4xf32> to vector<1x4xf32>
    %130 = arith.mulf %123, %123 : vector<256x4xf32>
    %cst_70 = arith.constant dense<0.000000e+00> : vector<4xf32>
    %131 = vector.multi_reduction <add>, %130, %cst_70 [0] : vector<256x4xf32> to vector<4xf32>
    %132 = vector.shape_cast %131 : vector<4xf32> to vector<1x4xf32>
    %133 = tpu.concatenate %129, %132 in 0 : vector<1x4xf32>, vector<1x4xf32> -> vector<2x4xf32>
    %134 = vector.shape_cast %133 : vector<2x4xf32> to vector<1x2x4xf32>
    %c0_71 = arith.constant 0 : index
    %c0_72 = arith.constant 0 : index
    %c0_73 = arith.constant 0 : index
    %135 = vector.load %arg5[%c0_71, %c0_72, %c0_73] : memref<1x2x4xf32, #tpu.memory_space<vmem>>, vector<1x2x4xf32>
    tpu.vector_store %arg5[%c0_71, %c0_72, %c0_73], %134 {strides = array<i32>} : memref<1x2x4xf32, #tpu.memory_space<vmem>>, vector<1x2x4xf32>,
    return
  }
  func.func @transform_0(%arg0: i32) -> (i32, i32, i32) {
    %c0_i32 = arith.constant 0 : i32
    %c0_i32_0 = arith.constant 0 : i32
    %c0_i32_1 = arith.constant 0 : i32
    return %arg0, %c0_i32, %c0_i32_0 : i32, i32, i32
  }
  func.func @transform_1(%arg0: i32) -> (i32, i32) {
    %c0_i32 = arith.constant 0 : i32
    %c0_i32_0 = arith.constant 0 : i32
    %c0_i32_1 = arith.constant 0 : i32
    return %c0_i32, %c0_i32_0 : i32, i32
  }
  func.func @transform_2(%arg0: i32) -> (i32, i32, i32) {
    %c0_i32 = arith.constant 0 : i32
    %c0_i32_0 = arith.constant 0 : i32
    %c0_i32_1 = arith.constant 0 : i32
    %c0_i32_2 = arith.constant 0 : i32
    return %c0_i32, %c0_i32_0, %c0_i32_1 : i32, i32, i32
  }
  func.func @transform_3(%arg0: i32) -> (i32, i32, i32) {
    %c0_i32 = arith.constant 0 : i32
    %c0_i32_0 = arith.constant 0 : i32
    %c0_i32_1 = arith.constant 0 : i32
    return %arg0, %c0_i32, %c0_i32_0 : i32, i32, i32
  }
  func.func @transform_4(%arg0: i32) -> (i32, i32, i32) {
    %c0_i32 = arith.constant 0 : i32
    %c0_i32_0 = arith.constant 0 : i32
    %c0_i32_1 = arith.constant 0 : i32
    return %arg0, %c0_i32, %c0_i32_0 : i32, i32, i32
  }
}

module attributes {stable_mosaic.version = 11 : i64} {
  func.func @_bn_add_relu_kernel(%arg0: i32, %arg1: memref<128x16xbf16, #tpu.memory_space<vmem>>, %arg2: memref<128x16xf32, #tpu.memory_space<vmem>>, %arg3: memref<2x16xf32, #tpu.memory_space<vmem>>, %arg4: memref<128x16xf32, #tpu.memory_space<vmem>>) attributes {dimension_semantics = [#tpu.dimension_semantics<parallel>], iteration_bounds = array<i64: 4>, scalar_prefetch = 0 : i64, scratch_operands = 0 : i64, tpu.core_type = #tpu.core_type<tc>, window_params = [{transform_indices = @transform_0, window_bounds = array<i64: 128, 16>}, {transform_indices = @transform_1, window_bounds = array<i64: 128, 16>}, {pipeline_mode = #tpu.pipeline_mode<synchronous>, transform_indices = @transform_2, window_bounds = array<i64: 2, 16>}, {transform_indices = @transform_3, window_bounds = array<i64: 128, 16>}]} {
    %c0 = arith.constant 0 : index
    %c0_0 = arith.constant 0 : index
    %0 = vector.load %arg1[%c0, %c0_0] : memref<128x16xbf16, #tpu.memory_space<vmem>>, vector<128x16xbf16>
    %1 = arith.extf %0 : vector<128x16xbf16> to vector<128x16xf32>
    %c0_1 = arith.constant 0 : index
    %c0_2 = arith.constant 0 : index
    %2 = vector.load %arg3[%c0_1, %c0_2] : memref<2x16xf32, #tpu.memory_space<vmem>>, vector<1x16xf32>
    %3 = vector.broadcast %2 : vector<1x16xf32> to vector<128x16xf32>
    %4 = arith.mulf %1, %3 : vector<128x16xf32>
    %c1 = arith.constant 1 : index
    %c0_3 = arith.constant 0 : index
    %5 = vector.load %arg3[%c1, %c0_3] : memref<2x16xf32, #tpu.memory_space<vmem>>, vector<1x16xf32>
    %6 = vector.broadcast %5 : vector<1x16xf32> to vector<128x16xf32>
    %7 = arith.addf %4, %6 : vector<128x16xf32>
    %c0_4 = arith.constant 0 : index
    %c0_5 = arith.constant 0 : index
    %8 = vector.load %arg2[%c0_4, %c0_5] : memref<128x16xf32, #tpu.memory_space<vmem>>, vector<128x16xf32>
    %9 = arith.addf %7, %8 : vector<128x16xf32>
    %cst = arith.constant 0.000000e+00 : f32
    %10 = vector.broadcast %cst : f32 to vector<128x16xf32>
    %11 = arith.maximumf %9, %10 : vector<128x16xf32>
    %c0_6 = arith.constant 0 : index
    %c0_7 = arith.constant 0 : index
    %12 = vector.load %arg4[%c0_6, %c0_7] : memref<128x16xf32, #tpu.memory_space<vmem>>, vector<128x16xf32>
    tpu.vector_store %arg4[%c0_6, %c0_7], %11 {strides = array<i32>} : memref<128x16xf32, #tpu.memory_space<vmem>>, vector<128x16xf32>,
    return
  }
  func.func @transform_0(%arg0: i32) -> (i32, i32) {
    %c0_i32 = arith.constant 0 : i32
    %c0_i32_0 = arith.constant 0 : i32
    return %arg0, %c0_i32 : i32, i32
  }
  func.func @transform_1(%arg0: i32) -> (i32, i32) {
    %c0_i32 = arith.constant 0 : i32
    %c0_i32_0 = arith.constant 0 : i32
    return %arg0, %c0_i32 : i32, i32
  }
  func.func @transform_2(%arg0: i32) -> (i32, i32) {
    %c0_i32 = arith.constant 0 : i32
    %c0_i32_0 = arith.constant 0 : i32
    %c0_i32_1 = arith.constant 0 : i32
    return %c0_i32, %c0_i32_0 : i32, i32
  }
  func.func @transform_3(%arg0: i32) -> (i32, i32) {
    %c0_i32 = arith.constant 0 : i32
    %c0_i32_0 = arith.constant 0 : i32
    return %arg0, %c0_i32 : i32, i32
  }
}

</mosaic_0001>

<llo_original>
// kernel: bottleneck_forward.7
$region0: #{bottleneck_forward.7}
  #allocation0 [shape = 'u32[]', space=smem, size = 0x4, offset = 0x4, fixed_abs, tag = 'smem constant byte address 0x4 - core index']
  #allocation1 [shape = 'u32[144,128]{1,0:T(1,128)}', space=vmem, size = 0x12000, scoped, tag = 'internal scratch']
  %s0 = inlined_call_operand.vmem [shape: bf16[512,16], index: 0, kind: input, shape index: {}]
  %s1 = inlined_call_operand.vmem [shape: f32[512,16], index: 1, kind: input, shape index: {}]
  %s2 = inlined_call_operand.vmem [shape: f32[2,16], index: 2, kind: input, shape index: {}]
  %s3 = inlined_call_operand.hbm [shape: f32[512,16], index: 3, kind: output, shape index: {}]
  %s4 = sld [smem:[#allocation0]]
  $region45: #{bottleneck_forward.7} parent=0
    _
  %s6 = ssub.s32 1, %s4
  %s7 = scalar_select 0, %s6, %s4
  $region1: #{bottleneck_forward.7} parent=0
    #allocation2 [shape = 'u8[131072]{0}', space=vmem, size = 0x20000, scoped, tag = 'output window, operand 0']
    #allocation3 [shape = 's32[2]{0}', space=sflag, size = 0x8, scoped, tag = 'scoped memory for bottleneck_forward.7']
    %8 = vsyncpa [#allocation3], 0
    %s9 = scalar_lea.sflag [#allocation3], 1
    %10 = vsyncpa %s9, 0
    loop: start=0, step=1, limit=6
    $region2: #{bottleneck_forward.7} parent=1 // loop_pre_header
      _
    $region3: #{bottleneck_forward.7} parent=1 // loop_header
      %s12 = sphi 0, %s16
      %p13 = scmp.ge.s32.totalorder %s12, 6
      %s22 = sphi 0, %s24
      %s25 = sphi 0, %s22
      %s26 = sphi 0, %s25
      %s42 = sphi 0, %s26
      %s48 = sphi 0, %s50
      %s51 = sphi 0, %s48
      %s52 = sphi 0, %s51
      %s68 = sphi 0, %s52
      %s72 = sphi 0, %s72
      %s74 = sphi 0, %s72
      %s75 = sphi 0, %s74
      %s89 = sphi 0, %s75
      %s95 = sphi 0, %s97
      %s98 = sphi 0, %s95
      %s99 = sphi 0, %s98
      %s115 = sphi 0, %s99
    $region4: #{bottleneck_forward.7} parent=1 // loop_header_branch
      %15 = sbr.rel (%p13) target = $region8
    $region5: #{bottleneck_forward.7} parent=1 // loop_body
      %s17 = ssub.s32 %s12, 1
      %s18 = ssub.s32 %s12, 2
      %s19 = sadd.s32 %s12, 1
      %s20 = ssub.s32 %s12, %s19
      %p21 = scmp.eq.s32.totalorder %s20, 0
      %s23 = sadd.s32 %s22, 1
      %s24 = scalar_select %p21, %s22, %s23
      %p27 = pneg %p21
      %p28 = scmp.eq.s32.totalorder %s12, 3
      %p29 = por %p27, %p28
      %p30 = scmp.ne.s32.totalorder %s22, %s25
      %p31 = scmp.eq.s32.totalorder %s12, 0
      %p32 = por %p30, %p31
      %p33 = scmp.ne.s32.totalorder %s22, %s25
      %p34 = scmp.eq.s32.totalorder %s17, 3
      %p35 = por %p33, %p34
      %p36 = scmp.ne.s32.totalorder %s25, %s26
      %p37 = scmp.eq.s32.totalorder %s17, 0
      %p38 = por %p36, %p37
      %p39 = scmp.ne.s32.totalorder %s25, %s26
      %p40 = scmp.eq.s32.totalorder %s18, 3
      %p41 = por %p39, %p40
      %p43 = scmp.ne.s32.totalorder %s26, %s42
      %p44 = scmp.eq.s32.totalorder %s18, 0
      %p45 = por %p43, %p44
      %s46 = ssub.s32 %s12, %s19
      %p47 = scmp.eq.s32.totalorder %s46, 0
      %s49 = sadd.s32 %s48, 1
      %s50 = scalar_select %p47, %s48, %s49
      %p53 = pneg %p47
      %p54 = scmp.eq.s32.totalorder %s12, 3
      %p55 = por %p53, %p54
      %p56 = scmp.ne.s32.totalorder %s48, %s51
      %p57 = scmp.eq.s32.totalorder %s12, 0
      %p58 = por %p56, %p57
      %p59 = scmp.ne.s32.totalorder %s48, %s51
      %p60 = scmp.eq.s32.totalorder %s17, 3
      %p61 = por %p59, %p60
      %p62 = scmp.ne.s32.totalorder %s51, %s52
      %p63 = scmp.eq.s32.totalorder %s17, 0
      %p64 = por %p62, %p63
      %p65 = scmp.ne.s32.totalorder %s51, %s52
      %p66 = scmp.eq.s32.totalorder %s18, 3
      %p67 = por %p65, %p66
      %p69 = scmp.ne.s32.totalorder %s52, %s68
      %p70 = scmp.eq.s32.totalorder %s18, 0
      %p71 = por %p69, %p70
      %s73 = sadd.s32 %s72, 1
      %p76 = scmp.eq.s32.totalorder %s12, 3
      %p77 = scmp.ne.s32.totalorder %s72, %s74
      %p78 = scmp.eq.s32.totalorder %s12, 0
      %p79 = por %p77, %p78
      %p80 = scmp.ne.s32.totalorder %s72, %s74
      %p81 = scmp.eq.s32.totalorder %s17, 3
      %p82 = por %p80, %p81
      %p83 = scmp.ne.s32.totalorder %s74, %s75
      %p84 = scmp.eq.s32.totalorder %s17, 0
      %p85 = por %p83, %p84
      %p86 = scmp.ne.s32.totalorder %s74, %s75
      %p87 = scmp.eq.s32.totalorder %s18, 3
      %p88 = por %p86, %p87
      %p90 = scmp.ne.s32.totalorder %s75, %s89
      %p91 = scmp.eq.s32.totalorder %s18, 0
      %p92 = por %p90, %p91
      %s93 = ssub.s32 %s12, %s19
      %p94 = scmp.eq.s32.totalorder %s93, 0
      %s96 = sadd.s32 %s95, 1
      %s97 = scalar_select %p94, %s95, %s96
      %p100 = pneg %p94
      %p101 = scmp.eq.s32.totalorder %s12, 3
      %p102 = por %p100, %p101
      %p103 = scmp.ne.s32.totalorder %s95, %s98
      %p104 = scmp.eq.s32.totalorder %s12, 0
      %p105 = por %p103, %p104
      %p106 = scmp.ne.s32.totalorder %s95, %s98
      %p107 = scmp.eq.s32.totalorder %s17, 3
      %p108 = por %p106, %p107
      %p109 = scmp.ne.s32.totalorder %s98, %s99
      %p110 = scmp.eq.s32.totalorder %s17, 0
      %p111 = por %p109, %p110
      %p112 = scmp.ne.s32.totalorder %s98, %s99
      %p113 = scmp.eq.s32.totalorder %s18, 3
      %p114 = por %p112, %p113
      %p116 = scmp.ne.s32.totalorder %s99, %s115
      %p117 = scmp.eq.s32.totalorder %s18, 0
      %p118 = por %p116, %p117
      %p119 = scmp.le.s32.totalorder 1, %s12
      %p120 = scmp.lt.s32.totalorder %s12, 5
      %p121 = pnand %p119, %p120
      %p122 = pneg %p121
      // Predicated region
      $region9: #{bottleneck_forward.7} parent=5 // pred_check
        _
      $region10: #{bottleneck_forward.7} parent=5 // pred_check_branch
        %124 = sbr.rel (%p121) target = $region12
      $region11: #{bottleneck_forward.7} parent=5 // pred_region
        %s125 = ssub.s32 %s12, 1
        // Predicated region
        $region13: #{bottleneck_forward.7} parent=11 // pred_check
          %p126 = pneg %p85
        $region14: #{bottleneck_forward.7} parent=11 // pred_check_branch
          %128 = sbr.rel (%p126) target = $region16
        $region15: #{bottleneck_forward.7} parent=11 // pred_region
          _
        $region16: #{bottleneck_forward.7} parent=11 // pred_fallthru
          _
      $region12: #{bottleneck_forward.7} parent=5 // pred_fallthru
        _
      %p129 = scmp.lt.s32.totalorder %s12, 4
      // Predicated region
      $region17: #{bottleneck_forward.7} parent=5 // pred_check
        %p130 = pneg %p129
      $region18: #{bottleneck_forward.7} parent=5 // pred_check_branch
        %132 = sbr.rel (%p130) target = $region20
      $region19: #{bottleneck_forward.7} parent=5 // pred_region
        // Predicated region
        $region21: #{bottleneck_forward.7} parent=19 // pred_check
          %p133 = pneg %p32
        $region22: #{bottleneck_forward.7} parent=19 // pred_check_branch
          %135 = sbr.rel (%p133) target = $region24
        $region23: #{bottleneck_forward.7} parent=19 // pred_region
          %s136 = smul.u32 16, %s12
          %p137 = scmp.lt.s32.totalorder %s136, 63
          %s138 = scalar_select %p137, %s136, 63
          %s139 = smul.addr %s138, 4
          %s140 = scalar_lea.vmem %s0, %s139
          %s141 = smul.u32 16, %s12
        $region24: #{bottleneck_forward.7} parent=19 // pred_fallthru
          _
        // Predicated region
        $region25: #{bottleneck_forward.7} parent=19 // pred_check
          %p142 = pneg %p58
        $region26: #{bottleneck_forward.7} parent=19 // pred_check_branch
          %144 = sbr.rel (%p142) target = $region28
        $region27: #{bottleneck_forward.7} parent=19 // pred_region
          %s145 = smul.u32 16, %s12
          %p146 = scmp.lt.s32.totalorder %s145, 63
          %s147 = scalar_select %p146, %s145, 63
          %s148 = smul.addr %s147, 8
          %s149 = scalar_lea.vmem %s1, %s148
          %s150 = smul.u32 16, %s12
        $region28: #{bottleneck_forward.7} parent=19 // pred_fallthru
          _
      $region20: #{bottleneck_forward.7} parent=5 // pred_fallthru
        _
      %p151 = scmp.le.s32.totalorder 1, %s12
      %p152 = scmp.lt.s32.totalorder %s12, 5
      %p153 = pnand %p151, %p152
      %p154 = pneg %p153
      // Predicated region
      $region29: #{bottleneck_forward.7} parent=5 // pred_check
        _
      $region30: #{bottleneck_forward.7} parent=5 // pred_check_branch
        %156 = sbr.rel (%p153) target = $region32
      $region31: #{bottleneck_forward.7} parent=5 // pred_region
        %s157 = ssub.s32 %s12, 1
        %s158 = smul.u32 16, %s17
        %p159 = scmp.lt.s32.totalorder %s158, 63
        %s160 = scalar_select %p159, %s158, 63
        %s161 = smul.addr %s160, 4
        %s162 = scalar_lea.vmem %s0, %s161
        %p163 = pneg %p38
        %p164 = pneg %p35
        %s165 = smul.u32 16, %s17
        %p166 = scmp.lt.s32.totalorder %s165, 63
        %s167 = scalar_select %p166, %s165, 63
        %s168 = smul.addr %s167, 8
        %s169 = scalar_lea.vmem %s1, %s168
        %p170 = pneg %p64
        %p171 = pneg %p61
        %p172 = pneg %p85
        %p173 = pneg %p82
        %p174 = pneg %p111
        %p175 = pneg %p108
        %s176 = sand.u32 %s98, 1
        %s177 = scalar_lea.sflag [#allocation3], %s176
        %s178 = sand.u32 %s98, 1
        %s179 = smul.addr %s178, 128
        %s180 = scalar_lea.vmem [#allocation2], %s179
        %s181 = smul.u32 16, %s17
        %p182 = scmp.lt.s32.totalorder %s181, 63
        %s183 = scalar_select %p182, %s181, 63
        %s184 = smul.addr %s183, 4
        %s185 = scalar_lea.vmem %s0, %s184
        %s186 = smul.u32 16, %s17
        %s187 = smul.u32 16, %s17
        %p188 = scmp.lt.s32.totalorder %s187, 63
        %s189 = scalar_select %p188, %s187, 63
        %s190 = smul.addr %s189, 8
        %s191 = scalar_lea.vmem %s1, %s190
        %s192 = smul.u32 16, %s17
        %s193 = smul.u32 16, %s17
        %v194 = vld [vmem:[%s185] sm:$0xf]
        %v195 = vld [vmem:[%s185 + $0x4] sm:$0xf]
        %v196 = vld [vmem:[%s185 + $0x8] sm:$0xf]
        %v197 = vld [vmem:[%s185 + $0xc] sm:$0xf]
        %v198 = vld [vmem:[%s185 + $0x10] sm:$0xf]
        %v199 = vld [vmem:[%s185 + $0x14] sm:$0xf]
        %v200 = vld [vmem:[%s185 + $0x18] sm:$0xf]
        %v201 = vld [vmem:[%s185 + $0x1c] sm:$0xf]
        %v202 = vld [vmem:[%s185 + $0x20] sm:$0xf]
        %v203 = vld [vmem:[%s185 + $0x24] sm:$0xf]
        %v204 = vld [vmem:[%s185 + $0x28] sm:$0xf]
        %v205 = vld [vmem:[%s185 + $0x2c] sm:$0xf]
        %v206 = vld [vmem:[%s185 + $0x30] sm:$0xf]
        %v207 = vld [vmem:[%s185 + $0x34] sm:$0xf]
        %v208 = vld [vmem:[%s185 + $0x38] sm:$0xf]
        %v209 = vld [vmem:[%s185 + $0x3c] sm:$0xf]
        %v210 = vunpack.c.l.bf16 %v194
        %v211 = vunpack.c.l.bf16 %v195
        %v212 = vunpack.c.l.bf16 %v196
        %v213 = vunpack.c.l.bf16 %v197
        %v214 = vunpack.c.l.bf16 %v198
        %v215 = vunpack.c.l.bf16 %v199
        %v216 = vunpack.c.l.bf16 %v200
        %v217 = vunpack.c.l.bf16 %v201
        %v218 = vunpack.c.l.bf16 %v202
        %v219 = vunpack.c.l.bf16 %v203
        %v220 = vunpack.c.l.bf16 %v204
        %v221 = vunpack.c.l.bf16 %v205
        %v222 = vunpack.c.l.bf16 %v206
        %v223 = vunpack.c.l.bf16 %v207
        %v224 = vunpack.c.l.bf16 %v208
        %v225 = vunpack.c.l.bf16 %v209
        %v226 = vld [vmem:[%s2] sm:$0x1]
        %v227 = vlaneseq
        %v228 = vshrl.u32 %v227, 7
        %v229 = vsub.s32 0, %v228
        %v230 = vrot.slane %v226, %v229
        %v231 = vmul.f32 %v210, %v230
        %v232 = vmul.f32 %v211, %v230
        %v233 = vmul.f32 %v212, %v230
        %v234 = vmul.f32 %v213, %v230
        %v235 = vmul.f32 %v214, %v230
        %v236 = vmul.f32 %v215, %v230
        %v237 = vmul.f32 %v216, %v230
        %v238 = vmul.f32 %v217, %v230
        %v239 = vmul.f32 %v218, %v230
        %v240 = vmul.f32 %v219, %v230
        %v241 = vmul.f32 %v220, %v230
        %v242 = vmul.f32 %v221, %v230
        %v243 = vmul.f32 %v222, %v230
        %v244 = vmul.f32 %v223, %v230
        %v245 = vmul.f32 %v224, %v230
        %v246 = vmul.f32 %v225, %v230
        %v247 = vld [vmem:[%s2 + $0x1] sm:$0x1]
        %v248 = vlaneseq
        %v249 = vshrl.u32 %v248, 7
        %v250 = vsub.s32 0, %v249
        %v251 = vrot.slane %v247, %v250
        %v252 = vadd.f32 %v231, %v251
        %v253 = vadd.f32 %v232, %v251
        %v254 = vadd.f32 %v233, %v251
        %v255 = vadd.f32 %v234, %v251
        %v256 = vadd.f32 %v235, %v251
        %v257 = vadd.f32 %v236, %v251
        %v258 = vadd.f32 %v237, %v251
        %v259 = vadd.f32 %v238, %v251
        %v260 = vadd.f32 %v239, %v251
        %v261 = vadd.f32 %v240, %v251
        %v262 = vadd.f32 %v241, %v251
        %v263 = vadd.f32 %v242, %v251
        %v264 = vadd.f32 %v243, %v251
        %v265 = vadd.f32 %v244, %v251
        %v266 = vadd.f32 %v245, %v251
        %v267 = vadd.f32 %v246, %v251
        %v268 = vld [vmem:[%s191] sm:$0xff]
        %v269 = vld [vmem:[%s191 + $0x8] sm:$0xff]
        %v270 = vld [vmem:[%s191 + $0x10] sm:$0xff]
        %v271 = vld [vmem:[%s191 + $0x18] sm:$0xff]
        %v272 = vld [vmem:[%s191 + $0x20] sm:$0xff]
        %v273 = vld [vmem:[%s191 + $0x28] sm:$0xff]
        %v274 = vld [vmem:[%s191 + $0x30] sm:$0xff]
        %v275 = vld [vmem:[%s191 + $0x38] sm:$0xff]
        %v276 = vld [vmem:[%s191 + $0x40] sm:$0xff]
        %v277 = vld [vmem:[%s191 + $0x48] sm:$0xff]
        %v278 = vld [vmem:[%s191 + $0x50] sm:$0xff]
        %v279 = vld [vmem:[%s191 + $0x58] sm:$0xff]
        %v280 = vld [vmem:[%s191 + $0x60] sm:$0xff]
        %v281 = vld [vmem:[%s191 + $0x68] sm:$0xff]
        %v282 = vld [vmem:[%s191 + $0x70] sm:$0xff]
        %v283 = vld [vmem:[%s191 + $0x78] sm:$0xff]
        %v284 = vadd.f32 %v252, %v268
        %v285 = vadd.f32 %v253, %v269
        %v286 = vadd.f32 %v254, %v270
        %v287 = vadd.f32 %v255, %v271
        %v288 = vadd.f32 %v256, %v272
        %v289 = vadd.f32 %v257, %v273
        %v290 = vadd.f32 %v258, %v274
        %v291 = vadd.f32 %v259, %v275
        %v292 = vadd.f32 %v260, %v276
        %v293 = vadd.f32 %v261, %v277
        %v294 = vadd.f32 %v262, %v278
        %v295 = vadd.f32 %v263, %v279
        %v296 = vadd.f32 %v264, %v280
        %v297 = vadd.f32 %v265, %v281
        %v298 = vadd.f32 %v266, %v282
        %v299 = vadd.f32 %v267, %v283
        %v300 = vmax.f32 %v284, 0.0
        %v301 = vmax.f32 %v285, 0.0
        %v302 = vmax.f32 %v286, 0.0
        %v303 = vmax.f32 %v287, 0.0
        %v304 = vmax.f32 %v288, 0.0
        %v305 = vmax.f32 %v289, 0.0
        %v306 = vmax.f32 %v290, 0.0
        %v307 = vmax.f32 %v291, 0.0
        %v308 = vmax.f32 %v292, 0.0
        %v309 = vmax.f32 %v293, 0.0
        %v310 = vmax.f32 %v294, 0.0
        %v311 = vmax.f32 %v295, 0.0
        %v312 = vmax.f32 %v296, 0.0
        %v313 = vmax.f32 %v297, 0.0
        %v314 = vmax.f32 %v298, 0.0
        %v315 = vmax.f32 %v299, 0.0
        %vm316 = vcmask 130048
        %317 = vst.msk [vmem:[%s180] sm:$0xff] %vm316, %v300
        %318 = vst.msk [vmem:[%s180 + $0x8] sm:$0xff] %vm316, %v301
        %319 = vst.msk [vmem:[%s180 + $0x10] sm:$0xff] %vm316, %v302
        %320 = vst.msk [vmem:[%s180 + $0x18] sm:$0xff] %vm316, %v303
        %321 = vst.msk [vmem:[%s180 + $0x20] sm:$0xff] %vm316, %v304
        %322 = vst.msk [vmem:[%s180 + $0x28] sm:$0xff] %vm316, %v305
        %323 = vst.msk [vmem:[%s180 + $0x30] sm:$0xff] %vm316, %v306
        %324 = vst.msk [vmem:[%s180 + $0x38] sm:$0xff] %vm316, %v307
        %325 = vst.msk [vmem:[%s180 + $0x40] sm:$0xff] %vm316, %v308
        %326 = vst.msk [vmem:[%s180 + $0x48] sm:$0xff] %vm316, %v309
        %327 = vst.msk [vmem:[%s180 + $0x50] sm:$0xff] %vm316, %v310
        %328 = vst.msk [vmem:[%s180 + $0x58] sm:$0xff] %vm316, %v311
        %329 = vst.msk [vmem:[%s180 + $0x60] sm:$0xff] %vm316, %v312
        %330 = vst.msk [vmem:[%s180 + $0x68] sm:$0xff] %vm316, %v313
        %331 = vst.msk [vmem:[%s180 + $0x70] sm:$0xff] %vm316, %v314
        %332 = vst.msk [vmem:[%s180 + $0x78] sm:$0xff] %vm316, %v315
        %s333 = sand.u32 %s98, 1
        %s334 = scalar_lea.sflag [#allocation3], %s333
        %s335 = sand.u32 %s98, 1
        %s336 = smul.addr %s335, 128
        %s337 = scalar_lea.vmem [#allocation2], %s336
        // Predicated region
        $region33: #{bottleneck_forward.7} parent=31 // pred_check
          %p338 = pneg %p108
        $region34: #{bottleneck_forward.7} parent=31 // pred_check_branch
          %340 = sbr.rel (%p338) target = $region36
        $region35: #{bottleneck_forward.7} parent=31 // pred_region
          %s341 = smul.u32 16, %s17
          %s343 = ssub.s32 2048, 2048
          %344 = vsyncadd %s334, %s343
          %s345 = smul.addr %s341, 128
          %s346 = scalar_lea.hbm %s3, %s345
          %s347 = sshll.u32 %s337, 4
          %s348 = int_to_ptr.vmem [resolvable:$true] %s347
          %353 = dma.vmem_to_hbm [thread:$0]  %s348, 2048, %s346, %s334, 128, 128, 8
        $region36: #{bottleneck_forward.7} parent=31 // pred_fallthru
          _
      $region32: #{bottleneck_forward.7} parent=5 // pred_fallthru
        _
      %p354 = scmp.le.s32.totalorder 2, %s12
      // Predicated region
      $region37: #{bottleneck_forward.7} parent=5 // pred_check
        %p355 = pneg %p354
      $region38: #{bottleneck_forward.7} parent=5 // pred_check_branch
        %357 = sbr.rel (%p355) target = $region40
      $region39: #{bottleneck_forward.7} parent=5 // pred_region
        %s358 = ssub.s32 %s12, 2
        // Predicated region
        $region41: #{bottleneck_forward.7} parent=39 // pred_check
          %p359 = pneg %p114
        $region42: #{bottleneck_forward.7} parent=39 // pred_check_branch
          %361 = sbr.rel (%p359) target = $region44
        $region43: #{bottleneck_forward.7} parent=39 // pred_region
          %s362 = sand.u32 %s99, 1
          %s363 = scalar_lea.sflag [#allocation3], %s362
          %s364 = sand.u32 %s99, 1
          %s365 = smul.addr %s364, 128
          %s366 = scalar_lea.vmem [#allocation2], %s365
          %367 = dma.done %s363, 2048
        $region44: #{bottleneck_forward.7} parent=39 // pred_fallthru
          _
      $region40: #{bottleneck_forward.7} parent=5 // pred_fallthru
        _
    $region6: #{bottleneck_forward.7} parent=1 // loop_footer
      %s16 = sadd.s32 1, %s12
    $region7: #{bottleneck_forward.7} parent=1 // loop_footer_branch
      %11 = sbr.rel target = $region3
    $region8: #{bottleneck_forward.7} parent=1 // loop_exit
      _
    %368 = vsyncpa [#allocation3], 1
    %s369 = scalar_lea.sflag [#allocation3], 1
    %370 = vsyncpa %s369, 1

// kernel: bottleneck_forward.4
$region0: #{bottleneck_forward.4}
  #allocation0 [shape = 'u32[]', space=smem, size = 0x4, offset = 0x4, fixed_abs, tag = 'smem constant byte address 0x4 - core index']
  #allocation1 [shape = 'u32[144,128]{1,0:T(1,128)}', space=vmem, size = 0x12000, scoped, tag = 'internal scratch']
  %s0 = inlined_call_operand.hbm [shape: f32[512,16], index: 0, kind: input, shape index: {}]
  %s1 = inlined_call_operand.vmem [shape: bf16[16,4], index: 1, kind: input, shape index: {}]
  %s2 = inlined_call_operand.vmem [shape: bf16[512,4], index: 2, kind: output, shape index: {0}]
  %s3 = inlined_call_operand.vmem [shape: f32[4,2,4], index: 3, kind: output, shape index: {1}]
  %4 = xla_tuple %s2, %s3
  %s5 = sld [smem:[#allocation0]]
  $region53: #{bottleneck_forward.4} parent=0
    _
  %s7 = ssub.s32 1, %s5
  %s8 = scalar_select 0, %s7, %s5
  $region1: #{bottleneck_forward.4} parent=0
    #allocation2 [shape = 'u8[131072]{0}', space=vmem, size = 0x20000, scoped, tag = 'input window, operand 0']
    #allocation3 [shape = 's32[2]{0}', space=sflag, size = 0x8, scoped, tag = 'scoped memory for bottleneck_forward.4']
    %9 = vsyncpa [#allocation3], 0
    %s10 = scalar_lea.sflag [#allocation3], 1
    %11 = vsyncpa %s10, 0
    loop: start=0, step=1, limit=6
    $region2: #{bottleneck_forward.4} parent=1 // loop_pre_header
      _
    $region3: #{bottleneck_forward.4} parent=1 // loop_header
      %s13 = sphi 0, %s17
      %p14 = scmp.ge.s32.totalorder %s13, 6
      %s23 = sphi 0, %s25
      %s26 = sphi 0, %s23
      %s27 = sphi 0, %s26
      %s43 = sphi 0, %s27
      %s47 = sphi 0, %s47
      %s49 = sphi 0, %s47
      %s50 = sphi 0, %s49
      %s64 = sphi 0, %s50
      %s70 = sphi 0, %s72
      %s73 = sphi 0, %s70
      %s74 = sphi 0, %s73
      %s90 = sphi 0, %s74
      %s96 = sphi 0, %s98
      %s99 = sphi 0, %s96
      %s100 = sphi 0, %s99
      %s116 = sphi 0, %s100
    $region4: #{bottleneck_forward.4} parent=1 // loop_header_branch
      %16 = sbr.rel (%p14) target = $region8
    $region5: #{bottleneck_forward.4} parent=1 // loop_body
      %s18 = ssub.s32 %s13, 1
      %s19 = ssub.s32 %s13, 2
      %s20 = sadd.s32 %s13, 1
      %s21 = ssub.s32 %s13, %s20
      %p22 = scmp.eq.s32.totalorder %s21, 0
      %s24 = sadd.s32 %s23, 1
      %s25 = scalar_select %p22, %s23, %s24
      %p28 = pneg %p22
      %p29 = scmp.eq.s32.totalorder %s13, 3
      %p30 = por %p28, %p29
      %p31 = scmp.ne.s32.totalorder %s23, %s26
      %p32 = scmp.eq.s32.totalorder %s13, 0
      %p33 = por %p31, %p32
      %p34 = scmp.ne.s32.totalorder %s23, %s26
      %p35 = scmp.eq.s32.totalorder %s18, 3
      %p36 = por %p34, %p35
      %p37 = scmp.ne.s32.totalorder %s26, %s27
      %p38 = scmp.eq.s32.totalorder %s18, 0
      %p39 = por %p37, %p38
      %p40 = scmp.ne.s32.totalorder %s26, %s27
      %p41 = scmp.eq.s32.totalorder %s19, 3
      %p42 = por %p40, %p41
      %p44 = scmp.ne.s32.totalorder %s27, %s43
      %p45 = scmp.eq.s32.totalorder %s19, 0
      %p46 = por %p44, %p45
      %s48 = sadd.s32 %s47, 1
      %p51 = scmp.eq.s32.totalorder %s13, 3
      %p52 = scmp.ne.s32.totalorder %s47, %s49
      %p53 = scmp.eq.s32.totalorder %s13, 0
      %p54 = por %p52, %p53
      %p55 = scmp.ne.s32.totalorder %s47, %s49
      %p56 = scmp.eq.s32.totalorder %s18, 3
      %p57 = por %p55, %p56
      %p58 = scmp.ne.s32.totalorder %s49, %s50
      %p59 = scmp.eq.s32.totalorder %s18, 0
      %p60 = por %p58, %p59
      %p61 = scmp.ne.s32.totalorder %s49, %s50
      %p62 = scmp.eq.s32.totalorder %s19, 3
      %p63 = por %p61, %p62
      %p65 = scmp.ne.s32.totalorder %s50, %s64
      %p66 = scmp.eq.s32.totalorder %s19, 0
      %p67 = por %p65, %p66
      %s68 = ssub.s32 %s13, %s20
      %p69 = scmp.eq.s32.totalorder %s68, 0
      %s71 = sadd.s32 %s70, 1
      %s72 = scalar_select %p69, %s70, %s71
      %p75 = pneg %p69
      %p76 = scmp.eq.s32.totalorder %s13, 3
      %p77 = por %p75, %p76
      %p78 = scmp.ne.s32.totalorder %s70, %s73
      %p79 = scmp.eq.s32.totalorder %s13, 0
      %p80 = por %p78, %p79
      %p81 = scmp.ne.s32.totalorder %s70, %s73
      %p82 = scmp.eq.s32.totalorder %s18, 3
      %p83 = por %p81, %p82
      %p84 = scmp.ne.s32.totalorder %s73, %s74
      %p85 = scmp.eq.s32.totalorder %s18, 0
      %p86 = por %p84, %p85
      %p87 = scmp.ne.s32.totalorder %s73, %s74
      %p88 = scmp.eq.s32.totalorder %s19, 3
      %p89 = por %p87, %p88
      %p91 = scmp.ne.s32.totalorder %s74, %s90
      %p92 = scmp.eq.s32.totalorder %s19, 0
      %p93 = por %p91, %p92
      %s94 = ssub.s32 %s13, %s20
      %p95 = scmp.eq.s32.totalorder %s94, 0
      %s97 = sadd.s32 %s96, 1
      %s98 = scalar_select %p95, %s96, %s97
      %p101 = pneg %p95
      %p102 = scmp.eq.s32.totalorder %s13, 3
      %p103 = por %p101, %p102
      %p104 = scmp.ne.s32.totalorder %s96, %s99
      %p105 = scmp.eq.s32.totalorder %s13, 0
      %p106 = por %p104, %p105
      %p107 = scmp.ne.s32.totalorder %s96, %s99
      %p108 = scmp.eq.s32.totalorder %s18, 3
      %p109 = por %p107, %p108
      %p110 = scmp.ne.s32.totalorder %s99, %s100
      %p111 = scmp.eq.s32.totalorder %s18, 0
      %p112 = por %p110, %p111
      %p113 = scmp.ne.s32.totalorder %s99, %s100
      %p114 = scmp.eq.s32.totalorder %s19, 3
      %p115 = por %p113, %p114
      %p117 = scmp.ne.s32.totalorder %s100, %s116
      %p118 = scmp.eq.s32.totalorder %s19, 0
      %p119 = por %p117, %p118
      %p120 = scmp.le.s32.totalorder 1, %s13
      %p121 = scmp.lt.s32.totalorder %s13, 5
      %p122 = pnand %p120, %p121
      %p123 = pneg %p122
      // Predicated region
      $region9: #{bottleneck_forward.4} parent=5 // pred_check
        _
      $region10: #{bottleneck_forward.4} parent=5 // pred_check_branch
        %125 = sbr.rel (%p122) target = $region12
      $region11: #{bottleneck_forward.4} parent=5 // pred_region
        %s126 = ssub.s32 %s13, 1
        // Predicated region
        $region13: #{bottleneck_forward.4} parent=11 // pred_check
          %p127 = pneg %p60
        $region14: #{bottleneck_forward.4} parent=11 // pred_check_branch
          %129 = sbr.rel (%p127) target = $region16
        $region15: #{bottleneck_forward.4} parent=11 // pred_region
          _
        $region16: #{bottleneck_forward.4} parent=11 // pred_fallthru
          _
      $region12: #{bottleneck_forward.4} parent=5 // pred_fallthru
        _
      %p130 = scmp.lt.s32.totalorder %s13, 4
      // Predicated region
      $region17: #{bottleneck_forward.4} parent=5 // pred_check
        %p131 = pneg %p130
      $region18: #{bottleneck_forward.4} parent=5 // pred_check_branch
        %133 = sbr.rel (%p131) target = $region20
      $region19: #{bottleneck_forward.4} parent=5 // pred_region
        // Predicated region
        $region21: #{bottleneck_forward.4} parent=19 // pred_check
          %p134 = pneg %p33
        $region22: #{bottleneck_forward.4} parent=19 // pred_check_branch
          %136 = sbr.rel (%p134) target = $region24
        $region23: #{bottleneck_forward.4} parent=19 // pred_region
          %s137 = sand.u32 %s23, 1
          %s138 = scalar_lea.sflag [#allocation3], %s137
          %s139 = sand.u32 %s23, 1
          %s140 = smul.addr %s139, 128
          %s141 = scalar_lea.vmem [#allocation2], %s140
          %s142 = smul.u32 16, %s13
          %s144 = ssub.s32 2048, 2048
          %145 = vsyncadd %s138, %s144
          %s146 = smul.addr %s142, 128
          %s147 = scalar_lea.hbm %s0, %s146
          %s148 = sshll.u32 %s141, 4
          %s149 = int_to_ptr.vmem [resolvable:$true] %s148
          %154 = dma.hbm_to_vmem [thread:$0]  %s147, 2048, %s149, %s138, 128, 128, 8
        $region24: #{bottleneck_forward.4} parent=19 // pred_fallthru
          _
      $region20: #{bottleneck_forward.4} parent=5 // pred_fallthru
        _
      %p155 = scmp.le.s32.totalorder 1, %s13
      %p156 = scmp.lt.s32.totalorder %s13, 5
      %p157 = pnand %p155, %p156
      %p158 = pneg %p157
      // Predicated region
      $region25: #{bottleneck_forward.4} parent=5 // pred_check
        _
      $region26: #{bottleneck_forward.4} parent=5 // pred_check_branch
        %160 = sbr.rel (%p157) target = $region28
      $region27: #{bottleneck_forward.4} parent=5 // pred_region
        %s161 = ssub.s32 %s13, 1
        %s162 = sand.u32 %s26, 1
        %s163 = scalar_lea.sflag [#allocation3], %s162
        %s164 = sand.u32 %s26, 1
        %s165 = smul.addr %s164, 128
        %s166 = scalar_lea.vmem [#allocation2], %s165
        // Predicated region
        $region29: #{bottleneck_forward.4} parent=27 // pred_check
          %p167 = pneg %p39
        $region30: #{bottleneck_forward.4} parent=27 // pred_check_branch
          %169 = sbr.rel (%p167) target = $region32
        $region31: #{bottleneck_forward.4} parent=27 // pred_region
          %170 = dma.done %s163, 2048
        $region32: #{bottleneck_forward.4} parent=27 // pred_fallthru
          _
        %s171 = sand.u32 %s26, 1
        %s172 = scalar_lea.sflag [#allocation3], %s171
        %s173 = sand.u32 %s26, 1
        %s174 = smul.addr %s173, 128
        %s175 = scalar_lea.vmem [#allocation2], %s174
        %p176 = pneg %p39
        %p177 = pneg %p36
        %p178 = pneg %p60
        %p179 = pneg %p57
        %p180 = pneg %p86
        %p181 = pneg %p83
        %s182 = smul.u32 16, %s18
        %p183 = scmp.lt.s32.totalorder %s182, 63
        %s184 = scalar_select %p183, %s182, 63
        %s185 = smul.addr %s184, 4
        %s186 = scalar_lea.vmem %s2, %s185
        %p187 = pneg %p112
        %p188 = pneg %p109
        %p189 = scmp.lt.s32.totalorder %s18, 3
        %s190 = scalar_select %p189, %s18, 3
        %s191 = smul.addr %s190, 2
        %s192 = scalar_lea.vmem %s3, %s191
        %s193 = smul.u32 16, %s18
        %s194 = smul.u32 16, %s18
        %p195 = scmp.lt.s32.totalorder %s194, 63
        %s196 = scalar_select %p195, %s194, 63
        %s197 = smul.addr %s196, 4
        %s198 = scalar_lea.vmem %s2, %s197
        %s199 = smul.u32 16, %s18
        %p200 = scmp.lt.s32.totalorder %s18, 3
        %s201 = scalar_select %p200, %s18, 3
        %s202 = smul.addr %s201, 2
        %s203 = scalar_lea.vmem %s3, %s202
        %v205 = vld [vmem:[%s166] sm:$0xff]
        %v206 = vld [vmem:[%s166 + $0x8] sm:$0xff]
        %v207 = vld [vmem:[%s166 + $0x10] sm:$0xff]
        %v208 = vld [vmem:[%s166 + $0x18] sm:$0xff]
        %v209 = vld [vmem:[%s166 + $0x20] sm:$0xff]
        %v210 = vld [vmem:[%s166 + $0x28] sm:$0xff]
        %v211 = vld [vmem:[%s166 + $0x30] sm:$0xff]
        %v212 = vld [vmem:[%s166 + $0x38] sm:$0xff]
        %v213 = vld [vmem:[%s166 + $0x40] sm:$0xff]
        %v214 = vld [vmem:[%s166 + $0x48] sm:$0xff]
        %v215 = vld [vmem:[%s166 + $0x50] sm:$0xff]
        %v216 = vld [vmem:[%s166 + $0x58] sm:$0xff]
        %v217 = vld [vmem:[%s166 + $0x60] sm:$0xff]
        %v218 = vld [vmem:[%s166 + $0x68] sm:$0xff]
        %v219 = vld [vmem:[%s166 + $0x70] sm:$0xff]
        %v220 = vld [vmem:[%s166 + $0x78] sm:$0xff]
        %v221 = vpack.c.bf16 %v206, %v205
        %v222 = vpack.c.bf16 %v208, %v207
        %v223 = vpack.c.bf16 %v210, %v209
        %v224 = vpack.c.bf16 %v212, %v211
        %v225 = vpack.c.bf16 %v214, %v213
        %v226 = vpack.c.bf16 %v216, %v215
        %v227 = vpack.c.bf16 %v218, %v217
        %v228 = vpack.c.bf16 %v220, %v219
        %v229 = vld [vmem:[%s1] sm:$0xf]
        %v230 = vld [vmem:[%s1 + $0x4] sm:$0xf]
        %v233 = vunpack.c.l.b16 %v229
        %v234 = vunpack.c.l.b16 %v230
        %v235 = vpack.c.b16 %v234, %v233
        %vm237 = vcmask 130048
        %v239 = vsel %vm237, %v221, 0
        %v242 = vsel %vm237, %v222, 0
        %v245 = vsel %vm237, %v223, 0
        %v248 = vsel %vm237, %v224, 0
        %v251 = vsel %vm237, %v225, 0
        %v254 = vsel %vm237, %v226, 0
        %v257 = vsel %vm237, %v227, 0
        %v260 = vsel %vm237, %v228, 0
        %262 = vmatprep.subr.bf16.mxu0 0
        %263 = vmatpush1.bf16.msra.mxu0 %v235
        %264 = vmatprep.subr.bf16.mxu0 0
        %265 = vmatpush1.bf16.msra.mxu0 0
        %266 = vmatprep.subr.bf16.mxu0 0
        %267 = vmatpush1.bf16.msra.mxu0 0
        %268 = vmatprep.subr.bf16.mxu0 0
        %269 = vmatpush1.bf16.msra.mxu0 0
        %270 = vmatprep.subr.bf16.mxu0 0
        %271 = vmatpush1.bf16.msra.mxu0 0
        %272 = vmatprep.subr.bf16.mxu0 0
        %273 = vmatpush1.bf16.msra.mxu0 0
        %274 = vmatprep.subr.bf16.mxu0 0
        %275 = vmatpush1.bf16.msra.mxu0 0
        %276 = vmatprep.subr.bf16.mxu0 0
        %277 = vmatpush1.bf16.msra.mxu0 0
        %278 = vmatprep.subr.bf16.mxu0 0
        %279 = vmatpush1.bf16.msra.mxu0 0
        %280 = vmatprep.subr.bf16.mxu0 0
        %281 = vmatpush1.bf16.msra.mxu0 0
        %282 = vmatprep.subr.bf16.mxu0 0
        %283 = vmatpush1.bf16.msra.mxu0 0
        %284 = vmatprep.subr.bf16.mxu0 0
        %285 = vmatpush1.bf16.msra.mxu0 0
        %286 = vmatprep.subr.bf16.mxu0 0
        %287 = vmatpush1.bf16.msra.mxu0 0
        %288 = vmatprep.subr.bf16.mxu0 0
        %289 = vmatpush1.bf16.msra.mxu0 0
        %290 = vmatprep.subr.bf16.mxu0 0
        %291 = vmatpush1.bf16.msra.mxu0 0
        %292 = vmatprep.subr.bf16.mxu0 0
        %293 = vmatpush1.bf16.msra.mxu0 0
        %294 = vmatprep.mubr.bf16.mxu0 0
        %295 = vmatmul.mubr.bf16.gmra.mrb[0].mxu0 %v239
        %v296 = vpop.f32.mrb[0].mxu0
        %v297 = vadd.f32 0.0, %v296
        %v298 = vpop.f32.mrb[0].mxu0
        %v299 = vpop.f32.mrb[0].mxu0
        %v300 = vadd.f32 0.0, %v299
        %v301 = vpop.f32.mrb[0].mxu0
        %302 = vmatprep.mubr.bf16.mxu0 0
        %303 = vmatmul.mubr.bf16.gmra.mrb[0].mxu0 %v242
        %v304 = vpop.f32.mrb[0].mxu0
        %v305 = vadd.f32 0.0, %v304
        %v306 = vpop.f32.mrb[0].mxu0
        %v307 = vpop.f32.mrb[0].mxu0
        %v308 = vadd.f32 0.0, %v307
        %v309 = vpop.f32.mrb[0].mxu0
        %310 = vmatprep.mubr.bf16.mxu0 0
        %311 = vmatmul.mubr.bf16.gmra.mrb[0].mxu0 %v245
        %v312 = vpop.f32.mrb[0].mxu0
        %v313 = vadd.f32 0.0, %v312
        %v314 = vpop.f32.mrb[0].mxu0
        %v315 = vpop.f32.mrb[0].mxu0
        %v316 = vadd.f32 0.0, %v315
        %v317 = vpop.f32.mrb[0].mxu0
        %318 = vmatprep.mubr.bf16.mxu0 0
        %319 = vmatmul.mubr.bf16.gmra.mrb[0].mxu0 %v248
        %v320 = vpop.f32.mrb[0].mxu0
        %v321 = vadd.f32 0.0, %v320
        %v322 = vpop.f32.mrb[0].mxu0
        %v323 = vpop.f32.mrb[0].mxu0
        %v324 = vadd.f32 0.0, %v323
        %v325 = vpop.f32.mrb[0].mxu0
        %326 = vmatprep.mubr.bf16.mxu0 0
        %327 = vmatmul.mubr.bf16.gmra.mrb[0].mxu0 %v251
        %v328 = vpop.f32.mrb[0].mxu0
        %v329 = vadd.f32 0.0, %v328
        %v330 = vpop.f32.mrb[0].mxu0
        %v331 = vpop.f32.mrb[0].mxu0
        %v332 = vadd.f32 0.0, %v331
        %v333 = vpop.f32.mrb[0].mxu0
        %334 = vmatprep.mubr.bf16.mxu0 0
        %335 = vmatmul.mubr.bf16.gmra.mrb[0].mxu0 %v254
        %v336 = vpop.f32.mrb[0].mxu0
        %v337 = vadd.f32 0.0, %v336
        %v338 = vpop.f32.mrb[0].mxu0
        %v339 = vpop.f32.mrb[0].mxu0
        %v340 = vadd.f32 0.0, %v339
        %v341 = vpop.f32.mrb[0].mxu0
        %342 = vmatprep.mubr.bf16.mxu0 0
        %343 = vmatmul.mubr.bf16.gmra.mrb[0].mxu0 %v257
        %v344 = vpop.f32.mrb[0].mxu0
        %v345 = vadd.f32 0.0, %v344
        %v346 = vpop.f32.mrb[0].mxu0
        %v347 = vpop.f32.mrb[0].mxu0
        %v348 = vadd.f32 0.0, %v347
        %v349 = vpop.f32.mrb[0].mxu0
        %350 = vmatprep.mubr.bf16.mxu0 0
        %351 = vmatmul.mubr.bf16.gmra.mrb[0].mxu0 %v260
        %v352 = vpop.f32.mrb[0].mxu0
        %v353 = vadd.f32 0.0, %v352
        %v354 = vpop.f32.mrb[0].mxu0
        %v355 = vpop.f32.mrb[0].mxu0
        %v356 = vadd.f32 0.0, %v355
        %v357 = vpop.f32.mrb[0].mxu0
        %358 = vdwg.mxu0
        %v359 = vpack.c.bf16 %v300, %v297
        %v360 = vpack.c.bf16 %v308, %v305
        %v361 = vpack.c.bf16 %v316, %v313
        %v362 = vpack.c.bf16 %v324, %v321
        %v363 = vpack.c.bf16 %v332, %v329
        %v364 = vpack.c.bf16 %v340, %v337
        %v365 = vpack.c.bf16 %v348, %v345
        %v366 = vpack.c.bf16 %v356, %v353
        %v375 = vunpack.c.l.b16 %v359
        %v376 = vunpack.c.h.b16 %v359
        %v377 = vunpack.c.l.b16 %v360
        %v378 = vunpack.c.h.b16 %v360
        %v379 = vunpack.c.l.b16 %v361
        %v380 = vunpack.c.h.b16 %v361
        %v381 = vunpack.c.l.b16 %v362
        %v382 = vunpack.c.h.b16 %v362
        %v383 = vunpack.c.l.b16 %v363
        %v384 = vunpack.c.h.b16 %v363
        %v385 = vunpack.c.l.b16 %v364
        %v386 = vunpack.c.h.b16 %v364
        %v387 = vunpack.c.l.b16 %v365
        %v388 = vunpack.c.h.b16 %v365
        %v389 = vunpack.c.l.b16 %v366
        %v390 = vunpack.c.h.b16 %v366
        %v391 = vpack.c.b16 %v375, %v375
        %v392 = vpack.c.b16 %v376, %v376
        %v393 = vpack.c.b16 %v377, %v377
        %v394 = vpack.c.b16 %v378, %v378
        %v395 = vpack.c.b16 %v379, %v379
        %v396 = vpack.c.b16 %v380, %v380
        %v397 = vpack.c.b16 %v381, %v381
        %v398 = vpack.c.b16 %v382, %v382
        %v399 = vpack.c.b16 %v383, %v383
        %v400 = vpack.c.b16 %v384, %v384
        %v401 = vpack.c.b16 %v385, %v385
        %v402 = vpack.c.b16 %v386, %v386
        %v403 = vpack.c.b16 %v387, %v387
        %v404 = vpack.c.b16 %v388, %v388
        %v405 = vpack.c.b16 %v389, %v389
        %v406 = vpack.c.b16 %v390, %v390
        %vm423 = vcmask 27648
        %424 = vst.msk [vmem:[%s198] sm:$0xf] %vm423, %v391
        %425 = vst.msk [vmem:[%s198 + $0x4] sm:$0xf] %vm423, %v392
        %426 = vst.msk [vmem:[%s198 + $0x8] sm:$0xf] %vm423, %v393
        %427 = vst.msk [vmem:[%s198 + $0xc] sm:$0xf] %vm423, %v394
        %428 = vst.msk [vmem:[%s198 + $0x10] sm:$0xf] %vm423, %v395
        %429 = vst.msk [vmem:[%s198 + $0x14] sm:$0xf] %vm423, %v396
        %430 = vst.msk [vmem:[%s198 + $0x18] sm:$0xf] %vm423, %v397
        %431 = vst.msk [vmem:[%s198 + $0x1c] sm:$0xf] %vm423, %v398
        %432 = vst.msk [vmem:[%s198 + $0x20] sm:$0xf] %vm423, %v399
        %433 = vst.msk [vmem:[%s198 + $0x24] sm:$0xf] %vm423, %v400
        %434 = vst.msk [vmem:[%s198 + $0x28] sm:$0xf] %vm423, %v401
        %435 = vst.msk [vmem:[%s198 + $0x2c] sm:$0xf] %vm423, %v402
        %436 = vst.msk [vmem:[%s198 + $0x30] sm:$0xf] %vm423, %v403
        %437 = vst.msk [vmem:[%s198 + $0x34] sm:$0xf] %vm423, %v404
        %438 = vst.msk [vmem:[%s198 + $0x38] sm:$0xf] %vm423, %v405
        %439 = vst.msk [vmem:[%s198 + $0x3c] sm:$0xf] %vm423, %v406
        %vm440 = vcmask 31744
        %v441 = vsel %vm440, %v297, 0.0
        %v442 = vsel %vm440, %v300, 0.0
        %v443 = vadd.f32 %v441, %v442
        %v444 = vsel %vm440, %v305, 0.0
        %v445 = vadd.f32 %v443, %v444
        %v446 = vsel %vm440, %v308, 0.0
        %v447 = vadd.f32 %v445, %v446
        %v448 = vsel %vm440, %v313, 0.0
        %v449 = vadd.f32 %v447, %v448
        %v450 = vsel %vm440, %v316, 0.0
        %v451 = vadd.f32 %v449, %v450
        %v452 = vsel %vm440, %v321, 0.0
        %v453 = vadd.f32 %v451, %v452
        %v454 = vsel %vm440, %v324, 0.0
        %v455 = vadd.f32 %v453, %v454
        %v456 = vsel %vm440, %v329, 0.0
        %v457 = vadd.f32 %v455, %v456
        %v458 = vsel %vm440, %v332, 0.0
        %v459 = vadd.f32 %v457, %v458
        %v460 = vsel %vm440, %v337, 0.0
        %v461 = vadd.f32 %v459, %v460
        %v462 = vsel %vm440, %v340, 0.0
        %v463 = vadd.f32 %v461, %v462
        %v464 = vsel %vm440, %v345, 0.0
        %v465 = vadd.f32 %v463, %v464
        %v466 = vsel %vm440, %v348, 0.0
        %v467 = vadd.f32 %v465, %v466
        %v468 = vsel %vm440, %v353, 0.0
        %v469 = vadd.f32 %v467, %v468
        %v470 = vsel %vm440, %v356, 0.0
        %v471 = vadd.f32 %v469, %v470
        %v472 = vrot.slane %v471, 4
        %v473 = vadd.f32 %v471, %v472
        %v474 = vrot.slane %v473, 2
        %v475 = vadd.f32 %v473, %v474
        %v476 = vrot.slane %v475, 1
        %v477 = vadd.f32 %v475, %v476
        %v478 = vmul.f32 %v297, %v297
        %v479 = vmul.f32 %v300, %v300
        %v480 = vmul.f32 %v305, %v305
        %v481 = vmul.f32 %v308, %v308
        %v482 = vmul.f32 %v313, %v313
        %v483 = vmul.f32 %v316, %v316
        %v484 = vmul.f32 %v321, %v321
        %v485 = vmul.f32 %v324, %v324
        %v486 = vmul.f32 %v329, %v329
        %v487 = vmul.f32 %v332, %v332
        %v488 = vmul.f32 %v337, %v337
        %v489 = vmul.f32 %v340, %v340
        %v490 = vmul.f32 %v345, %v345
        %v491 = vmul.f32 %v348, %v348
        %v492 = vmul.f32 %v353, %v353
        %v493 = vmul.f32 %v356, %v356
        %v494 = vsel %vm440, %v478, 0.0
        %v495 = vsel %vm440, %v479, 0.0
        %v496 = vadd.f32 %v494, %v495
        %v497 = vsel %vm440, %v480, 0.0
        %v498 = vadd.f32 %v496, %v497
        %v499 = vsel %vm440, %v481, 0.0
        %v500 = vadd.f32 %v498, %v499
        %v501 = vsel %vm440, %v482, 0.0
        %v502 = vadd.f32 %v500, %v501
        %v503 = vsel %vm440, %v483, 0.0
        %v504 = vadd.f32 %v502, %v503
        %v505 = vsel %vm440, %v484, 0.0
        %v506 = vadd.f32 %v504, %v505
        %v507 = vsel %vm440, %v485, 0.0
        %v508 = vadd.f32 %v506, %v507
        %v509 = vsel %vm440, %v486, 0.0
        %v510 = vadd.f32 %v508, %v509
        %v511 = vsel %vm440, %v487, 0.0
        %v512 = vadd.f32 %v510, %v511
        %v513 = vsel %vm440, %v488, 0.0
        %v514 = vadd.f32 %v512, %v513
        %v515 = vsel %vm440, %v489, 0.0
        %v516 = vadd.f32 %v514, %v515
        %v517 = vsel %vm440, %v490, 0.0
        %v518 = vadd.f32 %v516, %v517
        %v519 = vsel %vm440, %v491, 0.0
        %v520 = vadd.f32 %v518, %v519
        %v521 = vsel %vm440, %v492, 0.0
        %v522 = vadd.f32 %v520, %v521
        %v523 = vsel %vm440, %v493, 0.0
        %v524 = vadd.f32 %v522, %v523
        %v525 = vrot.slane %v524, 4
        %v526 = vadd.f32 %v524, %v525
        %v527 = vrot.slane %v526, 2
        %v528 = vadd.f32 %v526, %v527
        %v529 = vrot.slane %v528, 1
        %v530 = vadd.f32 %v528, %v529
        %vm531 = vcmask 1040384
        %v532 = vsel %vm531, %v477, %v530
        %vm533 = vcmask 25600
        %534 = vst.msk [vmem:[%s203] sm:$0x3] %vm533, %v532
        %s535 = smul.u32 16, %s18
        %p536 = scmp.lt.s32.totalorder %s535, 63
        %s537 = scalar_select %p536, %s535, 63
        %s538 = smul.addr %s537, 4
        %s539 = scalar_lea.vmem %s2, %s538
        %p540 = scmp.lt.s32.totalorder %s18, 3
        %s541 = scalar_select %p540, %s18, 3
        %s542 = smul.addr %s541, 2
        %s543 = scalar_lea.vmem %s3, %s542
        // Predicated region
        $region33: #{bottleneck_forward.4} parent=27 // pred_check
          %p544 = pneg %p83
        $region34: #{bottleneck_forward.4} parent=27 // pred_check_branch
          %546 = sbr.rel (%p544) target = $region36
        $region35: #{bottleneck_forward.4} parent=27 // pred_region
          %s547 = smul.u32 16, %s18
        $region36: #{bottleneck_forward.4} parent=27 // pred_fallthru
          _
        // Predicated region
        $region37: #{bottleneck_forward.4} parent=27 // pred_check
          %p548 = pneg %p109
        $region38: #{bottleneck_forward.4} parent=27 // pred_check_branch
          %550 = sbr.rel (%p548) target = $region40
        $region39: #{bottleneck_forward.4} parent=27 // pred_region
          _
        $region40: #{bottleneck_forward.4} parent=27 // pred_fallthru
          _
      $region28: #{bottleneck_forward.4} parent=5 // pred_fallthru
        _
      %p551 = scmp.le.s32.totalorder 2, %s13
      // Predicated region
      $region41: #{bottleneck_forward.4} parent=5 // pred_check
        %p552 = pneg %p551
      $region42: #{bottleneck_forward.4} parent=5 // pred_check_branch
        %554 = sbr.rel (%p552) target = $region44
      $region43: #{bottleneck_forward.4} parent=5 // pred_region
        %s555 = ssub.s32 %s13, 2
        // Predicated region
        $region45: #{bottleneck_forward.4} parent=43 // pred_check
          %p556 = pneg %p89
        $region46: #{bottleneck_forward.4} parent=43 // pred_check_branch
          %558 = sbr.rel (%p556) target = $region48
        $region47: #{bottleneck_forward.4} parent=43 // pred_region
          %s559 = smul.u32 16, %s19
          %p560 = scmp.lt.s32.totalorder %s559, 63
          %s561 = scalar_select %p560, %s559, 63
          %s562 = smul.addr %s561, 4
          %s563 = scalar_lea.vmem %s2, %s562
        $region48: #{bottleneck_forward.4} parent=43 // pred_fallthru
          _
        // Predicated region
        $region49: #{bottleneck_forward.4} parent=43 // pred_check
          %p564 = pneg %p115
        $region50: #{bottleneck_forward.4} parent=43 // pred_check_branch
          %566 = sbr.rel (%p564) target = $region52
        $region51: #{bottleneck_forward.4} parent=43 // pred_region
          %p567 = scmp.lt.s32.totalorder %s19, 3
          %s568 = scalar_select %p567, %s19, 3
          %s569 = smul.addr %s568, 2
          %s570 = scalar_lea.vmem %s3, %s569
        $region52: #{bottleneck_forward.4} parent=43 // pred_fallthru
          _
      $region44: #{bottleneck_forward.4} parent=5 // pred_fallthru
        _
    $region6: #{bottleneck_forward.4} parent=1 // loop_footer
      %s17 = sadd.s32 1, %s13
    $region7: #{bottleneck_forward.4} parent=1 // loop_footer_branch
      %12 = sbr.rel target = $region3
    $region8: #{bottleneck_forward.4} parent=1 // loop_exit
      _
    %571 = vsyncpa [#allocation3], 1
    %s572 = scalar_lea.sflag [#allocation3], 1
    %573 = vsyncpa %s572, 1

// kernel: bottleneck_forward.6
$region0: #{bottleneck_forward.6}
  #allocation0 [shape = 'u32[]', space=smem, size = 0x4, offset = 0x4, fixed_abs, tag = 'smem constant byte address 0x4 - core index']
  #allocation1 [shape = 'u32[144,128]{1,0:T(1,128)}', space=vmem, size = 0x12000, scoped, tag = 'internal scratch']
  %s0 = inlined_call_operand.vmem [shape: bf16[512,4], index: 0, kind: input, shape index: {}]
  %s1 = inlined_call_operand.vmem [shape: f32[2,4], index: 1, kind: input, shape index: {}]
  %s2 = inlined_call_operand.vmem [shape: bf16[4,16], index: 2, kind: input, shape index: {}]
  %s3 = inlined_call_operand.vmem [shape: bf16[512,16], index: 3, kind: output, shape index: {0}]
  %s4 = inlined_call_operand.vmem [shape: f32[4,2,16], index: 4, kind: output, shape index: {1}]
  %5 = xla_tuple %s3, %s4
  %s6 = sld [smem:[#allocation0]]
  $region53: #{bottleneck_forward.6} parent=0
    _
  %s8 = ssub.s32 1, %s6
  %s9 = scalar_select 0, %s8, %s6
  loop: start=0, step=1, limit=6
  $region2: #{bottleneck_forward.6} parent=0 // loop_pre_header
    _
  $region3: #{bottleneck_forward.6} parent=0 // loop_header
    %s11 = sphi 0, %s15
    %p12 = scmp.ge.s32.totalorder %s11, 6
    %s21 = sphi 0, %s23
    %s24 = sphi 0, %s21
    %s25 = sphi 0, %s24
    %s41 = sphi 0, %s25
    %s45 = sphi 0, %s45
    %s47 = sphi 0, %s45
    %s48 = sphi 0, %s47
    %s62 = sphi 0, %s48
    %s66 = sphi 0, %s66
    %s68 = sphi 0, %s66
    %s69 = sphi 0, %s68
    %s83 = sphi 0, %s69
    %s89 = sphi 0, %s91
    %s92 = sphi 0, %s89
    %s93 = sphi 0, %s92
    %s109 = sphi 0, %s93
    %s115 = sphi 0, %s117
    %s118 = sphi 0, %s115
    %s119 = sphi 0, %s118
    %s135 = sphi 0, %s119
  $region4: #{bottleneck_forward.6} parent=0 // loop_header_branch
    %14 = sbr.rel (%p12) target = $region8
  $region5: #{bottleneck_forward.6} parent=0 // loop_body
    %s16 = ssub.s32 %s11, 1
    %s17 = ssub.s32 %s11, 2
    %s18 = sadd.s32 %s11, 1
    %s19 = ssub.s32 %s11, %s18
    %p20 = scmp.eq.s32.totalorder %s19, 0
    %s22 = sadd.s32 %s21, 1
    %s23 = scalar_select %p20, %s21, %s22
    %p26 = pneg %p20
    %p27 = scmp.eq.s32.totalorder %s11, 3
    %p28 = por %p26, %p27
    %p29 = scmp.ne.s32.totalorder %s21, %s24
    %p30 = scmp.eq.s32.totalorder %s11, 0
    %p31 = por %p29, %p30
    %p32 = scmp.ne.s32.totalorder %s21, %s24
    %p33 = scmp.eq.s32.totalorder %s16, 3
    %p34 = por %p32, %p33
    %p35 = scmp.ne.s32.totalorder %s24, %s25
    %p36 = scmp.eq.s32.totalorder %s16, 0
    %p37 = por %p35, %p36
    %p38 = scmp.ne.s32.totalorder %s24, %s25
    %p39 = scmp.eq.s32.totalorder %s17, 3
    %p40 = por %p38, %p39
    %p42 = scmp.ne.s32.totalorder %s25, %s41
    %p43 = scmp.eq.s32.totalorder %s17, 0
    %p44 = por %p42, %p43
    %s46 = sadd.s32 %s45, 1
    %p49 = scmp.eq.s32.totalorder %s11, 3
    %p50 = scmp.ne.s32.totalorder %s45, %s47
    %p51 = scmp.eq.s32.totalorder %s11, 0
    %p52 = por %p50, %p51
    %p53 = scmp.ne.s32.totalorder %s45, %s47
    %p54 = scmp.eq.s32.totalorder %s16, 3
    %p55 = por %p53, %p54
    %p56 = scmp.ne.s32.totalorder %s47, %s48
    %p57 = scmp.eq.s32.totalorder %s16, 0
    %p58 = por %p56, %p57
    %p59 = scmp.ne.s32.totalorder %s47, %s48
    %p60 = scmp.eq.s32.totalorder %s17, 3
    %p61 = por %p59, %p60
    %p63 = scmp.ne.s32.totalorder %s48, %s62
    %p64 = scmp.eq.s32.totalorder %s17, 0
    %p65 = por %p63, %p64
    %s67 = sadd.s32 %s66, 1
    %p70 = scmp.eq.s32.totalorder %s11, 3
    %p71 = scmp.ne.s32.totalorder %s66, %s68
    %p72 = scmp.eq.s32.totalorder %s11, 0
    %p73 = por %p71, %p72
    %p74 = scmp.ne.s32.totalorder %s66, %s68
    %p75 = scmp.eq.s32.totalorder %s16, 3
    %p76 = por %p74, %p75
    %p77 = scmp.ne.s32.totalorder %s68, %s69
    %p78 = scmp.eq.s32.totalorder %s16, 0
    %p79 = por %p77, %p78
    %p80 = scmp.ne.s32.totalorder %s68, %s69
    %p81 = scmp.eq.s32.totalorder %s17, 3
    %p82 = por %p80, %p81
    %p84 = scmp.ne.s32.totalorder %s69, %s83
    %p85 = scmp.eq.s32.totalorder %s17, 0
    %p86 = por %p84, %p85
    %s87 = ssub.s32 %s11, %s18
    %p88 = scmp.eq.s32.totalorder %s87, 0
    %s90 = sadd.s32 %s89, 1
    %s91 = scalar_select %p88, %s89, %s90
    %p94 = pneg %p88
    %p95 = scmp.eq.s32.totalorder %s11, 3
    %p96 = por %p94, %p95
    %p97 = scmp.ne.s32.totalorder %s89, %s92
    %p98 = scmp.eq.s32.totalorder %s11, 0
    %p99 = por %p97, %p98
    %p100 = scmp.ne.s32.totalorder %s89, %s92
    %p101 = scmp.eq.s32.totalorder %s16, 3
    %p102 = por %p100, %p101
    %p103 = scmp.ne.s32.totalorder %s92, %s93
    %p104 = scmp.eq.s32.totalorder %s16, 0
    %p105 = por %p103, %p104
    %p106 = scmp.ne.s32.totalorder %s92, %s93
    %p107 = scmp.eq.s32.totalorder %s17, 3
    %p108 = por %p106, %p107
    %p110 = scmp.ne.s32.totalorder %s93, %s109
    %p111 = scmp.eq.s32.totalorder %s17, 0
    %p112 = por %p110, %p111
    %s113 = ssub.s32 %s11, %s18
    %p114 = scmp.eq.s32.totalorder %s113, 0
    %s116 = sadd.s32 %s115, 1
    %s117 = scalar_select %p114, %s115, %s116
    %p120 = pneg %p114
    %p121 = scmp.eq.s32.totalorder %s11, 3
    %p122 = por %p120, %p121
    %p123 = scmp.ne.s32.totalorder %s115, %s118
    %p124 = scmp.eq.s32.totalorder %s11, 0
    %p125 = por %p123, %p124
    %p126 = scmp.ne.s32.totalorder %s115, %s118
    %p127 = scmp.eq.s32.totalorder %s16, 3
    %p128 = por %p126, %p127
    %p129 = scmp.ne.s32.totalorder %s118, %s119
    %p130 = scmp.eq.s32.totalorder %s16, 0
    %p131 = por %p129, %p130
    %p132 = scmp.ne.s32.totalorder %s118, %s119
    %p133 = scmp.eq.s32.totalorder %s17, 3
    %p134 = por %p132, %p133
    %p136 = scmp.ne.s32.totalorder %s119, %s135
    %p137 = scmp.eq.s32.totalorder %s17, 0
    %p138 = por %p136, %p137
    %p139 = scmp.le.s32.totalorder 1, %s11
    %p140 = scmp.lt.s32.totalorder %s11, 5
    %p141 = pnand %p139, %p140
    %p142 = pneg %p141
    // Predicated region
    $region9: #{bottleneck_forward.6} parent=5 // pred_check
      _
    $region10: #{bottleneck_forward.6} parent=5 // pred_check_branch
      %144 = sbr.rel (%p141) target = $region12
    $region11: #{bottleneck_forward.6} parent=5 // pred_region
      %s145 = ssub.s32 %s11, 1
      // Predicated region
      $region13: #{bottleneck_forward.6} parent=11 // pred_check
        %p146 = pneg %p58
      $region14: #{bottleneck_forward.6} parent=11 // pred_check_branch
        %148 = sbr.rel (%p146) target = $region16
      $region15: #{bottleneck_forward.6} parent=11 // pred_region
        _
      $region16: #{bottleneck_forward.6} parent=11 // pred_fallthru
        _
      // Predicated region
      $region17: #{bottleneck_forward.6} parent=11 // pred_check
        %p149 = pneg %p79
      $region18: #{bottleneck_forward.6} parent=11 // pred_check_branch
        %151 = sbr.rel (%p149) target = $region20
      $region19: #{bottleneck_forward.6} parent=11 // pred_region
        _
      $region20: #{bottleneck_forward.6} parent=11 // pred_fallthru
        _
    $region12: #{bottleneck_forward.6} parent=5 // pred_fallthru
      _
    %p152 = scmp.lt.s32.totalorder %s11, 4
    // Predicated region
    $region21: #{bottleneck_forward.6} parent=5 // pred_check
      %p153 = pneg %p152
    $region22: #{bottleneck_forward.6} parent=5 // pred_check_branch
      %155 = sbr.rel (%p153) target = $region24
    $region23: #{bottleneck_forward.6} parent=5 // pred_region
      // Predicated region
      $region25: #{bottleneck_forward.6} parent=23 // pred_check
        %p156 = pneg %p31
      $region26: #{bottleneck_forward.6} parent=23 // pred_check_branch
        %158 = sbr.rel (%p156) target = $region28
      $region27: #{bottleneck_forward.6} parent=23 // pred_region
        %s159 = smul.u32 16, %s11
        %p160 = scmp.lt.s32.totalorder %s159, 63
        %s161 = scalar_select %p160, %s159, 63
        %s162 = smul.addr %s161, 4
        %s163 = scalar_lea.vmem %s0, %s162
        %s164 = smul.u32 16, %s11
      $region28: #{bottleneck_forward.6} parent=23 // pred_fallthru
        _
    $region24: #{bottleneck_forward.6} parent=5 // pred_fallthru
      _
    %p165 = scmp.le.s32.totalorder 1, %s11
    %p166 = scmp.lt.s32.totalorder %s11, 5
    %p167 = pnand %p165, %p166
    %p168 = pneg %p167
    // Predicated region
    $region29: #{bottleneck_forward.6} parent=5 // pred_check
      _
    $region30: #{bottleneck_forward.6} parent=5 // pred_check_branch
      %170 = sbr.rel (%p167) target = $region32
    $region31: #{bottleneck_forward.6} parent=5 // pred_region
      %s171 = ssub.s32 %s11, 1
      %s172 = smul.u32 16, %s16
      %p173 = scmp.lt.s32.totalorder %s172, 63
      %s174 = scalar_select %p173, %s172, 63
      %s175 = smul.addr %s174, 4
      %s176 = scalar_lea.vmem %s0, %s175
      %p177 = pneg %p37
      %p178 = pneg %p34
      %p179 = pneg %p58
      %p180 = pneg %p55
      %p181 = pneg %p79
      %p182 = pneg %p76
      %p183 = pneg %p105
      %p184 = pneg %p102
      %s185 = smul.u32 16, %s16
      %p186 = scmp.lt.s32.totalorder %s185, 63
      %s187 = scalar_select %p186, %s185, 63
      %s188 = smul.addr %s187, 4
      %s189 = scalar_lea.vmem %s3, %s188
      %p190 = pneg %p131
      %p191 = pneg %p128
      %p192 = scmp.lt.s32.totalorder %s16, 3
      %s193 = scalar_select %p192, %s16, 3
      %s194 = smul.addr %s193, 2
      %s195 = scalar_lea.vmem %s4, %s194
      %s196 = smul.u32 16, %s16
      %p197 = scmp.lt.s32.totalorder %s196, 63
      %s198 = scalar_select %p197, %s196, 63
      %s199 = smul.addr %s198, 4
      %s200 = scalar_lea.vmem %s0, %s199
      %s201 = smul.u32 16, %s16
      %s202 = smul.u32 16, %s16
      %p203 = scmp.lt.s32.totalorder %s202, 63
      %s204 = scalar_select %p203, %s202, 63
      %s205 = smul.addr %s204, 4
      %s206 = scalar_lea.vmem %s3, %s205
      %s207 = smul.u32 16, %s16
      %p208 = scmp.lt.s32.totalorder %s16, 3
      %s209 = scalar_select %p208, %s16, 3
      %s210 = smul.addr %s209, 2
      %s211 = scalar_lea.vmem %s4, %s210
      %v213 = vld [vmem:[%s200] sm:$0xf]
      %v214 = vld [vmem:[%s200 + $0x4] sm:$0xf]
      %v215 = vld [vmem:[%s200 + $0x8] sm:$0xf]
      %v216 = vld [vmem:[%s200 + $0xc] sm:$0xf]
      %v217 = vld [vmem:[%s200 + $0x10] sm:$0xf]
      %v218 = vld [vmem:[%s200 + $0x14] sm:$0xf]
      %v219 = vld [vmem:[%s200 + $0x18] sm:$0xf]
      %v220 = vld [vmem:[%s200 + $0x1c] sm:$0xf]
      %v221 = vld [vmem:[%s200 + $0x20] sm:$0xf]
      %v222 = vld [vmem:[%s200 + $0x24] sm:$0xf]
      %v223 = vld [vmem:[%s200 + $0x28] sm:$0xf]
      %v224 = vld [vmem:[%s200 + $0x2c] sm:$0xf]
      %v225 = vld [vmem:[%s200 + $0x30] sm:$0xf]
      %v226 = vld [vmem:[%s200 + $0x34] sm:$0xf]
      %v227 = vld [vmem:[%s200 + $0x38] sm:$0xf]
      %v228 = vld [vmem:[%s200 + $0x3c] sm:$0xf]
      %v229 = vunpack.c.l.bf16 %v213
      %v230 = vunpack.c.l.bf16 %v214
      %v231 = vunpack.c.l.bf16 %v215
      %v232 = vunpack.c.l.bf16 %v216
      %v233 = vunpack.c.l.bf16 %v217
      %v234 = vunpack.c.l.bf16 %v218
      %v235 = vunpack.c.l.bf16 %v219
      %v236 = vunpack.c.l.bf16 %v220
      %v237 = vunpack.c.l.bf16 %v221
      %v238 = vunpack.c.l.bf16 %v222
      %v239 = vunpack.c.l.bf16 %v223
      %v240 = vunpack.c.l.bf16 %v224
      %v241 = vunpack.c.l.bf16 %v225
      %v242 = vunpack.c.l.bf16 %v226
      %v243 = vunpack.c.l.bf16 %v227
      %v244 = vunpack.c.l.bf16 %v228
      %v245 = vld [vmem:[%s1] sm:$0x1]
      %v246 = vlaneseq
      %v247 = vshrl.u32 %v246, 7
      %v248 = vsub.s32 0, %v247
      %v249 = vrot.slane %v245, %v248
      %v250 = vmul.f32 %v229, %v249
      %v251 = vmul.f32 %v230, %v249
      %v252 = vmul.f32 %v231, %v249
      %v253 = vmul.f32 %v232, %v249
      %v254 = vmul.f32 %v233, %v249
      %v255 = vmul.f32 %v234, %v249
      %v256 = vmul.f32 %v235, %v249
      %v257 = vmul.f32 %v236, %v249
      %v258 = vmul.f32 %v237, %v249
      %v259 = vmul.f32 %v238, %v249
      %v260 = vmul.f32 %v239, %v249
      %v261 = vmul.f32 %v240, %v249
      %v262 = vmul.f32 %v241, %v249
      %v263 = vmul.f32 %v242, %v249
      %v264 = vmul.f32 %v243, %v249
      %v265 = vmul.f32 %v244, %v249
      %v266 = vld [vmem:[%s1 + $0x1] sm:$0x1]
      %v267 = vlaneseq
      %v268 = vshrl.u32 %v267, 7
      %v269 = vsub.s32 0, %v268
      %v270 = vrot.slane %v266, %v269
      %v271 = vadd.f32 %v250, %v270
      %v272 = vadd.f32 %v251, %v270
      %v273 = vadd.f32 %v252, %v270
      %v274 = vadd.f32 %v253, %v270
      %v275 = vadd.f32 %v254, %v270
      %v276 = vadd.f32 %v255, %v270
      %v277 = vadd.f32 %v256, %v270
      %v278 = vadd.f32 %v257, %v270
      %v279 = vadd.f32 %v258, %v270
      %v280 = vadd.f32 %v259, %v270
      %v281 = vadd.f32 %v260, %v270
      %v282 = vadd.f32 %v261, %v270
      %v283 = vadd.f32 %v262, %v270
      %v284 = vadd.f32 %v263, %v270
      %v285 = vadd.f32 %v264, %v270
      %v286 = vadd.f32 %v265, %v270
      %v287 = vmax.f32 %v271, 0.0
      %v288 = vmax.f32 %v272, 0.0
      %v289 = vmax.f32 %v273, 0.0
      %v290 = vmax.f32 %v274, 0.0
      %v291 = vmax.f32 %v275, 0.0
      %v292 = vmax.f32 %v276, 0.0
      %v293 = vmax.f32 %v277, 0.0
      %v294 = vmax.f32 %v278, 0.0
      %v295 = vmax.f32 %v279, 0.0
      %v296 = vmax.f32 %v280, 0.0
      %v297 = vmax.f32 %v281, 0.0
      %v298 = vmax.f32 %v282, 0.0
      %v299 = vmax.f32 %v283, 0.0
      %v300 = vmax.f32 %v284, 0.0
      %v301 = vmax.f32 %v285, 0.0
      %v302 = vmax.f32 %v286, 0.0
      %v303 = vpack.c.bf16 %v288, %v287
      %v304 = vpack.c.bf16 %v290, %v289
      %v305 = vpack.c.bf16 %v292, %v291
      %v306 = vpack.c.bf16 %v294, %v293
      %v307 = vpack.c.bf16 %v296, %v295
      %v308 = vpack.c.bf16 %v298, %v297
      %v309 = vpack.c.bf16 %v300, %v299
      %v310 = vpack.c.bf16 %v302, %v301
      %v311 = vld [vmem:[%s2] sm:$0x3]
      %vm312 = vcmask 31744
      %v314 = vsel %vm312, %v303, 0
      %v317 = vsel %vm312, %v304, 0
      %v320 = vsel %vm312, %v305, 0
      %v323 = vsel %vm312, %v306, 0
      %v326 = vsel %vm312, %v307, 0
      %v329 = vsel %vm312, %v308, 0
      %v332 = vsel %vm312, %v309, 0
      %v335 = vsel %vm312, %v310, 0
      %vm337 = vcmask 1041408
      %v339 = vsel %vm337, %v311, 0
      %341 = vmatprep.subr.bf16.mxu0 0
      %342 = vmatpush1.bf16.msra.mxu0 %v339
      %343 = vmatprep.subr.bf16.mxu0 0
      %344 = vmatpush1.bf16.msra.mxu0 0
      %345 = vmatprep.subr.bf16.mxu0 0
      %346 = vmatpush1.bf16.msra.mxu0 0
      %347 = vmatprep.subr.bf16.mxu0 0
      %348 = vmatpush1.bf16.msra.mxu0 0
      %349 = vmatprep.subr.bf16.mxu0 0
      %350 = vmatpush1.bf16.msra.mxu0 0
      %351 = vmatprep.subr.bf16.mxu0 0
      %352 = vmatpush1.bf16.msra.mxu0 0
      %353 = vmatprep.subr.bf16.mxu0 0
      %354 = vmatpush1.bf16.msra.mxu0 0
      %355 = vmatprep.subr.bf16.mxu0 0
      %356 = vmatpush1.bf16.msra.mxu0 0
      %357 = vmatprep.subr.bf16.mxu0 0
      %358 = vmatpush1.bf16.msra.mxu0 0
      %359 = vmatprep.subr.bf16.mxu0 0
      %360 = vmatpush1.bf16.msra.mxu0 0
      %361 = vmatprep.subr.bf16.mxu0 0
      %362 = vmatpush1.bf16.msra.mxu0 0
      %363 = vmatprep.subr.bf16.mxu0 0
      %364 = vmatpush1.bf16.msra.mxu0 0
      %365 = vmatprep.subr.bf16.mxu0 0
      %366 = vmatpush1.bf16.msra.mxu0 0
      %367 = vmatprep.subr.bf16.mxu0 0
      %368 = vmatpush1.bf16.msra.mxu0 0
      %369 = vmatprep.subr.bf16.mxu0 0
      %370 = vmatpush1.bf16.msra.mxu0 0
      %371 = vmatprep.subr.bf16.mxu0 0
      %372 = vmatpush1.bf16.msra.mxu0 0
      %373 = vmatprep.mubr.bf16.mxu0 0
      %374 = vmatmul.mubr.bf16.gmra.mrb[0].mxu0 %v314
      %v375 = vpop.f32.mrb[0].mxu0
      %v376 = vadd.f32 0.0, %v375
      %v377 = vpop.f32.mrb[0].mxu0
      %v378 = vpop.f32.mrb[0].mxu0
      %v379 = vadd.f32 0.0, %v378
      %v380 = vpop.f32.mrb[0].mxu0
      %381 = vmatprep.mubr.bf16.mxu0 0
      %382 = vmatmul.mubr.bf16.gmra.mrb[0].mxu0 %v317
      %v383 = vpop.f32.mrb[0].mxu0
      %v384 = vadd.f32 0.0, %v383
      %v385 = vpop.f32.mrb[0].mxu0
      %v386 = vpop.f32.mrb[0].mxu0
      %v387 = vadd.f32 0.0, %v386
      %v388 = vpop.f32.mrb[0].mxu0
      %389 = vmatprep.mubr.bf16.mxu0 0
      %390 = vmatmul.mubr.bf16.gmra.mrb[0].mxu0 %v320
      %v391 = vpop.f32.mrb[0].mxu0
      %v392 = vadd.f32 0.0, %v391
      %v393 = vpop.f32.mrb[0].mxu0
      %v394 = vpop.f32.mrb[0].mxu0
      %v395 = vadd.f32 0.0, %v394
      %v396 = vpop.f32.mrb[0].mxu0
      %397 = vmatprep.mubr.bf16.mxu0 0
      %398 = vmatmul.mubr.bf16.gmra.mrb[0].mxu0 %v323
      %v399 = vpop.f32.mrb[0].mxu0
      %v400 = vadd.f32 0.0, %v399
      %v401 = vpop.f32.mrb[0].mxu0
      %v402 = vpop.f32.mrb[0].mxu0
      %v403 = vadd.f32 0.0, %v402
      %v404 = vpop.f32.mrb[0].mxu0
      %405 = vmatprep.mubr.bf16.mxu0 0
      %406 = vmatmul.mubr.bf16.gmra.mrb[0].mxu0 %v326
      %v407 = vpop.f32.mrb[0].mxu0
      %v408 = vadd.f32 0.0, %v407
      %v409 = vpop.f32.mrb[0].mxu0
      %v410 = vpop.f32.mrb[0].mxu0
      %v411 = vadd.f32 0.0, %v410
      %v412 = vpop.f32.mrb[0].mxu0
      %413 = vmatprep.mubr.bf16.mxu0 0
      %414 = vmatmul.mubr.bf16.gmra.mrb[0].mxu0 %v329
      %v415 = vpop.f32.mrb[0].mxu0
      %v416 = vadd.f32 0.0, %v415
      %v417 = vpop.f32.mrb[0].mxu0
      %v418 = vpop.f32.mrb[0].mxu0
      %v419 = vadd.f32 0.0, %v418
      %v420 = vpop.f32.mrb[0].mxu0
      %421 = vmatprep.mubr.bf16.mxu0 0
      %422 = vmatmul.mubr.bf16.gmra.mrb[0].mxu0 %v332
      %v423 = vpop.f32.mrb[0].mxu0
      %v424 = vadd.f32 0.0, %v423
      %v425 = vpop.f32.mrb[0].mxu0
      %v426 = vpop.f32.mrb[0].mxu0
      %v427 = vadd.f32 0.0, %v426
      %v428 = vpop.f32.mrb[0].mxu0
      %429 = vmatprep.mubr.bf16.mxu0 0
      %430 = vmatmul.mubr.bf16.gmra.mrb[0].mxu0 %v335
      %v431 = vpop.f32.mrb[0].mxu0
      %v432 = vadd.f32 0.0, %v431
      %v433 = vpop.f32.mrb[0].mxu0
      %v434 = vpop.f32.mrb[0].mxu0
      %v435 = vadd.f32 0.0, %v434
      %v436 = vpop.f32.mrb[0].mxu0
      %437 = vdwg.mxu0
      %v438 = vpack.c.bf16 %v379, %v376
      %v439 = vpack.c.bf16 %v387, %v384
      %v440 = vpack.c.bf16 %v395, %v392
      %v441 = vpack.c.bf16 %v403, %v400
      %v442 = vpack.c.bf16 %v411, %v408
      %v443 = vpack.c.bf16 %v419, %v416
      %v444 = vpack.c.bf16 %v427, %v424
      %v445 = vpack.c.bf16 %v435, %v432
      %v454 = vunpack.c.l.b16 %v438
      %v455 = vunpack.c.h.b16 %v438
      %v456 = vunpack.c.l.b16 %v439
      %v457 = vunpack.c.h.b16 %v439
      %v458 = vunpack.c.l.b16 %v440
      %v459 = vunpack.c.h.b16 %v440
      %v460 = vunpack.c.l.b16 %v441
      %v461 = vunpack.c.h.b16 %v441
      %v462 = vunpack.c.l.b16 %v442
      %v463 = vunpack.c.h.b16 %v442
      %v464 = vunpack.c.l.b16 %v443
      %v465 = vunpack.c.h.b16 %v443
      %v466 = vunpack.c.l.b16 %v444
      %v467 = vunpack.c.h.b16 %v444
      %v468 = vunpack.c.l.b16 %v445
      %v469 = vunpack.c.h.b16 %v445
      %v470 = vpack.c.b16 %v454, %v454
      %v471 = vpack.c.b16 %v455, %v455
      %v472 = vpack.c.b16 %v456, %v456
      %v473 = vpack.c.b16 %v457, %v457
      %v474 = vpack.c.b16 %v458, %v458
      %v475 = vpack.c.b16 %v459, %v459
      %v476 = vpack.c.b16 %v460, %v460
      %v477 = vpack.c.b16 %v461, %v461
      %v478 = vpack.c.b16 %v462, %v462
      %v479 = vpack.c.b16 %v463, %v463
      %v480 = vpack.c.b16 %v464, %v464
      %v481 = vpack.c.b16 %v465, %v465
      %v482 = vpack.c.b16 %v466, %v466
      %v483 = vpack.c.b16 %v467, %v467
      %v484 = vpack.c.b16 %v468, %v468
      %v485 = vpack.c.b16 %v469, %v469
      %vm502 = vcmask 125952
      %503 = vst.msk [vmem:[%s206] sm:$0xf] %vm502, %v470
      %504 = vst.msk [vmem:[%s206 + $0x4] sm:$0xf] %vm502, %v471
      %505 = vst.msk [vmem:[%s206 + $0x8] sm:$0xf] %vm502, %v472
      %506 = vst.msk [vmem:[%s206 + $0xc] sm:$0xf] %vm502, %v473
      %507 = vst.msk [vmem:[%s206 + $0x10] sm:$0xf] %vm502, %v474
      %508 = vst.msk [vmem:[%s206 + $0x14] sm:$0xf] %vm502, %v475
      %509 = vst.msk [vmem:[%s206 + $0x18] sm:$0xf] %vm502, %v476
      %510 = vst.msk [vmem:[%s206 + $0x1c] sm:$0xf] %vm502, %v477
      %511 = vst.msk [vmem:[%s206 + $0x20] sm:$0xf] %vm502, %v478
      %512 = vst.msk [vmem:[%s206 + $0x24] sm:$0xf] %vm502, %v479
      %513 = vst.msk [vmem:[%s206 + $0x28] sm:$0xf] %vm502, %v480
      %514 = vst.msk [vmem:[%s206 + $0x2c] sm:$0xf] %vm502, %v481
      %515 = vst.msk [vmem:[%s206 + $0x30] sm:$0xf] %vm502, %v482
      %516 = vst.msk [vmem:[%s206 + $0x34] sm:$0xf] %vm502, %v483
      %517 = vst.msk [vmem:[%s206 + $0x38] sm:$0xf] %vm502, %v484
      %518 = vst.msk [vmem:[%s206 + $0x3c] sm:$0xf] %vm502, %v485
      %vm519 = vcmask 130048
      %v520 = vsel %vm519, %v376, 0.0
      %v521 = vsel %vm519, %v379, 0.0
      %v522 = vadd.f32 %v520, %v521
      %v523 = vsel %vm519, %v384, 0.0
      %v524 = vadd.f32 %v522, %v523
      %v525 = vsel %vm519, %v387, 0.0
      %v526 = vadd.f32 %v524, %v525
      %v527 = vsel %vm519, %v392, 0.0
      %v528 = vadd.f32 %v526, %v527
      %v529 = vsel %vm519, %v395, 0.0
      %v530 = vadd.f32 %v528, %v529
      %v531 = vsel %vm519, %v400, 0.0
      %v532 = vadd.f32 %v530, %v531
      %v533 = vsel %vm519, %v403, 0.0
      %v534 = vadd.f32 %v532, %v533
      %v535 = vsel %vm519, %v408, 0.0
      %v536 = vadd.f32 %v534, %v535
      %v537 = vsel %vm519, %v411, 0.0
      %v538 = vadd.f32 %v536, %v537
      %v539 = vsel %vm519, %v416, 0.0
      %v540 = vadd.f32 %v538, %v539
      %v541 = vsel %vm519, %v419, 0.0
      %v542 = vadd.f32 %v540, %v541
      %v543 = vsel %vm519, %v424, 0.0
      %v544 = vadd.f32 %v542, %v543
      %v545 = vsel %vm519, %v427, 0.0
      %v546 = vadd.f32 %v544, %v545
      %v547 = vsel %vm519, %v432, 0.0
      %v548 = vadd.f32 %v546, %v547
      %v549 = vsel %vm519, %v435, 0.0
      %v550 = vadd.f32 %v548, %v549
      %v551 = vrot.slane %v550, 4
      %v552 = vadd.f32 %v550, %v551
      %v553 = vrot.slane %v552, 2
      %v554 = vadd.f32 %v552, %v553
      %v555 = vrot.slane %v554, 1
      %v556 = vadd.f32 %v554, %v555
      %v557 = vmul.f32 %v376, %v376
      %v558 = vmul.f32 %v379, %v379
      %v559 = vmul.f32 %v384, %v384
      %v560 = vmul.f32 %v387, %v387
      %v561 = vmul.f32 %v392, %v392
      %v562 = vmul.f32 %v395, %v395
      %v563 = vmul.f32 %v400, %v400
      %v564 = vmul.f32 %v403, %v403
      %v565 = vmul.f32 %v408, %v408
      %v566 = vmul.f32 %v411, %v411
      %v567 = vmul.f32 %v416, %v416
      %v568 = vmul.f32 %v419, %v419
      %v569 = vmul.f32 %v424, %v424
      %v570 = vmul.f32 %v427, %v427
      %v571 = vmul.f32 %v432, %v432
      %v572 = vmul.f32 %v435, %v435
      %v573 = vsel %vm519, %v557, 0.0
      %v574 = vsel %vm519, %v558, 0.0
      %v575 = vadd.f32 %v573, %v574
      %v576 = vsel %vm519, %v559, 0.0
      %v577 = vadd.f32 %v575, %v576
      %v578 = vsel %vm519, %v560, 0.0
      %v579 = vadd.f32 %v577, %v578
      %v580 = vsel %vm519, %v561, 0.0
      %v581 = vadd.f32 %v579, %v580
      %v582 = vsel %vm519, %v562, 0.0
      %v583 = vadd.f32 %v581, %v582
      %v584 = vsel %vm519, %v563, 0.0
      %v585 = vadd.f32 %v583, %v584
      %v586 = vsel %vm519, %v564, 0.0
      %v587 = vadd.f32 %v585, %v586
      %v588 = vsel %vm519, %v565, 0.0
      %v589 = vadd.f32 %v587, %v588
      %v590 = vsel %vm519, %v566, 0.0
      %v591 = vadd.f32 %v589, %v590
      %v592 = vsel %vm519, %v567, 0.0
      %v593 = vadd.f32 %v591, %v592
      %v594 = vsel %vm519, %v568, 0.0
      %v595 = vadd.f32 %v593, %v594
      %v596 = vsel %vm519, %v569, 0.0
      %v597 = vadd.f32 %v595, %v596
      %v598 = vsel %vm519, %v570, 0.0
      %v599 = vadd.f32 %v597, %v598
      %v600 = vsel %vm519, %v571, 0.0
      %v601 = vadd.f32 %v599, %v600
      %v602 = vsel %vm519, %v572, 0.0
      %v603 = vadd.f32 %v601, %v602
      %v604 = vrot.slane %v603, 4
      %v605 = vadd.f32 %v603, %v604
      %v606 = vrot.slane %v605, 2
      %v607 = vadd.f32 %v605, %v606
      %v608 = vrot.slane %v607, 1
      %v609 = vadd.f32 %v607, %v608
      %vm610 = vcmask 1040384
      %v611 = vsel %vm610, %v556, %v609
      %vm612 = vcmask 123904
      %613 = vst.msk [vmem:[%s211] sm:$0x3] %vm612, %v611
      %s614 = smul.u32 16, %s16
      %p615 = scmp.lt.s32.totalorder %s614, 63
      %s616 = scalar_select %p615, %s614, 63
      %s617 = smul.addr %s616, 4
      %s618 = scalar_lea.vmem %s3, %s617
      %p619 = scmp.lt.s32.totalorder %s16, 3
      %s620 = scalar_select %p619, %s16, 3
      %s621 = smul.addr %s620, 2
      %s622 = scalar_lea.vmem %s4, %s621
      // Predicated region
      $region33: #{bottleneck_forward.6} parent=31 // pred_check
        %p623 = pneg %p102
      $region34: #{bottleneck_forward.6} parent=31 // pred_check_branch
        %625 = sbr.rel (%p623) target = $region36
      $region35: #{bottleneck_forward.6} parent=31 // pred_region
        %s626 = smul.u32 16, %s16
      $region36: #{bottleneck_forward.6} parent=31 // pred_fallthru
        _
      // Predicated region
      $region37: #{bottleneck_forward.6} parent=31 // pred_check
        %p627 = pneg %p128
      $region38: #{bottleneck_forward.6} parent=31 // pred_check_branch
        %629 = sbr.rel (%p627) target = $region40
      $region39: #{bottleneck_forward.6} parent=31 // pred_region
        _
      $region40: #{bottleneck_forward.6} parent=31 // pred_fallthru
        _
    $region32: #{bottleneck_forward.6} parent=5 // pred_fallthru
      _
    %p630 = scmp.le.s32.totalorder 2, %s11
    // Predicated region
    $region41: #{bottleneck_forward.6} parent=5 // pred_check
      %p631 = pneg %p630
    $region42: #{bottleneck_forward.6} parent=5 // pred_check_branch
      %633 = sbr.rel (%p631) target = $region44
    $region43: #{bottleneck_forward.6} parent=5 // pred_region
      %s634 = ssub.s32 %s11, 2
      // Predicated region
      $region45: #{bottleneck_forward.6} parent=43 // pred_check
        %p635 = pneg %p108
      $region46: #{bottleneck_forward.6} parent=43 // pred_check_branch
        %637 = sbr.rel (%p635) target = $region48
      $region47: #{bottleneck_forward.6} parent=43 // pred_region
        %s638 = smul.u32 16, %s17
        %p639 = scmp.lt.s32.totalorder %s638, 63
        %s640 = scalar_select %p639, %s638, 63
        %s641 = smul.addr %s640, 4
        %s642 = scalar_lea.vmem %s3, %s641
      $region48: #{bottleneck_forward.6} parent=43 // pred_fallthru
        _
      // Predicated region
      $region49: #{bottleneck_forward.6} parent=43 // pred_check
        %p643 = pneg %p134
      $region50: #{bottleneck_forward.6} parent=43 // pred_check_branch
        %645 = sbr.rel (%p643) target = $region52
      $region51: #{bottleneck_forward.6} parent=43 // pred_region
        %p646 = scmp.lt.s32.totalorder %s17, 3
        %s647 = scalar_select %p646, %s17, 3
        %s648 = smul.addr %s647, 2
        %s649 = scalar_lea.vmem %s4, %s648
      $region52: #{bottleneck_forward.6} parent=43 // pred_fallthru
        _
    $region44: #{bottleneck_forward.6} parent=5 // pred_fallthru
      _
  $region6: #{bottleneck_forward.6} parent=0 // loop_footer
    %s15 = sadd.s32 1, %s11
  $region7: #{bottleneck_forward.6} parent=0 // loop_footer_branch
    %10 = sbr.rel target = $region3
  $region8: #{bottleneck_forward.6} parent=0 // loop_exit
    _

// kernel: bottleneck_forward.5
$region0: #{bottleneck_forward.5}
  #allocation0 [shape = 'u32[]', space=smem, size = 0x4, offset = 0x4, fixed_abs, tag = 'smem constant byte address 0x4 - core index']
  #allocation1 [shape = 'u32[144,128]{1,0:T(1,128)}', space=vmem, size = 0x12000, scoped, tag = 'internal scratch']
  #allocation2 [shape = 'f32[336,4]{1,0:T(8,128)}', space=vmem, size = 0x2a000, scoped, tag = 'scratch operand']
  %s0 = inlined_call_operand.vmem [shape: bf16[2,256,4], index: 0, kind: input, shape index: {}]
  %s1 = inlined_call_operand.vmem [shape: f32[2,4], index: 1, kind: input, shape index: {}]
  %s2 = inlined_call_operand.vmem [shape: bf16[9,4,4], index: 2, kind: input, shape index: {}]
  %s3 = inlined_call_operand.vmem [shape: bf16[2,256,4], index: 3, kind: output, shape index: {0}]
  %s4 = inlined_call_operand.vmem [shape: f32[2,2,4], index: 4, kind: output, shape index: {1}]
  %5 = xla_tuple %s3, %s4
  %s6 = sld [smem:[#allocation0]]
  $region53: #{bottleneck_forward.5} parent=0
    _
  %s8 = ssub.s32 1, %s6
  %s9 = scalar_select 0, %s8, %s6
  loop: start=0, step=1, limit=4
  $region2: #{bottleneck_forward.5} parent=0 // loop_pre_header
    _
  $region3: #{bottleneck_forward.5} parent=0 // loop_header
    %s11 = sphi 0, %s15
    %p12 = scmp.ge.s32.totalorder %s11, 4
    %s21 = sphi 0, %s23
    %s24 = sphi 0, %s21
    %s25 = sphi 0, %s24
    %s41 = sphi 0, %s25
    %s45 = sphi 0, %s45
    %s47 = sphi 0, %s45
    %s48 = sphi 0, %s47
    %s62 = sphi 0, %s48
    %s66 = sphi 0, %s66
    %s68 = sphi 0, %s66
    %s69 = sphi 0, %s68
    %s83 = sphi 0, %s69
    %s89 = sphi 0, %s91
    %s92 = sphi 0, %s89
    %s93 = sphi 0, %s92
    %s109 = sphi 0, %s93
    %s115 = sphi 0, %s117
    %s118 = sphi 0, %s115
    %s119 = sphi 0, %s118
    %s135 = sphi 0, %s119
  $region4: #{bottleneck_forward.5} parent=0 // loop_header_branch
    %14 = sbr.rel (%p12) target = $region8
  $region5: #{bottleneck_forward.5} parent=0 // loop_body
    %s16 = ssub.s32 %s11, 1
    %s17 = ssub.s32 %s11, 2
    %s18 = sadd.s32 %s11, 1
    %s19 = ssub.s32 %s11, %s18
    %p20 = scmp.eq.s32.totalorder %s19, 0
    %s22 = sadd.s32 %s21, 1
    %s23 = scalar_select %p20, %s21, %s22
    %p26 = pneg %p20
    %p27 = scmp.eq.s32.totalorder %s11, 1
    %p28 = por %p26, %p27
    %p29 = scmp.ne.s32.totalorder %s21, %s24
    %p30 = scmp.eq.s32.totalorder %s11, 0
    %p31 = por %p29, %p30
    %p32 = scmp.ne.s32.totalorder %s21, %s24
    %p33 = scmp.eq.s32.totalorder %s16, 1
    %p34 = por %p32, %p33
    %p35 = scmp.ne.s32.totalorder %s24, %s25
    %p36 = scmp.eq.s32.totalorder %s16, 0
    %p37 = por %p35, %p36
    %p38 = scmp.ne.s32.totalorder %s24, %s25
    %p39 = scmp.eq.s32.totalorder %s17, 1
    %p40 = por %p38, %p39
    %p42 = scmp.ne.s32.totalorder %s25, %s41
    %p43 = scmp.eq.s32.totalorder %s17, 0
    %p44 = por %p42, %p43
    %s46 = sadd.s32 %s45, 1
    %p49 = scmp.eq.s32.totalorder %s11, 1
    %p50 = scmp.ne.s32.totalorder %s45, %s47
    %p51 = scmp.eq.s32.totalorder %s11, 0
    %p52 = por %p50, %p51
    %p53 = scmp.ne.s32.totalorder %s45, %s47
    %p54 = scmp.eq.s32.totalorder %s16, 1
    %p55 = por %p53, %p54
    %p56 = scmp.ne.s32.totalorder %s47, %s48
    %p57 = scmp.eq.s32.totalorder %s16, 0
    %p58 = por %p56, %p57
    %p59 = scmp.ne.s32.totalorder %s47, %s48
    %p60 = scmp.eq.s32.totalorder %s17, 1
    %p61 = por %p59, %p60
    %p63 = scmp.ne.s32.totalorder %s48, %s62
    %p64 = scmp.eq.s32.totalorder %s17, 0
    %p65 = por %p63, %p64
    %s67 = sadd.s32 %s66, 1
    %p70 = scmp.eq.s32.totalorder %s11, 1
    %p71 = scmp.ne.s32.totalorder %s66, %s68
    %p72 = scmp.eq.s32.totalorder %s11, 0
    %p73 = por %p71, %p72
    %p74 = scmp.ne.s32.totalorder %s66, %s68
    %p75 = scmp.eq.s32.totalorder %s16, 1
    %p76 = por %p74, %p75
    %p77 = scmp.ne.s32.totalorder %s68, %s69
    %p78 = scmp.eq.s32.totalorder %s16, 0
    %p79 = por %p77, %p78
    %p80 = scmp.ne.s32.totalorder %s68, %s69
    %p81 = scmp.eq.s32.totalorder %s17, 1
    %p82 = por %p80, %p81
    %p84 = scmp.ne.s32.totalorder %s69, %s83
    %p85 = scmp.eq.s32.totalorder %s17, 0
    %p86 = por %p84, %p85
    %s87 = ssub.s32 %s11, %s18
    %p88 = scmp.eq.s32.totalorder %s87, 0
    %s90 = sadd.s32 %s89, 1
    %s91 = scalar_select %p88, %s89, %s90
    %p94 = pneg %p88
    %p95 = scmp.eq.s32.totalorder %s11, 1
    %p96 = por %p94, %p95
    %p97 = scmp.ne.s32.totalorder %s89, %s92
    %p98 = scmp.eq.s32.totalorder %s11, 0
    %p99 = por %p97, %p98
    %p100 = scmp.ne.s32.totalorder %s89, %s92
    %p101 = scmp.eq.s32.totalorder %s16, 1
    %p102 = por %p100, %p101
    %p103 = scmp.ne.s32.totalorder %s92, %s93
    %p104 = scmp.eq.s32.totalorder %s16, 0
    %p105 = por %p103, %p104
    %p106 = scmp.ne.s32.totalorder %s92, %s93
    %p107 = scmp.eq.s32.totalorder %s17, 1
    %p108 = por %p106, %p107
    %p110 = scmp.ne.s32.totalorder %s93, %s109
    %p111 = scmp.eq.s32.totalorder %s17, 0
    %p112 = por %p110, %p111
    %s113 = ssub.s32 %s11, %s18
    %p114 = scmp.eq.s32.totalorder %s113, 0
    %s116 = sadd.s32 %s115, 1
    %s117 = scalar_select %p114, %s115, %s116
    %p120 = pneg %p114
    %p121 = scmp.eq.s32.totalorder %s11, 1
    %p122 = por %p120, %p121
    %p123 = scmp.ne.s32.totalorder %s115, %s118
    %p124 = scmp.eq.s32.totalorder %s11, 0
    %p125 = por %p123, %p124
    %p126 = scmp.ne.s32.totalorder %s115, %s118
    %p127 = scmp.eq.s32.totalorder %s16, 1
    %p128 = por %p126, %p127
    %p129 = scmp.ne.s32.totalorder %s118, %s119
    %p130 = scmp.eq.s32.totalorder %s16, 0
    %p131 = por %p129, %p130
    %p132 = scmp.ne.s32.totalorder %s118, %s119
    %p133 = scmp.eq.s32.totalorder %s17, 1
    %p134 = por %p132, %p133
    %p136 = scmp.ne.s32.totalorder %s119, %s135
    %p137 = scmp.eq.s32.totalorder %s17, 0
    %p138 = por %p136, %p137
    %p139 = scmp.le.s32.totalorder 1, %s11
    %p140 = scmp.lt.s32.totalorder %s11, 3
    %p141 = pnand %p139, %p140
    %p142 = pneg %p141
    // Predicated region
    $region9: #{bottleneck_forward.5} parent=5 // pred_check
      _
    $region10: #{bottleneck_forward.5} parent=5 // pred_check_branch
      %144 = sbr.rel (%p141) target = $region12
    $region11: #{bottleneck_forward.5} parent=5 // pred_region
      %s145 = ssub.s32 %s11, 1
      // Predicated region
      $region13: #{bottleneck_forward.5} parent=11 // pred_check
        %p146 = pneg %p58
      $region14: #{bottleneck_forward.5} parent=11 // pred_check_branch
        %148 = sbr.rel (%p146) target = $region16
      $region15: #{bottleneck_forward.5} parent=11 // pred_region
        _
      $region16: #{bottleneck_forward.5} parent=11 // pred_fallthru
        _
      // Predicated region
      $region17: #{bottleneck_forward.5} parent=11 // pred_check
        %p149 = pneg %p79
      $region18: #{bottleneck_forward.5} parent=11 // pred_check_branch
        %151 = sbr.rel (%p149) target = $region20
      $region19: #{bottleneck_forward.5} parent=11 // pred_region
        _
      $region20: #{bottleneck_forward.5} parent=11 // pred_fallthru
        _
    $region12: #{bottleneck_forward.5} parent=5 // pred_fallthru
      _
    %p152 = scmp.lt.s32.totalorder %s11, 2
    // Predicated region
    $region21: #{bottleneck_forward.5} parent=5 // pred_check
      %p153 = pneg %p152
    $region22: #{bottleneck_forward.5} parent=5 // pred_check_branch
      %155 = sbr.rel (%p153) target = $region24
    $region23: #{bottleneck_forward.5} parent=5 // pred_region
      // Predicated region
      $region25: #{bottleneck_forward.5} parent=23 // pred_check
        %p156 = pneg %p31
      $region26: #{bottleneck_forward.5} parent=23 // pred_check_branch
        %158 = sbr.rel (%p156) target = $region28
      $region27: #{bottleneck_forward.5} parent=23 // pred_region
        %p159 = scmp.lt.s32.totalorder %s11, 1
        %s160 = scalar_select %p159, %s11, 1
        %s161 = smul.addr %s160, 32
        %s162 = smul.addr %s161, 4
        %s163 = scalar_lea.vmem %s0, %s162
      $region28: #{bottleneck_forward.5} parent=23 // pred_fallthru
        _
    $region24: #{bottleneck_forward.5} parent=5 // pred_fallthru
      _
    %p164 = scmp.le.s32.totalorder 1, %s11
    %p165 = scmp.lt.s32.totalorder %s11, 3
    %p166 = pnand %p164, %p165
    %p167 = pneg %p166
    // Predicated region
    $region29: #{bottleneck_forward.5} parent=5 // pred_check
      _
    $region30: #{bottleneck_forward.5} parent=5 // pred_check_branch
      %169 = sbr.rel (%p166) target = $region32
    $region31: #{bottleneck_forward.5} parent=5 // pred_region
      %s170 = ssub.s32 %s11, 1
      %p171 = scmp.lt.s32.totalorder %s16, 1
      %s172 = scalar_select %p171, %s16, 1
      %s173 = smul.addr %s172, 32
      %s174 = smul.addr %s173, 4
      %s175 = scalar_lea.vmem %s0, %s174
      %p176 = pneg %p37
      %p177 = pneg %p34
      %p178 = pneg %p58
      %p179 = pneg %p55
      %p180 = pneg %p79
      %p181 = pneg %p76
      %p182 = pneg %p105
      %p183 = pneg %p102
      %p184 = scmp.lt.s32.totalorder %s16, 1
      %s185 = scalar_select %p184, %s16, 1
      %s186 = smul.addr %s185, 32
      %s187 = smul.addr %s186, 4
      %s188 = scalar_lea.vmem %s3, %s187
      %p189 = pneg %p131
      %p190 = pneg %p128
      %p191 = scmp.lt.s32.totalorder %s16, 1
      %s192 = scalar_select %p191, %s16, 1
      %s193 = smul.addr %s192, 2
      %s194 = scalar_lea.vmem %s4, %s193
      %p195 = scmp.lt.s32.totalorder %s16, 1
      %s196 = scalar_select %p195, %s16, 1
      %s197 = smul.addr %s196, 32
      %s198 = smul.addr %s197, 4
      %s199 = scalar_lea.vmem %s0, %s198
      %p200 = scmp.lt.s32.totalorder %s16, 1
      %s201 = scalar_select %p200, %s16, 1
      %s202 = smul.addr %s201, 32
      %s203 = smul.addr %s202, 4
      %s204 = scalar_lea.vmem %s3, %s203
      %p205 = scmp.lt.s32.totalorder %s16, 1
      %s206 = scalar_select %p205, %s16, 1
      %s207 = smul.addr %s206, 2
      %s208 = scalar_lea.vmem %s4, %s207
      %v210 = vld [vmem:[%s199] sm:$0xf]
      %v211 = vld [vmem:[%s199 + $0x4] sm:$0xf]
      %v212 = vld [vmem:[%s199 + $0x8] sm:$0xf]
      %v213 = vld [vmem:[%s199 + $0xc] sm:$0xf]
      %v214 = vld [vmem:[%s199 + $0x10] sm:$0xf]
      %v215 = vld [vmem:[%s199 + $0x14] sm:$0xf]
      %v216 = vld [vmem:[%s199 + $0x18] sm:$0xf]
      %v217 = vld [vmem:[%s199 + $0x1c] sm:$0xf]
      %v218 = vld [vmem:[%s199 + $0x20] sm:$0xf]
      %v219 = vld [vmem:[%s199 + $0x24] sm:$0xf]
      %v220 = vld [vmem:[%s199 + $0x28] sm:$0xf]
      %v221 = vld [vmem:[%s199 + $0x2c] sm:$0xf]
      %v222 = vld [vmem:[%s199 + $0x30] sm:$0xf]
      %v223 = vld [vmem:[%s199 + $0x34] sm:$0xf]
      %v224 = vld [vmem:[%s199 + $0x38] sm:$0xf]
      %v225 = vld [vmem:[%s199 + $0x3c] sm:$0xf]
      %v226 = vld [vmem:[%s199 + $0x40] sm:$0xf]
      %v227 = vld [vmem:[%s199 + $0x44] sm:$0xf]
      %v228 = vld [vmem:[%s199 + $0x48] sm:$0xf]
      %v229 = vld [vmem:[%s199 + $0x4c] sm:$0xf]
      %v230 = vld [vmem:[%s199 + $0x50] sm:$0xf]
      %v231 = vld [vmem:[%s199 + $0x54] sm:$0xf]
      %v232 = vld [vmem:[%s199 + $0x58] sm:$0xf]
      %v233 = vld [vmem:[%s199 + $0x5c] sm:$0xf]
      %v234 = vld [vmem:[%s199 + $0x60] sm:$0xf]
      %v235 = vld [vmem:[%s199 + $0x64] sm:$0xf]
      %v236 = vld [vmem:[%s199 + $0x68] sm:$0xf]
      %v237 = vld [vmem:[%s199 + $0x6c] sm:$0xf]
      %v238 = vld [vmem:[%s199 + $0x70] sm:$0xf]
      %v239 = vld [vmem:[%s199 + $0x74] sm:$0xf]
      %v240 = vld [vmem:[%s199 + $0x78] sm:$0xf]
      %v241 = vld [vmem:[%s199 + $0x7c] sm:$0xf]
      %v242 = vunpack.c.l.bf16 %v210
      %v243 = vunpack.c.l.bf16 %v211
      %v244 = vunpack.c.l.bf16 %v212
      %v245 = vunpack.c.l.bf16 %v213
      %v246 = vunpack.c.l.bf16 %v214
      %v247 = vunpack.c.l.bf16 %v215
      %v248 = vunpack.c.l.bf16 %v216
      %v249 = vunpack.c.l.bf16 %v217
      %v250 = vunpack.c.l.bf16 %v218
      %v251 = vunpack.c.l.bf16 %v219
      %v252 = vunpack.c.l.bf16 %v220
      %v253 = vunpack.c.l.bf16 %v221
      %v254 = vunpack.c.l.bf16 %v222
      %v255 = vunpack.c.l.bf16 %v223
      %v256 = vunpack.c.l.bf16 %v224
      %v257 = vunpack.c.l.bf16 %v225
      %v258 = vunpack.c.l.bf16 %v226
      %v259 = vunpack.c.l.bf16 %v227
      %v260 = vunpack.c.l.bf16 %v228
      %v261 = vunpack.c.l.bf16 %v229
      %v262 = vunpack.c.l.bf16 %v230
      %v263 = vunpack.c.l.bf16 %v231
      %v264 = vunpack.c.l.bf16 %v232
      %v265 = vunpack.c.l.bf16 %v233
      %v266 = vunpack.c.l.bf16 %v234
      %v267 = vunpack.c.l.bf16 %v235
      %v268 = vunpack.c.l.bf16 %v236
      %v269 = vunpack.c.l.bf16 %v237
      %v270 = vunpack.c.l.bf16 %v238
      %v271 = vunpack.c.l.bf16 %v239
      %v272 = vunpack.c.l.bf16 %v240
      %v273 = vunpack.c.l.bf16 %v241
      %v274 = vld [vmem:[%s1] sm:$0x1]
      %v275 = vlaneseq
      %v276 = vshrl.u32 %v275, 7
      %v277 = vsub.s32 0, %v276
      %v278 = vrot.slane %v274, %v277
      %v279 = vmul.f32 %v242, %v278
      %v280 = vmul.f32 %v243, %v278
      %v281 = vmul.f32 %v244, %v278
      %v282 = vmul.f32 %v245, %v278
      %v283 = vmul.f32 %v246, %v278
      %v284 = vmul.f32 %v247, %v278
      %v285 = vmul.f32 %v248, %v278
      %v286 = vmul.f32 %v249, %v278
      %v287 = vmul.f32 %v250, %v278
      %v288 = vmul.f32 %v251, %v278
      %v289 = vmul.f32 %v252, %v278
      %v290 = vmul.f32 %v253, %v278
      %v291 = vmul.f32 %v254, %v278
      %v292 = vmul.f32 %v255, %v278
      %v293 = vmul.f32 %v256, %v278
      %v294 = vmul.f32 %v257, %v278
      %v295 = vmul.f32 %v258, %v278
      %v296 = vmul.f32 %v259, %v278
      %v297 = vmul.f32 %v260, %v278
      %v298 = vmul.f32 %v261, %v278
      %v299 = vmul.f32 %v262, %v278
      %v300 = vmul.f32 %v263, %v278
      %v301 = vmul.f32 %v264, %v278
      %v302 = vmul.f32 %v265, %v278
      %v303 = vmul.f32 %v266, %v278
      %v304 = vmul.f32 %v267, %v278
      %v305 = vmul.f32 %v268, %v278
      %v306 = vmul.f32 %v269, %v278
      %v307 = vmul.f32 %v270, %v278
      %v308 = vmul.f32 %v271, %v278
      %v309 = vmul.f32 %v272, %v278
      %v310 = vmul.f32 %v273, %v278
      %v311 = vld [vmem:[%s1 + $0x1] sm:$0x1]
      %v312 = vlaneseq
      %v313 = vshrl.u32 %v312, 7
      %v314 = vsub.s32 0, %v313
      %v315 = vrot.slane %v311, %v314
      %v316 = vadd.f32 %v279, %v315
      %v317 = vadd.f32 %v280, %v315
      %v318 = vadd.f32 %v281, %v315
      %v319 = vadd.f32 %v282, %v315
      %v320 = vadd.f32 %v283, %v315
      %v321 = vadd.f32 %v284, %v315
      %v322 = vadd.f32 %v285, %v315
      %v323 = vadd.f32 %v286, %v315
      %v324 = vadd.f32 %v287, %v315
      %v325 = vadd.f32 %v288, %v315
      %v326 = vadd.f32 %v289, %v315
      %v327 = vadd.f32 %v290, %v315
      %v328 = vadd.f32 %v291, %v315
      %v329 = vadd.f32 %v292, %v315
      %v330 = vadd.f32 %v293, %v315
      %v331 = vadd.f32 %v294, %v315
      %v332 = vadd.f32 %v295, %v315
      %v333 = vadd.f32 %v296, %v315
      %v334 = vadd.f32 %v297, %v315
      %v335 = vadd.f32 %v298, %v315
      %v336 = vadd.f32 %v299, %v315
      %v337 = vadd.f32 %v300, %v315
      %v338 = vadd.f32 %v301, %v315
      %v339 = vadd.f32 %v302, %v315
      %v340 = vadd.f32 %v303, %v315
      %v341 = vadd.f32 %v304, %v315
      %v342 = vadd.f32 %v305, %v315
      %v343 = vadd.f32 %v306, %v315
      %v344 = vadd.f32 %v307, %v315
      %v345 = vadd.f32 %v308, %v315
      %v346 = vadd.f32 %v309, %v315
      %v347 = vadd.f32 %v310, %v315
      %v348 = vmax.f32 %v316, 0.0
      %v349 = vmax.f32 %v317, 0.0
      %v350 = vmax.f32 %v318, 0.0
      %v351 = vmax.f32 %v319, 0.0
      %v352 = vmax.f32 %v320, 0.0
      %v353 = vmax.f32 %v321, 0.0
      %v354 = vmax.f32 %v322, 0.0
      %v355 = vmax.f32 %v323, 0.0
      %v356 = vmax.f32 %v324, 0.0
      %v357 = vmax.f32 %v325, 0.0
      %v358 = vmax.f32 %v326, 0.0
      %v359 = vmax.f32 %v327, 0.0
      %v360 = vmax.f32 %v328, 0.0
      %v361 = vmax.f32 %v329, 0.0
      %v362 = vmax.f32 %v330, 0.0
      %v363 = vmax.f32 %v331, 0.0
      %v364 = vmax.f32 %v332, 0.0
      %v365 = vmax.f32 %v333, 0.0
      %v366 = vmax.f32 %v334, 0.0
      %v367 = vmax.f32 %v335, 0.0
      %v368 = vmax.f32 %v336, 0.0
      %v369 = vmax.f32 %v337, 0.0
      %v370 = vmax.f32 %v338, 0.0
      %v371 = vmax.f32 %v339, 0.0
      %v372 = vmax.f32 %v340, 0.0
      %v373 = vmax.f32 %v341, 0.0
      %v374 = vmax.f32 %v342, 0.0
      %v375 = vmax.f32 %v343, 0.0
      %v376 = vmax.f32 %v344, 0.0
      %v377 = vmax.f32 %v345, 0.0
      %v378 = vmax.f32 %v346, 0.0
      %v379 = vmax.f32 %v347, 0.0
      %vm380 = vcmask 31744
      %381 = vst.msk [vmem:[#allocation2] sm:$0xff] %vm380, 0.0
      %382 = vst.msk [vmem:[#allocation2 + $0x8] sm:$0xff] %vm380, 0.0
      %383 = vst.msk [vmem:[#allocation2 + $0x10] sm:$0xff] %vm380, 0.0
      %384 = vst.msk [vmem:[#allocation2 + $0x18] sm:$0xff] %vm380, 0.0
      %385 = vst.msk [vmem:[#allocation2 + $0x20] sm:$0xff] %vm380, 0.0
      %386 = vst.msk [vmem:[#allocation2 + $0x128] sm:$0xff] %vm380, 0.0
      %387 = vst.msk [vmem:[#allocation2 + $0x130] sm:$0xff] %vm380, 0.0
      %388 = vst.msk [vmem:[#allocation2 + $0x138] sm:$0xff] %vm380, 0.0
      %389 = vst.msk [vmem:[#allocation2 + $0x140] sm:$0xff] %vm380, 0.0
      %390 = vst.msk [vmem:[#allocation2 + $0x148] sm:$0xff] %vm380, 0.0
      %391 = vst.msk [vmem:[#allocation2 + $0x28] sm:$0xff] %vm380, %v348
      %392 = vst.msk [vmem:[#allocation2 + $0x30] sm:$0xff] %vm380, %v349
      %393 = vst.msk [vmem:[#allocation2 + $0x38] sm:$0xff] %vm380, %v350
      %394 = vst.msk [vmem:[#allocation2 + $0x40] sm:$0xff] %vm380, %v351
      %395 = vst.msk [vmem:[#allocation2 + $0x48] sm:$0xff] %vm380, %v352
      %396 = vst.msk [vmem:[#allocation2 + $0x50] sm:$0xff] %vm380, %v353
      %397 = vst.msk [vmem:[#allocation2 + $0x58] sm:$0xff] %vm380, %v354
      %398 = vst.msk [vmem:[#allocation2 + $0x60] sm:$0xff] %vm380, %v355
      %399 = vst.msk [vmem:[#allocation2 + $0x68] sm:$0xff] %vm380, %v356
      %400 = vst.msk [vmem:[#allocation2 + $0x70] sm:$0xff] %vm380, %v357
      %401 = vst.msk [vmem:[#allocation2 + $0x78] sm:$0xff] %vm380, %v358
      %402 = vst.msk [vmem:[#allocation2 + $0x80] sm:$0xff] %vm380, %v359
      %403 = vst.msk [vmem:[#allocation2 + $0x88] sm:$0xff] %vm380, %v360
      %404 = vst.msk [vmem:[#allocation2 + $0x90] sm:$0xff] %vm380, %v361
      %405 = vst.msk [vmem:[#allocation2 + $0x98] sm:$0xff] %vm380, %v362
      %406 = vst.msk [vmem:[#allocation2 + $0xa0] sm:$0xff] %vm380, %v363
      %407 = vst.msk [vmem:[#allocation2 + $0xa8] sm:$0xff] %vm380, %v364
      %408 = vst.msk [vmem:[#allocation2 + $0xb0] sm:$0xff] %vm380, %v365
      %409 = vst.msk [vmem:[#allocation2 + $0xb8] sm:$0xff] %vm380, %v366
      %410 = vst.msk [vmem:[#allocation2 + $0xc0] sm:$0xff] %vm380, %v367
      %411 = vst.msk [vmem:[#allocation2 + $0xc8] sm:$0xff] %vm380, %v368
      %412 = vst.msk [vmem:[#allocation2 + $0xd0] sm:$0xff] %vm380, %v369
      %413 = vst.msk [vmem:[#allocation2 + $0xd8] sm:$0xff] %vm380, %v370
      %414 = vst.msk [vmem:[#allocation2 + $0xe0] sm:$0xff] %vm380, %v371
      %415 = vst.msk [vmem:[#allocation2 + $0xe8] sm:$0xff] %vm380, %v372
      %416 = vst.msk [vmem:[#allocation2 + $0xf0] sm:$0xff] %vm380, %v373
      %417 = vst.msk [vmem:[#allocation2 + $0xf8] sm:$0xff] %vm380, %v374
      %418 = vst.msk [vmem:[#allocation2 + $0x100] sm:$0xff] %vm380, %v375
      %419 = vst.msk [vmem:[#allocation2 + $0x108] sm:$0xff] %vm380, %v376
      %420 = vst.msk [vmem:[#allocation2 + $0x110] sm:$0xff] %vm380, %v377
      %421 = vst.msk [vmem:[#allocation2 + $0x118] sm:$0xff] %vm380, %v378
      %422 = vst.msk [vmem:[#allocation2 + $0x120] sm:$0xff] %vm380, %v379
      %v423 = vlaneseq
      %v424 = vshrl.u32 %v423, 7
      %v425 = vadd.s32 %v424, 8
      %v426 = vadd.s32 %v424, 16
      %v427 = vadd.s32 %v424, 24
      %v428 = vadd.s32 %v424, 32
      %v429 = vadd.s32 %v424, 40
      %v430 = vadd.s32 %v424, 48
      %v431 = vadd.s32 %v424, 56
      %v432 = vadd.s32 %v424, 64
      %v433 = vadd.s32 %v424, 72
      %v434 = vadd.s32 %v424, 80
      %v435 = vadd.s32 %v424, 88
      %v436 = vadd.s32 %v424, 96
      %v437 = vadd.s32 %v424, 104
      %v438 = vadd.s32 %v424, 112
      %v439 = vadd.s32 %v424, 120
      %v440 = vadd.s32 %v424, 128
      %v441 = vadd.s32 %v424, 136
      %v442 = vadd.s32 %v424, 144
      %v443 = vadd.s32 %v424, 152
      %v444 = vadd.s32 %v424, 160
      %v445 = vadd.s32 %v424, 168
      %v446 = vadd.s32 %v424, 176
      %v447 = vadd.s32 %v424, 184
      %v448 = vadd.s32 %v424, 192
      %v449 = vadd.s32 %v424, 200
      %v450 = vadd.s32 %v424, 208
      %v451 = vadd.s32 %v424, 216
      %v452 = vadd.s32 %v424, 224
      %v453 = vadd.s32 %v424, 232
      %v454 = vadd.s32 %v424, 240
      %v455 = vadd.s32 %v424, 248
      %vm456 = vcmp.lt.s32.totalorder %v424, 0
      %v457 = vsub.s32 0, %v424
      %v458 = vsel %vm456, %v457, %v424
      %v459 = vshrl.u32 %v458, 4
      %v460 = vand.u32 %v458, 15
      %v461 = vsub.s32 0, %v460
      %v462 = vsel %vm456, %v461, %v460
      %vm463 = vcmp.lt.s32.totalorder %v425, 0
      %v464 = vsub.s32 0, %v425
      %v465 = vsel %vm463, %v464, %v425
      %v466 = vshrl.u32 %v465, 4
      %v467 = vand.u32 %v465, 15
      %v468 = vsub.s32 0, %v467
      %v469 = vsel %vm463, %v468, %v467
      %vm470 = vcmp.lt.s32.totalorder %v426, 0
      %v471 = vsub.s32 0, %v426
      %v472 = vsel %vm470, %v471, %v426
      %v473 = vshrl.u32 %v472, 4
      %v474 = vand.u32 %v472, 15
      %v475 = vsub.s32 0, %v474
      %v476 = vsel %vm470, %v475, %v474
      %vm477 = vcmp.lt.s32.totalorder %v427, 0
      %v478 = vsub.s32 0, %v427
      %v479 = vsel %vm477, %v478, %v427
      %v480 = vshrl.u32 %v479, 4
      %v481 = vand.u32 %v479, 15
      %v482 = vsub.s32 0, %v481
      %v483 = vsel %vm477, %v482, %v481
      %vm484 = vcmp.lt.s32.totalorder %v428, 0
      %v485 = vsub.s32 0, %v428
      %v486 = vsel %vm484, %v485, %v428
      %v487 = vshrl.u32 %v486, 4
      %v488 = vand.u32 %v486, 15
      %v489 = vsub.s32 0, %v488
      %v490 = vsel %vm484, %v489, %v488
      %vm491 = vcmp.lt.s32.totalorder %v429, 0
      %v492 = vsub.s32 0, %v429
      %v493 = vsel %vm491, %v492, %v429
      %v494 = vshrl.u32 %v493, 4
      %v495 = vand.u32 %v493, 15
      %v496 = vsub.s32 0, %v495
      %v497 = vsel %vm491, %v496, %v495
      %vm498 = vcmp.lt.s32.totalorder %v430, 0
      %v499 = vsub.s32 0, %v430
      %v500 = vsel %vm498, %v499, %v430
      %v501 = vshrl.u32 %v500, 4
      %v502 = vand.u32 %v500, 15
      %v503 = vsub.s32 0, %v502
      %v504 = vsel %vm498, %v503, %v502
      %vm505 = vcmp.lt.s32.totalorder %v431, 0
      %v506 = vsub.s32 0, %v431
      %v507 = vsel %vm505, %v506, %v431
      %v508 = vshrl.u32 %v507, 4
      %v509 = vand.u32 %v507, 15
      %v510 = vsub.s32 0, %v509
      %v511 = vsel %vm505, %v510, %v509
      %vm512 = vcmp.lt.s32.totalorder %v432, 0
      %v513 = vsub.s32 0, %v432
      %v514 = vsel %vm512, %v513, %v432
      %v515 = vshrl.u32 %v514, 4
      %v516 = vand.u32 %v514, 15
      %v517 = vsub.s32 0, %v516
      %v518 = vsel %vm512, %v517, %v516
      %vm519 = vcmp.lt.s32.totalorder %v433, 0
      %v520 = vsub.s32 0, %v433
      %v521 = vsel %vm519, %v520, %v433
      %v522 = vshrl.u32 %v521, 4
      %v523 = vand.u32 %v521, 15
      %v524 = vsub.s32 0, %v523
      %v525 = vsel %vm519, %v524, %v523
      %vm526 = vcmp.lt.s32.totalorder %v434, 0
      %v527 = vsub.s32 0, %v434
      %v528 = vsel %vm526, %v527, %v434
      %v529 = vshrl.u32 %v528, 4
      %v530 = vand.u32 %v528, 15
      %v531 = vsub.s32 0, %v530
      %v532 = vsel %vm526, %v531, %v530
      %vm533 = vcmp.lt.s32.totalorder %v435, 0
      %v534 = vsub.s32 0, %v435
      %v535 = vsel %vm533, %v534, %v435
      %v536 = vshrl.u32 %v535, 4
      %v537 = vand.u32 %v535, 15
      %v538 = vsub.s32 0, %v537
      %v539 = vsel %vm533, %v538, %v537
      %vm540 = vcmp.lt.s32.totalorder %v436, 0
      %v541 = vsub.s32 0, %v436
      %v542 = vsel %vm540, %v541, %v436
      %v543 = vshrl.u32 %v542, 4
      %v544 = vand.u32 %v542, 15
      %v545 = vsub.s32 0, %v544
      %v546 = vsel %vm540, %v545, %v544
      %vm547 = vcmp.lt.s32.totalorder %v437, 0
      %v548 = vsub.s32 0, %v437
      %v549 = vsel %vm547, %v548, %v437
      %v550 = vshrl.u32 %v549, 4
      %v551 = vand.u32 %v549, 15
      %v552 = vsub.s32 0, %v551
      %v553 = vsel %vm547, %v552, %v551
      %vm554 = vcmp.lt.s32.totalorder %v438, 0
      %v555 = vsub.s32 0, %v438
      %v556 = vsel %vm554, %v555, %v438
      %v557 = vshrl.u32 %v556, 4
      %v558 = vand.u32 %v556, 15
      %v559 = vsub.s32 0, %v558
      %v560 = vsel %vm554, %v559, %v558
      %vm561 = vcmp.lt.s32.totalorder %v439, 0
      %v562 = vsub.s32 0, %v439
      %v563 = vsel %vm561, %v562, %v439
      %v564 = vshrl.u32 %v563, 4
      %v565 = vand.u32 %v563, 15
      %v566 = vsub.s32 0, %v565
      %v567 = vsel %vm561, %v566, %v565
      %vm568 = vcmp.lt.s32.totalorder %v440, 0
      %v569 = vsub.s32 0, %v440
      %v570 = vsel %vm568, %v569, %v440
      %v571 = vshrl.u32 %v570, 4
      %v572 = vand.u32 %v570, 15
      %v573 = vsub.s32 0, %v572
      %v574 = vsel %vm568, %v573, %v572
      %vm575 = vcmp.lt.s32.totalorder %v441, 0
      %v576 = vsub.s32 0, %v441
      %v577 = vsel %vm575, %v576, %v441
      %v578 = vshrl.u32 %v577, 4
      %v579 = vand.u32 %v577, 15
      %v580 = vsub.s32 0, %v579
      %v581 = vsel %vm575, %v580, %v579
      %vm582 = vcmp.lt.s32.totalorder %v442, 0
      %v583 = vsub.s32 0, %v442
      %v584 = vsel %vm582, %v583, %v442
      %v585 = vshrl.u32 %v584, 4
      %v586 = vand.u32 %v584, 15
      %v587 = vsub.s32 0, %v586
      %v588 = vsel %vm582, %v587, %v586
      %vm589 = vcmp.lt.s32.totalorder %v443, 0
      %v590 = vsub.s32 0, %v443
      %v591 = vsel %vm589, %v590, %v443
      %v592 = vshrl.u32 %v591, 4
      %v593 = vand.u32 %v591, 15
      %v594 = vsub.s32 0, %v593
      %v595 = vsel %vm589, %v594, %v593
      %vm596 = vcmp.lt.s32.totalorder %v444, 0
      %v597 = vsub.s32 0, %v444
      %v598 = vsel %vm596, %v597, %v444
      %v599 = vshrl.u32 %v598, 4
      %v600 = vand.u32 %v598, 15
      %v601 = vsub.s32 0, %v600
      %v602 = vsel %vm596, %v601, %v600
      %vm603 = vcmp.lt.s32.totalorder %v445, 0
      %v604 = vsub.s32 0, %v445
      %v605 = vsel %vm603, %v604, %v445
      %v606 = vshrl.u32 %v605, 4
      %v607 = vand.u32 %v605, 15
      %v608 = vsub.s32 0, %v607
      %v609 = vsel %vm603, %v608, %v607
      %vm610 = vcmp.lt.s32.totalorder %v446, 0
      %v611 = vsub.s32 0, %v446
      %v612 = vsel %vm610, %v611, %v446
      %v613 = vshrl.u32 %v612, 4
      %v614 = vand.u32 %v612, 15
      %v615 = vsub.s32 0, %v614
      %v616 = vsel %vm610, %v615, %v614
      %vm617 = vcmp.lt.s32.totalorder %v447, 0
      %v618 = vsub.s32 0, %v447
      %v619 = vsel %vm617, %v618, %v447
      %v620 = vshrl.u32 %v619, 4
      %v621 = vand.u32 %v619, 15
      %v622 = vsub.s32 0, %v621
      %v623 = vsel %vm617, %v622, %v621
      %vm624 = vcmp.lt.s32.totalorder %v448, 0
      %v625 = vsub.s32 0, %v448
      %v626 = vsel %vm624, %v625, %v448
      %v627 = vshrl.u32 %v626, 4
      %v628 = vand.u32 %v626, 15
      %v629 = vsub.s32 0, %v628
      %v630 = vsel %vm624, %v629, %v628
      %vm631 = vcmp.lt.s32.totalorder %v449, 0
      %v632 = vsub.s32 0, %v449
      %v633 = vsel %vm631, %v632, %v449
      %v634 = vshrl.u32 %v633, 4
      %v635 = vand.u32 %v633, 15
      %v636 = vsub.s32 0, %v635
      %v637 = vsel %vm631, %v636, %v635
      %vm638 = vcmp.lt.s32.totalorder %v450, 0
      %v639 = vsub.s32 0, %v450
      %v640 = vsel %vm638, %v639, %v450
      %v641 = vshrl.u32 %v640, 4
      %v642 = vand.u32 %v640, 15
      %v643 = vsub.s32 0, %v642
      %v644 = vsel %vm638, %v643, %v642
      %vm645 = vcmp.lt.s32.totalorder %v451, 0
      %v646 = vsub.s32 0, %v451
      %v647 = vsel %vm645, %v646, %v451
      %v648 = vshrl.u32 %v647, 4
      %v649 = vand.u32 %v647, 15
      %v650 = vsub.s32 0, %v649
      %v651 = vsel %vm645, %v650, %v649
      %vm652 = vcmp.lt.s32.totalorder %v452, 0
      %v653 = vsub.s32 0, %v452
      %v654 = vsel %vm652, %v653, %v452
      %v655 = vshrl.u32 %v654, 4
      %v656 = vand.u32 %v654, 15
      %v657 = vsub.s32 0, %v656
      %v658 = vsel %vm652, %v657, %v656
      %vm659 = vcmp.lt.s32.totalorder %v453, 0
      %v660 = vsub.s32 0, %v453
      %v661 = vsel %vm659, %v660, %v453
      %v662 = vshrl.u32 %v661, 4
      %v663 = vand.u32 %v661, 15
      %v664 = vsub.s32 0, %v663
      %v665 = vsel %vm659, %v664, %v663
      %vm666 = vcmp.lt.s32.totalorder %v454, 0
      %v667 = vsub.s32 0, %v454
      %v668 = vsel %vm666, %v667, %v454
      %v669 = vshrl.u32 %v668, 4
      %v670 = vand.u32 %v668, 15
      %v671 = vsub.s32 0, %v670
      %v672 = vsel %vm666, %v671, %v670
      %vm673 = vcmp.lt.s32.totalorder %v455, 0
      %v674 = vsub.s32 0, %v455
      %v675 = vsel %vm673, %v674, %v455
      %v676 = vshrl.u32 %v675, 4
      %v677 = vand.u32 %v675, 15
      %v678 = vsub.s32 0, %v677
      %v679 = vsel %vm673, %v678, %v677
      %vm680 = vcmp.ne.s32.totalorder %v462, 0
      %vm681 = vcmp.ne.s32.totalorder %v469, 0
      %vm682 = vcmp.ne.s32.totalorder %v476, 0
      %vm683 = vcmp.ne.s32.totalorder %v483, 0
      %vm684 = vcmp.ne.s32.totalorder %v490, 0
      %vm685 = vcmp.ne.s32.totalorder %v497, 0
      %vm686 = vcmp.ne.s32.totalorder %v504, 0
      %vm687 = vcmp.ne.s32.totalorder %v511, 0
      %vm688 = vcmp.ne.s32.totalorder %v518, 0
      %vm689 = vcmp.ne.s32.totalorder %v525, 0
      %vm690 = vcmp.ne.s32.totalorder %v532, 0
      %vm691 = vcmp.ne.s32.totalorder %v539, 0
      %vm692 = vcmp.ne.s32.totalorder %v546, 0
      %vm693 = vcmp.ne.s32.totalorder %v553, 0
      %vm694 = vcmp.ne.s32.totalorder %v560, 0
      %vm695 = vcmp.ne.s32.totalorder %v567, 0
      %vm696 = vcmp.ne.s32.totalorder %v574, 0
      %vm697 = vcmp.ne.s32.totalorder %v581, 0
      %vm698 = vcmp.ne.s32.totalorder %v588, 0
      %vm699 = vcmp.ne.s32.totalorder %v595, 0
      %vm700 = vcmp.ne.s32.totalorder %v602, 0
      %vm701 = vcmp.ne.s32.totalorder %v609, 0
      %vm702 = vcmp.ne.s32.totalorder %v616, 0
      %vm703 = vcmp.ne.s32.totalorder %v623, 0
      %vm704 = vcmp.ne.s32.totalorder %v630, 0
      %vm705 = vcmp.ne.s32.totalorder %v637, 0
      %vm706 = vcmp.ne.s32.totalorder %v644, 0
      %vm707 = vcmp.ne.s32.totalorder %v651, 0
      %vm708 = vcmp.ne.s32.totalorder %v658, 0
      %vm709 = vcmp.ne.s32.totalorder %v665, 0
      %vm710 = vcmp.ne.s32.totalorder %v672, 0
      %vm711 = vcmp.ne.s32.totalorder %v679, 0
      %vm712 = vcmp.lt.s32.totalorder %v462, 0
      %vm713 = vcmp.lt.s32.totalorder %v469, 0
      %vm714 = vcmp.lt.s32.totalorder %v476, 0
      %vm715 = vcmp.lt.s32.totalorder %v483, 0
      %vm716 = vcmp.lt.s32.totalorder %v490, 0
      %vm717 = vcmp.lt.s32.totalorder %v497, 0
      %vm718 = vcmp.lt.s32.totalorder %v504, 0
      %vm719 = vcmp.lt.s32.totalorder %v511, 0
      %vm720 = vcmp.lt.s32.totalorder %v518, 0
      %vm721 = vcmp.lt.s32.totalorder %v525, 0
      %vm722 = vcmp.lt.s32.totalorder %v532, 0
      %vm723 = vcmp.lt.s32.totalorder %v539, 0
      %vm724 = vcmp.lt.s32.totalorder %v546, 0
      %vm725 = vcmp.lt.s32.totalorder %v553, 0
      %vm726 = vcmp.lt.s32.totalorder %v560, 0
      %vm727 = vcmp.lt.s32.totalorder %v567, 0
      %vm728 = vcmp.lt.s32.totalorder %v574, 0
      %vm729 = vcmp.lt.s32.totalorder %v581, 0
      %vm730 = vcmp.lt.s32.totalorder %v588, 0
      %vm731 = vcmp.lt.s32.totalorder %v595, 0
      %vm732 = vcmp.lt.s32.totalorder %v602, 0
      %vm733 = vcmp.lt.s32.totalorder %v609, 0
      %vm734 = vcmp.lt.s32.totalorder %v616, 0
      %vm735 = vcmp.lt.s32.totalorder %v623, 0
      %vm736 = vcmp.lt.s32.totalorder %v630, 0
      %vm737 = vcmp.lt.s32.totalorder %v637, 0
      %vm738 = vcmp.lt.s32.totalorder %v644, 0
      %vm739 = vcmp.lt.s32.totalorder %v651, 0
      %vm740 = vcmp.lt.s32.totalorder %v658, 0
      %vm741 = vcmp.lt.s32.totalorder %v665, 0
      %vm742 = vcmp.lt.s32.totalorder %v672, 0
      %vm743 = vcmp.lt.s32.totalorder %v679, 0
      %vm744 = vmand %vm712, %vm680
      %vm745 = vmand %vm713, %vm681
      %vm746 = vmand %vm714, %vm682
      %vm747 = vmand %vm715, %vm683
      %vm748 = vmand %vm716, %vm684
      %vm749 = vmand %vm717, %vm685
      %vm750 = vmand %vm718, %vm686
      %vm751 = vmand %vm719, %vm687
      %vm752 = vmand %vm720, %vm688
      %vm753 = vmand %vm721, %vm689
      %vm754 = vmand %vm722, %vm690
      %vm755 = vmand %vm723, %vm691
      %vm756 = vmand %vm724, %vm692
      %vm757 = vmand %vm725, %vm693
      %vm758 = vmand %vm726, %vm694
      %vm759 = vmand %vm727, %vm695
      %vm760 = vmand %vm728, %vm696
      %vm761 = vmand %vm729, %vm697
      %vm762 = vmand %vm730, %vm698
      %vm763 = vmand %vm731, %vm699
      %vm764 = vmand %vm732, %vm700
      %vm765 = vmand %vm733, %vm701
      %vm766 = vmand %vm734, %vm702
      %vm767 = vmand %vm735, %vm703
      %vm768 = vmand %vm736, %vm704
      %vm769 = vmand %vm737, %vm705
      %vm770 = vmand %vm738, %vm706
      %vm771 = vmand %vm739, %vm707
      %vm772 = vmand %vm740, %vm708
      %vm773 = vmand %vm741, %vm709
      %vm774 = vmand %vm742, %vm710
      %vm775 = vmand %vm743, %vm711
      %v776 = vadd.s32 %v462, 16
      %v777 = vadd.s32 %v469, 16
      %v778 = vadd.s32 %v476, 16
      %v779 = vadd.s32 %v483, 16
      %v780 = vadd.s32 %v490, 16
      %v781 = vadd.s32 %v497, 16
      %v782 = vadd.s32 %v504, 16
      %v783 = vadd.s32 %v511, 16
      %v784 = vadd.s32 %v518, 16
      %v785 = vadd.s32 %v525, 16
      %v786 = vadd.s32 %v532, 16
      %v787 = vadd.s32 %v539, 16
      %v788 = vadd.s32 %v546, 16
      %v789 = vadd.s32 %v553, 16
      %v790 = vadd.s32 %v560, 16
      %v791 = vadd.s32 %v567, 16
      %v792 = vadd.s32 %v574, 16
      %v793 = vadd.s32 %v581, 16
      %v794 = vadd.s32 %v588, 16
      %v795 = vadd.s32 %v595, 16
      %v796 = vadd.s32 %v602, 16
      %v797 = vadd.s32 %v609, 16
      %v798 = vadd.s32 %v616, 16
      %v799 = vadd.s32 %v623, 16
      %v800 = vadd.s32 %v630, 16
      %v801 = vadd.s32 %v637, 16
      %v802 = vadd.s32 %v644, 16
      %v803 = vadd.s32 %v651, 16
      %v804 = vadd.s32 %v658, 16
      %v805 = vadd.s32 %v665, 16
      %v806 = vadd.s32 %v672, 16
      %v807 = vadd.s32 %v679, 16
      %v808 = vsel %vm744, %v776, %v462
      %v809 = vsel %vm745, %v777, %v469
      %v810 = vsel %vm746, %v778, %v476
      %v811 = vsel %vm747, %v779, %v483
      %v812 = vsel %vm748, %v780, %v490
      %v813 = vsel %vm749, %v781, %v497
      %v814 = vsel %vm750, %v782, %v504
      %v815 = vsel %vm751, %v783, %v511
      %v816 = vsel %vm752, %v784, %v518
      %v817 = vsel %vm753, %v785, %v525
      %v818 = vsel %vm754, %v786, %v532
      %v819 = vsel %vm755, %v787, %v539
      %v820 = vsel %vm756, %v788, %v546
      %v821 = vsel %vm757, %v789, %v553
      %v822 = vsel %vm758, %v790, %v560
      %v823 = vsel %vm759, %v791, %v567
      %v824 = vsel %vm760, %v792, %v574
      %v825 = vsel %vm761, %v793, %v581
      %v826 = vsel %vm762, %v794, %v588
      %v827 = vsel %vm763, %v795, %v595
      %v828 = vsel %vm764, %v796, %v602
      %v829 = vsel %vm765, %v797, %v609
      %v830 = vsel %vm766, %v798, %v616
      %v831 = vsel %vm767, %v799, %v623
      %v832 = vsel %vm768, %v800, %v630
      %v833 = vsel %vm769, %v801, %v637
      %v834 = vsel %vm770, %v802, %v644
      %v835 = vsel %vm771, %v803, %v651
      %v836 = vsel %vm772, %v804, %v658
      %v837 = vsel %vm773, %v805, %v665
      %v838 = vsel %vm774, %v806, %v672
      %v839 = vsel %vm775, %v807, %v679
      %v840 = vld [vmem:[#allocation2 + $0x6] sm:$0xff]
      %v841 = vld [vmem:[#allocation2 + $0xe] sm:$0xff]
      %v842 = vld [vmem:[#allocation2 + $0x16] sm:$0xff]
      %v843 = vld [vmem:[#allocation2 + $0x1e] sm:$0xff]
      %v844 = vld [vmem:[#allocation2 + $0x26] sm:$0xff]
      %v845 = vld [vmem:[#allocation2 + $0x2e] sm:$0xff]
      %v846 = vld [vmem:[#allocation2 + $0x36] sm:$0xff]
      %v847 = vld [vmem:[#allocation2 + $0x3e] sm:$0xff]
      %v848 = vld [vmem:[#allocation2 + $0x46] sm:$0xff]
      %v849 = vld [vmem:[#allocation2 + $0x4e] sm:$0xff]
      %v850 = vld [vmem:[#allocation2 + $0x56] sm:$0xff]
      %v851 = vld [vmem:[#allocation2 + $0x5e] sm:$0xff]
      %v852 = vld [vmem:[#allocation2 + $0x66] sm:$0xff]
      %v853 = vld [vmem:[#allocation2 + $0x6e] sm:$0xff]
      %v854 = vld [vmem:[#allocation2 + $0x76] sm:$0xff]
      %v855 = vld [vmem:[#allocation2 + $0x7e] sm:$0xff]
      %v856 = vld [vmem:[#allocation2 + $0x86] sm:$0xff]
      %v857 = vld [vmem:[#allocation2 + $0x8e] sm:$0xff]
      %v858 = vld [vmem:[#allocation2 + $0x96] sm:$0xff]
      %v859 = vld [vmem:[#allocation2 + $0x9e] sm:$0xff]
      %v860 = vld [vmem:[#allocation2 + $0xa6] sm:$0xff]
      %v861 = vld [vmem:[#allocation2 + $0xae] sm:$0xff]
      %v862 = vld [vmem:[#allocation2 + $0xb6] sm:$0xff]
      %v863 = vld [vmem:[#allocation2 + $0xbe] sm:$0xff]
      %v864 = vld [vmem:[#allocation2 + $0xc6] sm:$0xff]
      %v865 = vld [vmem:[#allocation2 + $0xce] sm:$0xff]
      %v866 = vld [vmem:[#allocation2 + $0xd6] sm:$0xff]
      %v867 = vld [vmem:[#allocation2 + $0xde] sm:$0xff]
      %v868 = vld [vmem:[#allocation2 + $0xe6] sm:$0xff]
      %v869 = vld [vmem:[#allocation2 + $0xee] sm:$0xff]
      %v870 = vld [vmem:[#allocation2 + $0xf6] sm:$0xff]
      %v871 = vld [vmem:[#allocation2 + $0xfe] sm:$0xff]
      %vm872 = vcmp.ge.s32.totalorder %v808, 2
      %vm873 = vcmp.ge.s32.totalorder %v809, 2
      %vm874 = vcmp.ge.s32.totalorder %v810, 2
      %vm875 = vcmp.ge.s32.totalorder %v811, 2
      %vm876 = vcmp.ge.s32.totalorder %v812, 2
      %vm877 = vcmp.ge.s32.totalorder %v813, 2
      %vm878 = vcmp.ge.s32.totalorder %v814, 2
      %vm879 = vcmp.ge.s32.totalorder %v815, 2
      %vm880 = vcmp.ge.s32.totalorder %v816, 2
      %vm881 = vcmp.ge.s32.totalorder %v817, 2
      %vm882 = vcmp.ge.s32.totalorder %v818, 2
      %vm883 = vcmp.ge.s32.totalorder %v819, 2
      %vm884 = vcmp.ge.s32.totalorder %v820, 2
      %vm885 = vcmp.ge.s32.totalorder %v821, 2
      %vm886 = vcmp.ge.s32.totalorder %v822, 2
      %vm887 = vcmp.ge.s32.totalorder %v823, 2
      %vm888 = vcmp.ge.s32.totalorder %v824, 2
      %vm889 = vcmp.ge.s32.totalorder %v825, 2
      %vm890 = vcmp.ge.s32.totalorder %v826, 2
      %vm891 = vcmp.ge.s32.totalorder %v827, 2
      %vm892 = vcmp.ge.s32.totalorder %v828, 2
      %vm893 = vcmp.ge.s32.totalorder %v829, 2
      %vm894 = vcmp.ge.s32.totalorder %v830, 2
      %vm895 = vcmp.ge.s32.totalorder %v831, 2
      %vm896 = vcmp.ge.s32.totalorder %v832, 2
      %vm897 = vcmp.ge.s32.totalorder %v833, 2
      %vm898 = vcmp.ge.s32.totalorder %v834, 2
      %vm899 = vcmp.ge.s32.totalorder %v835, 2
      %vm900 = vcmp.ge.s32.totalorder %v836, 2
      %vm901 = vcmp.ge.s32.totalorder %v837, 2
      %vm902 = vcmp.ge.s32.totalorder %v838, 2
      %vm903 = vcmp.ge.s32.totalorder %v839, 2
      %v904 = vsel %vm872, 1, 0
      %v905 = vsel %vm873, 1, 0
      %v906 = vsel %vm874, 1, 0
      %v907 = vsel %vm875, 1, 0
      %v908 = vsel %vm876, 1, 0
      %v909 = vsel %vm877, 1, 0
      %v910 = vsel %vm878, 1, 0
      %v911 = vsel %vm879, 1, 0
      %v912 = vsel %vm880, 1, 0
      %v913 = vsel %vm881, 1, 0
      %v914 = vsel %vm882, 1, 0
      %v915 = vsel %vm883, 1, 0
      %v916 = vsel %vm884, 1, 0
      %v917 = vsel %vm885, 1, 0
      %v918 = vsel %vm886, 1, 0
      %v919 = vsel %vm887, 1, 0
      %v920 = vsel %vm888, 1, 0
      %v921 = vsel %vm889, 1, 0
      %v922 = vsel %vm890, 1, 0
      %v923 = vsel %vm891, 1, 0
      %v924 = vsel %vm892, 1, 0
      %v925 = vsel %vm893, 1, 0
      %v926 = vsel %vm894, 1, 0
      %v927 = vsel %vm895, 1, 0
      %v928 = vsel %vm896, 1, 0
      %v929 = vsel %vm897, 1, 0
      %v930 = vsel %vm898, 1, 0
      %v931 = vsel %vm899, 1, 0
      %v932 = vsel %vm900, 1, 0
      %v933 = vsel %vm901, 1, 0
      %v934 = vsel %vm902, 1, 0
      %v935 = vsel %vm903, 1, 0
      %vm936 = vcmp.eq.s32.totalorder %v904, 1
      %vm937 = vcmp.eq.s32.totalorder %v905, 1
      %vm938 = vcmp.eq.s32.totalorder %v906, 1
      %vm939 = vcmp.eq.s32.totalorder %v907, 1
      %vm940 = vcmp.eq.s32.totalorder %v908, 1
      %vm941 = vcmp.eq.s32.totalorder %v909, 1
      %vm942 = vcmp.eq.s32.totalorder %v910, 1
      %vm943 = vcmp.eq.s32.totalorder %v911, 1
      %vm944 = vcmp.eq.s32.totalorder %v912, 1
      %vm945 = vcmp.eq.s32.totalorder %v913, 1
      %vm946 = vcmp.eq.s32.totalorder %v914, 1
      %vm947 = vcmp.eq.s32.totalorder %v915, 1
      %vm948 = vcmp.eq.s32.totalorder %v916, 1
      %vm949 = vcmp.eq.s32.totalorder %v917, 1
      %vm950 = vcmp.eq.s32.totalorder %v918, 1
      %vm951 = vcmp.eq.s32.totalorder %v919, 1
      %vm952 = vcmp.eq.s32.totalorder %v920, 1
      %vm953 = vcmp.eq.s32.totalorder %v921, 1
      %vm954 = vcmp.eq.s32.totalorder %v922, 1
      %vm955 = vcmp.eq.s32.totalorder %v923, 1
      %vm956 = vcmp.eq.s32.totalorder %v924, 1
      %vm957 = vcmp.eq.s32.totalorder %v925, 1
      %vm958 = vcmp.eq.s32.totalorder %v926, 1
      %vm959 = vcmp.eq.s32.totalorder %v927, 1
      %vm960 = vcmp.eq.s32.totalorder %v928, 1
      %vm961 = vcmp.eq.s32.totalorder %v929, 1
      %vm962 = vcmp.eq.s32.totalorder %v930, 1
      %vm963 = vcmp.eq.s32.totalorder %v931, 1
      %vm964 = vcmp.eq.s32.totalorder %v932, 1
      %vm965 = vcmp.eq.s32.totalorder %v933, 1
      %vm966 = vcmp.eq.s32.totalorder %v934, 1
      %vm967 = vcmp.eq.s32.totalorder %v935, 1
      %v968 = vsel %vm936, %v840, 0.0
      %v969 = vsel %vm937, %v841, 0.0
      %v970 = vsel %vm938, %v842, 0.0
      %v971 = vsel %vm939, %v843, 0.0
      %v972 = vsel %vm940, %v844, 0.0
      %v973 = vsel %vm941, %v845, 0.0
      %v974 = vsel %vm942, %v846, 0.0
      %v975 = vsel %vm943, %v847, 0.0
      %v976 = vsel %vm944, %v848, 0.0
      %v977 = vsel %vm945, %v849, 0.0
      %v978 = vsel %vm946, %v850, 0.0
      %v979 = vsel %vm947, %v851, 0.0
      %v980 = vsel %vm948, %v852, 0.0
      %v981 = vsel %vm949, %v853, 0.0
      %v982 = vsel %vm950, %v854, 0.0
      %v983 = vsel %vm951, %v855, 0.0
      %v984 = vsel %vm952, %v856, 0.0
      %v985 = vsel %vm953, %v857, 0.0
      %v986 = vsel %vm954, %v858, 0.0
      %v987 = vsel %vm955, %v859, 0.0
      %v988 = vsel %vm956, %v860, 0.0
      %v989 = vsel %vm957, %v861, 0.0
      %v990 = vsel %vm958, %v862, 0.0
      %v991 = vsel %vm959, %v863, 0.0
      %v992 = vsel %vm960, %v864, 0.0
      %v993 = vsel %vm961, %v865, 0.0
      %v994 = vsel %vm962, %v866, 0.0
      %v995 = vsel %vm963, %v867, 0.0
      %v996 = vsel %vm964, %v868, 0.0
      %v997 = vsel %vm965, %v869, 0.0
      %v998 = vsel %vm966, %v870, 0.0
      %v999 = vsel %vm967, %v871, 0.0
      %v1000 = vld [vmem:[#allocation2 + $0x8] sm:$0xff]
      %v1001 = vld [vmem:[#allocation2 + $0x10] sm:$0xff]
      %v1002 = vld [vmem:[#allocation2 + $0x18] sm:$0xff]
      %v1003 = vld [vmem:[#allocation2 + $0x20] sm:$0xff]
      %v1004 = vld [vmem:[#allocation2 + $0x28] sm:$0xff]
      %v1005 = vld [vmem:[#allocation2 + $0x30] sm:$0xff]
      %v1006 = vld [vmem:[#allocation2 + $0x38] sm:$0xff]
      %v1007 = vld [vmem:[#allocation2 + $0x40] sm:$0xff]
      %v1008 = vld [vmem:[#allocation2 + $0x48] sm:$0xff]
      %v1009 = vld [vmem:[#allocation2 + $0x50] sm:$0xff]
      %v1010 = vld [vmem:[#allocation2 + $0x58] sm:$0xff]
      %v1011 = vld [vmem:[#allocation2 + $0x60] sm:$0xff]
      %v1012 = vld [vmem:[#allocation2 + $0x68] sm:$0xff]
      %v1013 = vld [vmem:[#allocation2 + $0x70] sm:$0xff]
      %v1014 = vld [vmem:[#allocation2 + $0x78] sm:$0xff]
      %v1015 = vld [vmem:[#allocation2 + $0x80] sm:$0xff]
      %v1016 = vld [vmem:[#allocation2 + $0x88] sm:$0xff]
      %v1017 = vld [vmem:[#allocation2 + $0x90] sm:$0xff]
      %v1018 = vld [vmem:[#allocation2 + $0x98] sm:$0xff]
      %v1019 = vld [vmem:[#allocation2 + $0xa0] sm:$0xff]
      %v1020 = vld [vmem:[#allocation2 + $0xa8] sm:$0xff]
      %v1021 = vld [vmem:[#allocation2 + $0xb0] sm:$0xff]
      %v1022 = vld [vmem:[#allocation2 + $0xb8] sm:$0xff]
      %v1023 = vld [vmem:[#allocation2 + $0xc0] sm:$0xff]
      %v1024 = vld [vmem:[#allocation2 + $0xc8] sm:$0xff]
      %v1025 = vld [vmem:[#allocation2 + $0xd0] sm:$0xff]
      %v1026 = vld [vmem:[#allocation2 + $0xd8] sm:$0xff]
      %v1027 = vld [vmem:[#allocation2 + $0xe0] sm:$0xff]
      %v1028 = vld [vmem:[#allocation2 + $0xe8] sm:$0xff]
      %v1029 = vld [vmem:[#allocation2 + $0xf0] sm:$0xff]
      %v1030 = vld [vmem:[#allocation2 + $0xf8] sm:$0xff]
      %v1031 = vld [vmem:[#allocation2 + $0x100] sm:$0xff]
      %v1032 = vld [vmem:[#allocation2 + $0xa] sm:$0xff]
      %v1033 = vld [vmem:[#allocation2 + $0x12] sm:$0xff]
      %v1034 = vld [vmem:[#allocation2 + $0x1a] sm:$0xff]
      %v1035 = vld [vmem:[#allocation2 + $0x22] sm:$0xff]
      %v1036 = vld [vmem:[#allocation2 + $0x2a] sm:$0xff]
      %v1037 = vld [vmem:[#allocation2 + $0x32] sm:$0xff]
      %v1038 = vld [vmem:[#allocation2 + $0x3a] sm:$0xff]
      %v1039 = vld [vmem:[#allocation2 + $0x42] sm:$0xff]
      %v1040 = vld [vmem:[#allocation2 + $0x4a] sm:$0xff]
      %v1041 = vld [vmem:[#allocation2 + $0x52] sm:$0xff]
      %v1042 = vld [vmem:[#allocation2 + $0x5a] sm:$0xff]
      %v1043 = vld [vmem:[#allocation2 + $0x62] sm:$0xff]
      %v1044 = vld [vmem:[#allocation2 + $0x6a] sm:$0xff]
      %v1045 = vld [vmem:[#allocation2 + $0x72] sm:$0xff]
      %v1046 = vld [vmem:[#allocation2 + $0x7a] sm:$0xff]
      %v1047 = vld [vmem:[#allocation2 + $0x82] sm:$0xff]
      %v1048 = vld [vmem:[#allocation2 + $0x8a] sm:$0xff]
      %v1049 = vld [vmem:[#allocation2 + $0x92] sm:$0xff]
      %v1050 = vld [vmem:[#allocation2 + $0x9a] sm:$0xff]
      %v1051 = vld [vmem:[#allocation2 + $0xa2] sm:$0xff]
      %v1052 = vld [vmem:[#allocation2 + $0xaa] sm:$0xff]
      %v1053 = vld [vmem:[#allocation2 + $0xb2] sm:$0xff]
      %v1054 = vld [vmem:[#allocation2 + $0xba] sm:$0xff]
      %v1055 = vld [vmem:[#allocation2 + $0xc2] sm:$0xff]
      %v1056 = vld [vmem:[#allocation2 + $0xca] sm:$0xff]
      %v1057 = vld [vmem:[#allocation2 + $0xd2] sm:$0xff]
      %v1058 = vld [vmem:[#allocation2 + $0xda] sm:$0xff]
      %v1059 = vld [vmem:[#allocation2 + $0xe2] sm:$0xff]
      %v1060 = vld [vmem:[#allocation2 + $0xea] sm:$0xff]
      %v1061 = vld [vmem:[#allocation2 + $0xf2] sm:$0xff]
      %v1062 = vld [vmem:[#allocation2 + $0xfa] sm:$0xff]
      %v1063 = vld [vmem:[#allocation2 + $0x102] sm:$0xff]
      %vm1064 = vcmp.lt.s32.totalorder %v808, 14
      %vm1065 = vcmp.lt.s32.totalorder %v809, 14
      %vm1066 = vcmp.lt.s32.totalorder %v810, 14
      %vm1067 = vcmp.lt.s32.totalorder %v811, 14
      %vm1068 = vcmp.lt.s32.totalorder %v812, 14
      %vm1069 = vcmp.lt.s32.totalorder %v813, 14
      %vm1070 = vcmp.lt.s32.totalorder %v814, 14
      %vm1071 = vcmp.lt.s32.totalorder %v815, 14
      %vm1072 = vcmp.lt.s32.totalorder %v816, 14
      %vm1073 = vcmp.lt.s32.totalorder %v817, 14
      %vm1074 = vcmp.lt.s32.totalorder %v818, 14
      %vm1075 = vcmp.lt.s32.totalorder %v819, 14
      %vm1076 = vcmp.lt.s32.totalorder %v820, 14
      %vm1077 = vcmp.lt.s32.totalorder %v821, 14
      %vm1078 = vcmp.lt.s32.totalorder %v822, 14
      %vm1079 = vcmp.lt.s32.totalorder %v823, 14
      %vm1080 = vcmp.lt.s32.totalorder %v824, 14
      %vm1081 = vcmp.lt.s32.totalorder %v825, 14
      %vm1082 = vcmp.lt.s32.totalorder %v826, 14
      %vm1083 = vcmp.lt.s32.totalorder %v827, 14
      %vm1084 = vcmp.lt.s32.totalorder %v828, 14
      %vm1085 = vcmp.lt.s32.totalorder %v829, 14
      %vm1086 = vcmp.lt.s32.totalorder %v830, 14
      %vm1087 = vcmp.lt.s32.totalorder %v831, 14
      %vm1088 = vcmp.lt.s32.totalorder %v832, 14
      %vm1089 = vcmp.lt.s32.totalorder %v833, 14
      %vm1090 = vcmp.lt.s32.totalorder %v834, 14
      %vm1091 = vcmp.lt.s32.totalorder %v835, 14
      %vm1092 = vcmp.lt.s32.totalorder %v836, 14
      %vm1093 = vcmp.lt.s32.totalorder %v837, 14
      %vm1094 = vcmp.lt.s32.totalorder %v838, 14
      %vm1095 = vcmp.lt.s32.totalorder %v839, 14
      %v1096 = vsel %vm1064, 1, 0
      %v1097 = vsel %vm1065, 1, 0
      %v1098 = vsel %vm1066, 1, 0
      %v1099 = vsel %vm1067, 1, 0
      %v1100 = vsel %vm1068, 1, 0
      %v1101 = vsel %vm1069, 1, 0
      %v1102 = vsel %vm1070, 1, 0
      %v1103 = vsel %vm1071, 1, 0
      %v1104 = vsel %vm1072, 1, 0
      %v1105 = vsel %vm1073, 1, 0
      %v1106 = vsel %vm1074, 1, 0
      %v1107 = vsel %vm1075, 1, 0
      %v1108 = vsel %vm1076, 1, 0
      %v1109 = vsel %vm1077, 1, 0
      %v1110 = vsel %vm1078, 1, 0
      %v1111 = vsel %vm1079, 1, 0
      %v1112 = vsel %vm1080, 1, 0
      %v1113 = vsel %vm1081, 1, 0
      %v1114 = vsel %vm1082, 1, 0
      %v1115 = vsel %vm1083, 1, 0
      %v1116 = vsel %vm1084, 1, 0
      %v1117 = vsel %vm1085, 1, 0
      %v1118 = vsel %vm1086, 1, 0
      %v1119 = vsel %vm1087, 1, 0
      %v1120 = vsel %vm1088, 1, 0
      %v1121 = vsel %vm1089, 1, 0
      %v1122 = vsel %vm1090, 1, 0
      %v1123 = vsel %vm1091, 1, 0
      %v1124 = vsel %vm1092, 1, 0
      %v1125 = vsel %vm1093, 1, 0
      %v1126 = vsel %vm1094, 1, 0
      %v1127 = vsel %vm1095, 1, 0
      %vm1128 = vcmp.eq.s32.totalorder %v1096, 1
      %vm1129 = vcmp.eq.s32.totalorder %v1097, 1
      %vm1130 = vcmp.eq.s32.totalorder %v1098, 1
      %vm1131 = vcmp.eq.s32.totalorder %v1099, 1
      %vm1132 = vcmp.eq.s32.totalorder %v1100, 1
      %vm1133 = vcmp.eq.s32.totalorder %v1101, 1
      %vm1134 = vcmp.eq.s32.totalorder %v1102, 1
      %vm1135 = vcmp.eq.s32.totalorder %v1103, 1
      %vm1136 = vcmp.eq.s32.totalorder %v1104, 1
      %vm1137 = vcmp.eq.s32.totalorder %v1105, 1
      %vm1138 = vcmp.eq.s32.totalorder %v1106, 1
      %vm1139 = vcmp.eq.s32.totalorder %v1107, 1
      %vm1140 = vcmp.eq.s32.totalorder %v1108, 1
      %vm1141 = vcmp.eq.s32.totalorder %v1109, 1
      %vm1142 = vcmp.eq.s32.totalorder %v1110, 1
      %vm1143 = vcmp.eq.s32.totalorder %v1111, 1
      %vm1144 = vcmp.eq.s32.totalorder %v1112, 1
      %vm1145 = vcmp.eq.s32.totalorder %v1113, 1
      %vm1146 = vcmp.eq.s32.totalorder %v1114, 1
      %vm1147 = vcmp.eq.s32.totalorder %v1115, 1
      %vm1148 = vcmp.eq.s32.totalorder %v1116, 1
      %vm1149 = vcmp.eq.s32.totalorder %v1117, 1
      %vm1150 = vcmp.eq.s32.totalorder %v1118, 1
      %vm1151 = vcmp.eq.s32.totalorder %v1119, 1
      %vm1152 = vcmp.eq.s32.totalorder %v1120, 1
      %vm1153 = vcmp.eq.s32.totalorder %v1121, 1
      %vm1154 = vcmp.eq.s32.totalorder %v1122, 1
      %vm1155 = vcmp.eq.s32.totalorder %v1123, 1
      %vm1156 = vcmp.eq.s32.totalorder %v1124, 1
      %vm1157 = vcmp.eq.s32.totalorder %v1125, 1
      %vm1158 = vcmp.eq.s32.totalorder %v1126, 1
      %vm1159 = vcmp.eq.s32.totalorder %v1127, 1
      %v1160 = vsel %vm1128, %v1032, 0.0
      %v1161 = vsel %vm1129, %v1033, 0.0
      %v1162 = vsel %vm1130, %v1034, 0.0
      %v1163 = vsel %vm1131, %v1035, 0.0
      %v1164 = vsel %vm1132, %v1036, 0.0
      %v1165 = vsel %vm1133, %v1037, 0.0
      %v1166 = vsel %vm1134, %v1038, 0.0
      %v1167 = vsel %vm1135, %v1039, 0.0
      %v1168 = vsel %vm1136, %v1040, 0.0
      %v1169 = vsel %vm1137, %v1041, 0.0
      %v1170 = vsel %vm1138, %v1042, 0.0
      %v1171 = vsel %vm1139, %v1043, 0.0
      %v1172 = vsel %vm1140, %v1044, 0.0
      %v1173 = vsel %vm1141, %v1045, 0.0
      %v1174 = vsel %vm1142, %v1046, 0.0
      %v1175 = vsel %vm1143, %v1047, 0.0
      %v1176 = vsel %vm1144, %v1048, 0.0
      %v1177 = vsel %vm1145, %v1049, 0.0
      %v1178 = vsel %vm1146, %v1050, 0.0
      %v1179 = vsel %vm1147, %v1051, 0.0
      %v1180 = vsel %vm1148, %v1052, 0.0
      %v1181 = vsel %vm1149, %v1053, 0.0
      %v1182 = vsel %vm1150, %v1054, 0.0
      %v1183 = vsel %vm1151, %v1055, 0.0
      %v1184 = vsel %vm1152, %v1056, 0.0
      %v1185 = vsel %vm1153, %v1057, 0.0
      %v1186 = vsel %vm1154, %v1058, 0.0
      %v1187 = vsel %vm1155, %v1059, 0.0
      %v1188 = vsel %vm1156, %v1060, 0.0
      %v1189 = vsel %vm1157, %v1061, 0.0
      %v1190 = vsel %vm1158, %v1062, 0.0
      %v1191 = vsel %vm1159, %v1063, 0.0
      %v1192 = vld [vmem:[#allocation2 + $0x106] sm:$0xff]
      %v1193 = vld [vmem:[#allocation2 + $0x10e] sm:$0xff]
      %v1194 = vld [vmem:[#allocation2 + $0x116] sm:$0xff]
      %v1195 = vld [vmem:[#allocation2 + $0x11e] sm:$0xff]
      %v1196 = vsel %vm936, %v844, 0.0
      %v1197 = vsel %vm937, %v845, 0.0
      %v1198 = vsel %vm938, %v846, 0.0
      %v1199 = vsel %vm939, %v847, 0.0
      %v1200 = vsel %vm940, %v848, 0.0
      %v1201 = vsel %vm941, %v849, 0.0
      %v1202 = vsel %vm942, %v850, 0.0
      %v1203 = vsel %vm943, %v851, 0.0
      %v1204 = vsel %vm944, %v852, 0.0
      %v1205 = vsel %vm945, %v853, 0.0
      %v1206 = vsel %vm946, %v854, 0.0
      %v1207 = vsel %vm947, %v855, 0.0
      %v1208 = vsel %vm948, %v856, 0.0
      %v1209 = vsel %vm949, %v857, 0.0
      %v1210 = vsel %vm950, %v858, 0.0
      %v1211 = vsel %vm951, %v859, 0.0
      %v1212 = vsel %vm952, %v860, 0.0
      %v1213 = vsel %vm953, %v861, 0.0
      %v1214 = vsel %vm954, %v862, 0.0
      %v1215 = vsel %vm955, %v863, 0.0
      %v1216 = vsel %vm956, %v864, 0.0
      %v1217 = vsel %vm957, %v865, 0.0
      %v1218 = vsel %vm958, %v866, 0.0
      %v1219 = vsel %vm959, %v867, 0.0
      %v1220 = vsel %vm960, %v868, 0.0
      %v1221 = vsel %vm961, %v869, 0.0
      %v1222 = vsel %vm962, %v870, 0.0
      %v1223 = vsel %vm963, %v871, 0.0
      %v1224 = vsel %vm964, %v1192, 0.0
      %v1225 = vsel %vm965, %v1193, 0.0
      %v1226 = vsel %vm966, %v1194, 0.0
      %v1227 = vsel %vm967, %v1195, 0.0
      %v1228 = vld [vmem:[#allocation2 + $0x108] sm:$0xff]
      %v1229 = vld [vmem:[#allocation2 + $0x110] sm:$0xff]
      %v1230 = vld [vmem:[#allocation2 + $0x118] sm:$0xff]
      %v1231 = vld [vmem:[#allocation2 + $0x120] sm:$0xff]
      %v1232 = vld [vmem:[#allocation2 + $0x10a] sm:$0xff]
      %v1233 = vld [vmem:[#allocation2 + $0x112] sm:$0xff]
      %v1234 = vld [vmem:[#allocation2 + $0x11a] sm:$0xff]
      %v1235 = vld [vmem:[#allocation2 + $0x122] sm:$0xff]
      %v1236 = vsel %vm1128, %v1036, 0.0
      %v1237 = vsel %vm1129, %v1037, 0.0
      %v1238 = vsel %vm1130, %v1038, 0.0
      %v1239 = vsel %vm1131, %v1039, 0.0
      %v1240 = vsel %vm1132, %v1040, 0.0
      %v1241 = vsel %vm1133, %v1041, 0.0
      %v1242 = vsel %vm1134, %v1042, 0.0
      %v1243 = vsel %vm1135, %v1043, 0.0
      %v1244 = vsel %vm1136, %v1044, 0.0
      %v1245 = vsel %vm1137, %v1045, 0.0
      %v1246 = vsel %vm1138, %v1046, 0.0
      %v1247 = vsel %vm1139, %v1047, 0.0
      %v1248 = vsel %vm1140, %v1048, 0.0
      %v1249 = vsel %vm1141, %v1049, 0.0
      %v1250 = vsel %vm1142, %v1050, 0.0
      %v1251 = vsel %vm1143, %v1051, 0.0
      %v1252 = vsel %vm1144, %v1052, 0.0
      %v1253 = vsel %vm1145, %v1053, 0.0
      %v1254 = vsel %vm1146, %v1054, 0.0
      %v1255 = vsel %vm1147, %v1055, 0.0
      %v1256 = vsel %vm1148, %v1056, 0.0
      %v1257 = vsel %vm1149, %v1057, 0.0
      %v1258 = vsel %vm1150, %v1058, 0.0
      %v1259 = vsel %vm1151, %v1059, 0.0
      %v1260 = vsel %vm1152, %v1060, 0.0
      %v1261 = vsel %vm1153, %v1061, 0.0
      %v1262 = vsel %vm1154, %v1062, 0.0
      %v1263 = vsel %vm1155, %v1063, 0.0
      %v1264 = vsel %vm1156, %v1232, 0.0
      %v1265 = vsel %vm1157, %v1233, 0.0
      %v1266 = vsel %vm1158, %v1234, 0.0
      %v1267 = vsel %vm1159, %v1235, 0.0
      %v1268 = vld [vmem:[#allocation2 + $0x126] sm:$0xff]
      %v1269 = vld [vmem:[#allocation2 + $0x12e] sm:$0xff]
      %v1270 = vld [vmem:[#allocation2 + $0x136] sm:$0xff]
      %v1271 = vld [vmem:[#allocation2 + $0x13e] sm:$0xff]
      %v1272 = vsel %vm936, %v848, 0.0
      %v1273 = vsel %vm937, %v849, 0.0
      %v1274 = vsel %vm938, %v850, 0.0
      %v1275 = vsel %vm939, %v851, 0.0
      %v1276 = vsel %vm940, %v852, 0.0
      %v1277 = vsel %vm941, %v853, 0.0
      %v1278 = vsel %vm942, %v854, 0.0
      %v1279 = vsel %vm943, %v855, 0.0
      %v1280 = vsel %vm944, %v856, 0.0
      %v1281 = vsel %vm945, %v857, 0.0
      %v1282 = vsel %vm946, %v858, 0.0
      %v1283 = vsel %vm947, %v859, 0.0
      %v1284 = vsel %vm948, %v860, 0.0
      %v1285 = vsel %vm949, %v861, 0.0
      %v1286 = vsel %vm950, %v862, 0.0
      %v1287 = vsel %vm951, %v863, 0.0
      %v1288 = vsel %vm952, %v864, 0.0
      %v1289 = vsel %vm953, %v865, 0.0
      %v1290 = vsel %vm954, %v866, 0.0
      %v1291 = vsel %vm955, %v867, 0.0
      %v1292 = vsel %vm956, %v868, 0.0
      %v1293 = vsel %vm957, %v869, 0.0
      %v1294 = vsel %vm958, %v870, 0.0
      %v1295 = vsel %vm959, %v871, 0.0
      %v1296 = vsel %vm960, %v1192, 0.0
      %v1297 = vsel %vm961, %v1193, 0.0
      %v1298 = vsel %vm962, %v1194, 0.0
      %v1299 = vsel %vm963, %v1195, 0.0
      %v1300 = vsel %vm964, %v1268, 0.0
      %v1301 = vsel %vm965, %v1269, 0.0
      %v1302 = vsel %vm966, %v1270, 0.0
      %v1303 = vsel %vm967, %v1271, 0.0
      %v1304 = vld [vmem:[#allocation2 + $0x128] sm:$0xff]
      %v1305 = vld [vmem:[#allocation2 + $0x130] sm:$0xff]
      %v1306 = vld [vmem:[#allocation2 + $0x138] sm:$0xff]
      %v1307 = vld [vmem:[#allocation2 + $0x140] sm:$0xff]
      %v1308 = vld [vmem:[#allocation2 + $0x12a] sm:$0xff]
      %v1309 = vld [vmem:[#allocation2 + $0x132] sm:$0xff]
      %v1310 = vld [vmem:[#allocation2 + $0x13a] sm:$0xff]
      %v1311 = vld [vmem:[#allocation2 + $0x142] sm:$0xff]
      %v1312 = vsel %vm1128, %v1040, 0.0
      %v1313 = vsel %vm1129, %v1041, 0.0
      %v1314 = vsel %vm1130, %v1042, 0.0
      %v1315 = vsel %vm1131, %v1043, 0.0
      %v1316 = vsel %vm1132, %v1044, 0.0
      %v1317 = vsel %vm1133, %v1045, 0.0
      %v1318 = vsel %vm1134, %v1046, 0.0
      %v1319 = vsel %vm1135, %v1047, 0.0
      %v1320 = vsel %vm1136, %v1048, 0.0
      %v1321 = vsel %vm1137, %v1049, 0.0
      %v1322 = vsel %vm1138, %v1050, 0.0
      %v1323 = vsel %vm1139, %v1051, 0.0
      %v1324 = vsel %vm1140, %v1052, 0.0
      %v1325 = vsel %vm1141, %v1053, 0.0
      %v1326 = vsel %vm1142, %v1054, 0.0
      %v1327 = vsel %vm1143, %v1055, 0.0
      %v1328 = vsel %vm1144, %v1056, 0.0
      %v1329 = vsel %vm1145, %v1057, 0.0
      %v1330 = vsel %vm1146, %v1058, 0.0
      %v1331 = vsel %vm1147, %v1059, 0.0
      %v1332 = vsel %vm1148, %v1060, 0.0
      %v1333 = vsel %vm1149, %v1061, 0.0
      %v1334 = vsel %vm1150, %v1062, 0.0
      %v1335 = vsel %vm1151, %v1063, 0.0
      %v1336 = vsel %vm1152, %v1232, 0.0
      %v1337 = vsel %vm1153, %v1233, 0.0
      %v1338 = vsel %vm1154, %v1234, 0.0
      %v1339 = vsel %vm1155, %v1235, 0.0
      %v1340 = vsel %vm1156, %v1308, 0.0
      %v1341 = vsel %vm1157, %v1309, 0.0
      %v1342 = vsel %vm1158, %v1310, 0.0
      %v1343 = vsel %vm1159, %v1311, 0.0
      %v1344 = vpack.c.bf16 %v969, %v968
      %v1345 = vpack.c.bf16 %v971, %v970
      %v1346 = vpack.c.bf16 %v973, %v972
      %v1347 = vpack.c.bf16 %v975, %v974
      %v1348 = vpack.c.bf16 %v977, %v976
      %v1349 = vpack.c.bf16 %v979, %v978
      %v1350 = vpack.c.bf16 %v981, %v980
      %v1351 = vpack.c.bf16 %v983, %v982
      %v1352 = vpack.c.bf16 %v985, %v984
      %v1353 = vpack.c.bf16 %v987, %v986
      %v1354 = vpack.c.bf16 %v989, %v988
      %v1355 = vpack.c.bf16 %v991, %v990
      %v1356 = vpack.c.bf16 %v993, %v992
      %v1357 = vpack.c.bf16 %v995, %v994
      %v1358 = vpack.c.bf16 %v997, %v996
      %v1359 = vpack.c.bf16 %v999, %v998
      %v1360 = vld [vmem:[%s2] sm:$0x3]
      %v1361 = vpack.c.bf16 %v1001, %v1000
      %v1362 = vpack.c.bf16 %v1003, %v1002
      %v1363 = vpack.c.bf16 %v1005, %v1004
      %v1364 = vpack.c.bf16 %v1007, %v1006
      %v1365 = vpack.c.bf16 %v1009, %v1008
      %v1366 = vpack.c.bf16 %v1011, %v1010
      %v1367 = vpack.c.bf16 %v1013, %v1012
      %v1368 = vpack.c.bf16 %v1015, %v1014
      %v1369 = vpack.c.bf16 %v1017, %v1016
      %v1370 = vpack.c.bf16 %v1019, %v1018
      %v1371 = vpack.c.bf16 %v1021, %v1020
      %v1372 = vpack.c.bf16 %v1023, %v1022
      %v1373 = vpack.c.bf16 %v1025, %v1024
      %v1374 = vpack.c.bf16 %v1027, %v1026
      %v1375 = vpack.c.bf16 %v1029, %v1028
      %v1376 = vpack.c.bf16 %v1031, %v1030
      %s1377 = scalar_lea.vmem %s2, 2
      %v1378 = vld [vmem:[%s1377] sm:$0x3]
      %v1380 = vsel %vm380, %v1361, 0
      %v1383 = vsel %vm380, %v1362, 0
      %v1386 = vsel %vm380, %v1363, 0
      %v1389 = vsel %vm380, %v1364, 0
      %v1392 = vsel %vm380, %v1365, 0
      %v1395 = vsel %vm380, %v1366, 0
      %v1398 = vsel %vm380, %v1367, 0
      %v1401 = vsel %vm380, %v1368, 0
      %v1404 = vsel %vm380, %v1369, 0
      %v1407 = vsel %vm380, %v1370, 0
      %v1410 = vsel %vm380, %v1371, 0
      %v1413 = vsel %vm380, %v1372, 0
      %v1416 = vsel %vm380, %v1373, 0
      %v1419 = vsel %vm380, %v1374, 0
      %v1422 = vsel %vm380, %v1375, 0
      %v1425 = vsel %vm380, %v1376, 0
      %vm1427 = vcmask 1041408
      %v1429 = vsel %vm1427, %v1378, 0
      %1431 = vmatprep.subr.bf16.mxu0 0
      %1432 = vmatpush1.bf16.msra.mxu0 %v1429
      %1433 = vmatprep.subr.bf16.mxu0 0
      %1434 = vmatpush1.bf16.msra.mxu0 0
      %1435 = vmatprep.subr.bf16.mxu0 0
      %1436 = vmatpush1.bf16.msra.mxu0 0
      %1437 = vmatprep.subr.bf16.mxu0 0
      %1438 = vmatpush1.bf16.msra.mxu0 0
      %1439 = vmatprep.subr.bf16.mxu0 0
      %1440 = vmatpush1.bf16.msra.mxu0 0
      %1441 = vmatprep.subr.bf16.mxu0 0
      %1442 = vmatpush1.bf16.msra.mxu0 0
      %1443 = vmatprep.subr.bf16.mxu0 0
      %1444 = vmatpush1.bf16.msra.mxu0 0
      %1445 = vmatprep.subr.bf16.mxu0 0
      %1446 = vmatpush1.bf16.msra.mxu0 0
      %1447 = vmatprep.subr.bf16.mxu0 0
      %1448 = vmatpush1.bf16.msra.mxu0 0
      %1449 = vmatprep.subr.bf16.mxu0 0
      %1450 = vmatpush1.bf16.msra.mxu0 0
      %1451 = vmatprep.subr.bf16.mxu0 0
      %1452 = vmatpush1.bf16.msra.mxu0 0
      %1453 = vmatprep.subr.bf16.mxu0 0
      %1454 = vmatpush1.bf16.msra.mxu0 0
      %1455 = vmatprep.subr.bf16.mxu0 0
      %1456 = vmatpush1.bf16.msra.mxu0 0
      %1457 = vmatprep.subr.bf16.mxu0 0
      %1458 = vmatpush1.bf16.msra.mxu0 0
      %1459 = vmatprep.subr.bf16.mxu0 0
      %1460 = vmatpush1.bf16.msra.mxu0 0
      %1461 = vmatprep.subr.bf16.mxu0 0
      %1462 = vmatpush1.bf16.msra.mxu0 0
      %1463 = vmatprep.mubr.bf16.mxu0 0
      %1464 = vmatmul.mubr.bf16.gmra.mrb[0].mxu0 %v1380
      %v1465 = vpop.f32.mrb[0].mxu0
      %v1466 = vadd.f32 0.0, %v1465
      %v1467 = vpop.f32.mrb[0].mxu0
      %v1468 = vpop.f32.mrb[0].mxu0
      %v1469 = vadd.f32 0.0, %v1468
      %v1470 = vpop.f32.mrb[0].mxu0
      %1471 = vmatprep.mubr.bf16.mxu0 0
      %1472 = vmatmul.mubr.bf16.gmra.mrb[0].mxu0 %v1383
      %v1473 = vpop.f32.mrb[0].mxu0
      %v1474 = vadd.f32 0.0, %v1473
      %v1475 = vpop.f32.mrb[0].mxu0
      %v1476 = vpop.f32.mrb[0].mxu0
      %v1477 = vadd.f32 0.0, %v1476
      %v1478 = vpop.f32.mrb[0].mxu0
      %1479 = vmatprep.mubr.bf16.mxu0 0
      %1480 = vmatmul.mubr.bf16.gmra.mrb[0].mxu0 %v1386
      %v1481 = vpop.f32.mrb[0].mxu0
      %v1482 = vadd.f32 0.0, %v1481
      %v1483 = vpop.f32.mrb[0].mxu0
      %v1484 = vpop.f32.mrb[0].mxu0
      %v1485 = vadd.f32 0.0, %v1484
      %v1486 = vpop.f32.mrb[0].mxu0
      %1487 = vmatprep.mubr.bf16.mxu0 0
      %1488 = vmatmul.mubr.bf16.gmra.mrb[0].mxu0 %v1389
      %v1489 = vpop.f32.mrb[0].mxu0
      %v1490 = vadd.f32 0.0, %v1489
      %v1491 = vpop.f32.mrb[0].mxu0
      %v1492 = vpop.f32.mrb[0].mxu0
      %v1493 = vadd.f32 0.0, %v1492
      %v1494 = vpop.f32.mrb[0].mxu0
      %1495 = vmatprep.mubr.bf16.mxu0 0
      %1496 = vmatmul.mubr.bf16.gmra.mrb[0].mxu0 %v1392
      %v1497 = vpop.f32.mrb[0].mxu0
      %v1498 = vadd.f32 0.0, %v1497
      %v1499 = vpop.f32.mrb[0].mxu0
      %v1500 = vpop.f32.mrb[0].mxu0
      %v1501 = vadd.f32 0.0, %v1500
      %v1502 = vpop.f32.mrb[0].mxu0
      %1503 = vmatprep.mubr.bf16.mxu0 0
      %1504 = vmatmul.mubr.bf16.gmra.mrb[0].mxu0 %v1395
      %v1505 = vpop.f32.mrb[0].mxu0
      %v1506 = vadd.f32 0.0, %v1505
      %v1507 = vpop.f32.mrb[0].mxu0
      %v1508 = vpop.f32.mrb[0].mxu0
      %v1509 = vadd.f32 0.0, %v1508
      %v1510 = vpop.f32.mrb[0].mxu0
      %1511 = vmatprep.mubr.bf16.mxu0 0
      %1512 = vmatmul.mubr.bf16.gmra.mrb[0].mxu0 %v1398
      %v1513 = vpop.f32.mrb[0].mxu0
      %v1514 = vadd.f32 0.0, %v1513
      %v1515 = vpop.f32.mrb[0].mxu0
      %v1516 = vpop.f32.mrb[0].mxu0
      %v1517 = vadd.f32 0.0, %v1516
      %v1518 = vpop.f32.mrb[0].mxu0
      %1519 = vmatprep.mubr.bf16.mxu0 0
      %1520 = vmatmul.mubr.bf16.gmra.mrb[0].mxu0 %v1401
      %v1521 = vpop.f32.mrb[0].mxu0
      %v1522 = vadd.f32 0.0, %v1521
      %v1523 = vpop.f32.mrb[0].mxu0
      %v1524 = vpop.f32.mrb[0].mxu0
      %v1525 = vadd.f32 0.0, %v1524
      %v1526 = vpop.f32.mrb[0].mxu0
      %1527 = vmatprep.mubr.bf16.mxu0 0
      %1528 = vmatmul.mubr.bf16.gmra.mrb[0].mxu0 %v1404
      %v1529 = vpop.f32.mrb[0].mxu0
      %v1530 = vadd.f32 0.0, %v1529
      %v1531 = vpop.f32.mrb[0].mxu0
      %v1532 = vpop.f32.mrb[0].mxu0
      %v1533 = vadd.f32 0.0, %v1532
      %v1534 = vpop.f32.mrb[0].mxu0
      %1535 = vmatprep.mubr.bf16.mxu0 0
      %1536 = vmatmul.mubr.bf16.gmra.mrb[0].mxu0 %v1407
      %v1537 = vpop.f32.mrb[0].mxu0
      %v1538 = vadd.f32 0.0, %v1537
      %v1539 = vpop.f32.mrb[0].mxu0
      %v1540 = vpop.f32.mrb[0].mxu0
      %v1541 = vadd.f32 0.0, %v1540
      %v1542 = vpop.f32.mrb[0].mxu0
      %1543 = vmatprep.mubr.bf16.mxu0 0
      %1544 = vmatmul.mubr.bf16.gmra.mrb[0].mxu0 %v1410
      %v1545 = vpop.f32.mrb[0].mxu0
      %v1546 = vadd.f32 0.0, %v1545
      %v1547 = vpop.f32.mrb[0].mxu0
      %v1548 = vpop.f32.mrb[0].mxu0
      %v1549 = vadd.f32 0.0, %v1548
      %v1550 = vpop.f32.mrb[0].mxu0
      %1551 = vmatprep.mubr.bf16.mxu0 0
      %1552 = vmatmul.mubr.bf16.gmra.mrb[0].mxu0 %v1413
      %v1553 = vpop.f32.mrb[0].mxu0
      %v1554 = vadd.f32 0.0, %v1553
      %v1555 = vpop.f32.mrb[0].mxu0
      %v1556 = vpop.f32.mrb[0].mxu0
      %v1557 = vadd.f32 0.0, %v1556
      %v1558 = vpop.f32.mrb[0].mxu0
      %1559 = vmatprep.mubr.bf16.mxu0 0
      %1560 = vmatmul.mubr.bf16.gmra.mrb[0].mxu0 %v1416
      %v1561 = vpop.f32.mrb[0].mxu0
      %v1562 = vadd.f32 0.0, %v1561
      %v1563 = vpop.f32.mrb[0].mxu0
      %v1564 = vpop.f32.mrb[0].mxu0
      %v1565 = vadd.f32 0.0, %v1564
      %v1566 = vpop.f32.mrb[0].mxu0
      %1567 = vmatprep.mubr.bf16.mxu0 0
      %1568 = vmatmul.mubr.bf16.gmra.mrb[0].mxu0 %v1419
      %v1569 = vpop.f32.mrb[0].mxu0
      %v1570 = vadd.f32 0.0, %v1569
      %v1571 = vpop.f32.mrb[0].mxu0
      %v1572 = vpop.f32.mrb[0].mxu0
      %v1573 = vadd.f32 0.0, %v1572
      %v1574 = vpop.f32.mrb[0].mxu0
      %1575 = vmatprep.mubr.bf16.mxu0 0
      %1576 = vmatmul.mubr.bf16.gmra.mrb[0].mxu0 %v1422
      %v1577 = vpop.f32.mrb[0].mxu0
      %v1578 = vadd.f32 0.0, %v1577
      %v1579 = vpop.f32.mrb[0].mxu0
      %v1580 = vpop.f32.mrb[0].mxu0
      %v1581 = vadd.f32 0.0, %v1580
      %v1582 = vpop.f32.mrb[0].mxu0
      %1583 = vmatprep.mubr.bf16.mxu0 0
      %1584 = vmatmul.mubr.bf16.gmra.mrb[0].mxu0 %v1425
      %v1585 = vpop.f32.mrb[0].mxu0
      %v1586 = vadd.f32 0.0, %v1585
      %v1587 = vpop.f32.mrb[0].mxu0
      %v1588 = vpop.f32.mrb[0].mxu0
      %v1589 = vadd.f32 0.0, %v1588
      %v1590 = vpop.f32.mrb[0].mxu0
      %1591 = vdwg.mxu0
      %v1593 = vsel %vm380, %v1344, 0
      %v1596 = vsel %vm380, %v1345, 0
      %v1599 = vsel %vm380, %v1346, 0
      %v1602 = vsel %vm380, %v1347, 0
      %v1605 = vsel %vm380, %v1348, 0
      %v1608 = vsel %vm380, %v1349, 0
      %v1611 = vsel %vm380, %v1350, 0
      %v1614 = vsel %vm380, %v1351, 0
      %v1617 = vsel %vm380, %v1352, 0
      %v1620 = vsel %vm380, %v1353, 0
      %v1623 = vsel %vm380, %v1354, 0
      %v1626 = vsel %vm380, %v1355, 0
      %v1629 = vsel %vm380, %v1356, 0
      %v1632 = vsel %vm380, %v1357, 0
      %v1635 = vsel %vm380, %v1358, 0
      %v1638 = vsel %vm380, %v1359, 0
      %v1641 = vsel %vm1427, %v1360, 0
      %1643 = vmatprep.subr.bf16.mxu0 0
      %1644 = vmatpush1.bf16.msra.mxu0 %v1641
      %1645 = vmatprep.subr.bf16.mxu0 0
      %1646 = vmatpush1.bf16.msra.mxu0 0
      %1647 = vmatprep.subr.bf16.mxu0 0
      %1648 = vmatpush1.bf16.msra.mxu0 0
      %1649 = vmatprep.subr.bf16.mxu0 0
      %1650 = vmatpush1.bf16.msra.mxu0 0
      %1651 = vmatprep.subr.bf16.mxu0 0
      %1652 = vmatpush1.bf16.msra.mxu0 0
      %1653 = vmatprep.subr.bf16.mxu0 0
      %1654 = vmatpush1.bf16.msra.mxu0 0
      %1655 = vmatprep.subr.bf16.mxu0 0
      %1656 = vmatpush1.bf16.msra.mxu0 0
      %1657 = vmatprep.subr.bf16.mxu0 0
      %1658 = vmatpush1.bf16.msra.mxu0 0
      %1659 = vmatprep.subr.bf16.mxu0 0
      %1660 = vmatpush1.bf16.msra.mxu0 0
      %1661 = vmatprep.subr.bf16.mxu0 0
      %1662 = vmatpush1.bf16.msra.mxu0 0
      %1663 = vmatprep.subr.bf16.mxu0 0
      %1664 = vmatpush1.bf16.msra.mxu0 0
      %1665 = vmatprep.subr.bf16.mxu0 0
      %1666 = vmatpush1.bf16.msra.mxu0 0
      %1667 = vmatprep.subr.bf16.mxu0 0
      %1668 = vmatpush1.bf16.msra.mxu0 0
      %1669 = vmatprep.subr.bf16.mxu0 0
      %1670 = vmatpush1.bf16.msra.mxu0 0
      %1671 = vmatprep.subr.bf16.mxu0 0
      %1672 = vmatpush1.bf16.msra.mxu0 0
      %1673 = vmatprep.subr.bf16.mxu0 0
      %1674 = vmatpush1.bf16.msra.mxu0 0
      %1675 = vmatprep.mubr.bf16.mxu0 0
      %1676 = vmatmul.mubr.bf16.gmra.mrb[0].mxu0 %v1593
      %v1677 = vpop.f32.mrb[0].mxu0
      %v1678 = vadd.f32 %v1466, %v1677
      %v1679 = vpop.f32.mrb[0].mxu0
      %v1680 = vpop.f32.mrb[0].mxu0
      %v1681 = vadd.f32 %v1469, %v1680
      %v1682 = vpop.f32.mrb[0].mxu0
      %1683 = vmatprep.mubr.bf16.mxu0 0
      %1684 = vmatmul.mubr.bf16.gmra.mrb[0].mxu0 %v1596
      %v1685 = vpop.f32.mrb[0].mxu0
      %v1686 = vadd.f32 %v1474, %v1685
      %v1687 = vpop.f32.mrb[0].mxu0
      %v1688 = vpop.f32.mrb[0].mxu0
      %v1689 = vadd.f32 %v1477, %v1688
      %v1690 = vpop.f32.mrb[0].mxu0
      %1691 = vmatprep.mubr.bf16.mxu0 0
      %1692 = vmatmul.mubr.bf16.gmra.mrb[0].mxu0 %v1599
      %v1693 = vpop.f32.mrb[0].mxu0
      %v1694 = vadd.f32 %v1482, %v1693
      %v1695 = vpop.f32.mrb[0].mxu0
      %v1696 = vpop.f32.mrb[0].mxu0
      %v1697 = vadd.f32 %v1485, %v1696
      %v1698 = vpop.f32.mrb[0].mxu0
      %1699 = vmatprep.mubr.bf16.mxu0 0
      %1700 = vmatmul.mubr.bf16.gmra.mrb[0].mxu0 %v1602
      %v1701 = vpop.f32.mrb[0].mxu0
      %v1702 = vadd.f32 %v1490, %v1701
      %v1703 = vpop.f32.mrb[0].mxu0
      %v1704 = vpop.f32.mrb[0].mxu0
      %v1705 = vadd.f32 %v1493, %v1704
      %v1706 = vpop.f32.mrb[0].mxu0
      %1707 = vmatprep.mubr.bf16.mxu0 0
      %1708 = vmatmul.mubr.bf16.gmra.mrb[0].mxu0 %v1605
      %v1709 = vpop.f32.mrb[0].mxu0
      %v1710 = vadd.f32 %v1498, %v1709
      %v1711 = vpop.f32.mrb[0].mxu0
      %v1712 = vpop.f32.mrb[0].mxu0
      %v1713 = vadd.f32 %v1501, %v1712
      %v1714 = vpop.f32.mrb[0].mxu0
      %1715 = vmatprep.mubr.bf16.mxu0 0
      %1716 = vmatmul.mubr.bf16.gmra.mrb[0].mxu0 %v1608
      %v1717 = vpop.f32.mrb[0].mxu0
      %v1718 = vadd.f32 %v1506, %v1717
      %v1719 = vpop.f32.mrb[0].mxu0
      %v1720 = vpop.f32.mrb[0].mxu0
      %v1721 = vadd.f32 %v1509, %v1720
      %v1722 = vpop.f32.mrb[0].mxu0
      %1723 = vmatprep.mubr.bf16.mxu0 0
      %1724 = vmatmul.mubr.bf16.gmra.mrb[0].mxu0 %v1611
      %v1725 = vpop.f32.mrb[0].mxu0
      %v1726 = vadd.f32 %v1514, %v1725
      %v1727 = vpop.f32.mrb[0].mxu0
      %v1728 = vpop.f32.mrb[0].mxu0
      %v1729 = vadd.f32 %v1517, %v1728
      %v1730 = vpop.f32.mrb[0].mxu0
      %1731 = vmatprep.mubr.bf16.mxu0 0
      %1732 = vmatmul.mubr.bf16.gmra.mrb[0].mxu0 %v1614
      %v1733 = vpop.f32.mrb[0].mxu0
      %v1734 = vadd.f32 %v1522, %v1733
      %v1735 = vpop.f32.mrb[0].mxu0
      %v1736 = vpop.f32.mrb[0].mxu0
      %v1737 = vadd.f32 %v1525, %v1736
      %v1738 = vpop.f32.mrb[0].mxu0
      %1739 = vmatprep.mubr.bf16.mxu0 0
      %1740 = vmatmul.mubr.bf16.gmra.mrb[0].mxu0 %v1617
      %v1741 = vpop.f32.mrb[0].mxu0
      %v1742 = vadd.f32 %v1530, %v1741
      %v1743 = vpop.f32.mrb[0].mxu0
      %v1744 = vpop.f32.mrb[0].mxu0
      %v1745 = vadd.f32 %v1533, %v1744
      %v1746 = vpop.f32.mrb[0].mxu0
      %1747 = vmatprep.mubr.bf16.mxu0 0
      %1748 = vmatmul.mubr.bf16.gmra.mrb[0].mxu0 %v1620
      %v1749 = vpop.f32.mrb[0].mxu0
      %v1750 = vadd.f32 %v1538, %v1749
      %v1751 = vpop.f32.mrb[0].mxu0
      %v1752 = vpop.f32.mrb[0].mxu0
      %v1753 = vadd.f32 %v1541, %v1752
      %v1754 = vpop.f32.mrb[0].mxu0
      %1755 = vmatprep.mubr.bf16.mxu0 0
      %1756 = vmatmul.mubr.bf16.gmra.mrb[0].mxu0 %v1623
      %v1757 = vpop.f32.mrb[0].mxu0
      %v1758 = vadd.f32 %v1546, %v1757
      %v1759 = vpop.f32.mrb[0].mxu0
      %v1760 = vpop.f32.mrb[0].mxu0
      %v1761 = vadd.f32 %v1549, %v1760
      %v1762 = vpop.f32.mrb[0].mxu0
      %1763 = vmatprep.mubr.bf16.mxu0 0
      %1764 = vmatmul.mubr.bf16.gmra.mrb[0].mxu0 %v1626
      %v1765 = vpop.f32.mrb[0].mxu0
      %v1766 = vadd.f32 %v1554, %v1765
      %v1767 = vpop.f32.mrb[0].mxu0
      %v1768 = vpop.f32.mrb[0].mxu0
      %v1769 = vadd.f32 %v1557, %v1768
      %v1770 = vpop.f32.mrb[0].mxu0
      %1771 = vmatprep.mubr.bf16.mxu0 0
      %1772 = vmatmul.mubr.bf16.gmra.mrb[0].mxu0 %v1629
      %v1773 = vpop.f32.mrb[0].mxu0
      %v1774 = vadd.f32 %v1562, %v1773
      %v1775 = vpop.f32.mrb[0].mxu0
      %v1776 = vpop.f32.mrb[0].mxu0
      %v1777 = vadd.f32 %v1565, %v1776
      %v1778 = vpop.f32.mrb[0].mxu0
      %1779 = vmatprep.mubr.bf16.mxu0 0
      %1780 = vmatmul.mubr.bf16.gmra.mrb[0].mxu0 %v1632
      %v1781 = vpop.f32.mrb[0].mxu0
      %v1782 = vadd.f32 %v1570, %v1781
      %v1783 = vpop.f32.mrb[0].mxu0
      %v1784 = vpop.f32.mrb[0].mxu0
      %v1785 = vadd.f32 %v1573, %v1784
      %v1786 = vpop.f32.mrb[0].mxu0
      %1787 = vmatprep.mubr.bf16.mxu0 0
      %1788 = vmatmul.mubr.bf16.gmra.mrb[0].mxu0 %v1635
      %v1789 = vpop.f32.mrb[0].mxu0
      %v1790 = vadd.f32 %v1578, %v1789
      %v1791 = vpop.f32.mrb[0].mxu0
      %v1792 = vpop.f32.mrb[0].mxu0
      %v1793 = vadd.f32 %v1581, %v1792
      %v1794 = vpop.f32.mrb[0].mxu0
      %1795 = vmatprep.mubr.bf16.mxu0 0
      %1796 = vmatmul.mubr.bf16.gmra.mrb[0].mxu0 %v1638
      %v1797 = vpop.f32.mrb[0].mxu0
      %v1798 = vadd.f32 %v1586, %v1797
      %v1799 = vpop.f32.mrb[0].mxu0
      %v1800 = vpop.f32.mrb[0].mxu0
      %v1801 = vadd.f32 %v1589, %v1800
      %v1802 = vpop.f32.mrb[0].mxu0
      %1803 = vdwg.mxu0
      %v1804 = vpack.c.bf16 %v1161, %v1160
      %v1805 = vpack.c.bf16 %v1163, %v1162
      %v1806 = vpack.c.bf16 %v1165, %v1164
      %v1807 = vpack.c.bf16 %v1167, %v1166
      %v1808 = vpack.c.bf16 %v1169, %v1168
      %v1809 = vpack.c.bf16 %v1171, %v1170
      %v1810 = vpack.c.bf16 %v1173, %v1172
      %v1811 = vpack.c.bf16 %v1175, %v1174
      %v1812 = vpack.c.bf16 %v1177, %v1176
      %v1813 = vpack.c.bf16 %v1179, %v1178
      %v1814 = vpack.c.bf16 %v1181, %v1180
      %v1815 = vpack.c.bf16 %v1183, %v1182
      %v1816 = vpack.c.bf16 %v1185, %v1184
      %v1817 = vpack.c.bf16 %v1187, %v1186
      %v1818 = vpack.c.bf16 %v1189, %v1188
      %v1819 = vpack.c.bf16 %v1191, %v1190
      %s1820 = scalar_lea.vmem %s2, 4
      %v1821 = vld [vmem:[%s1820] sm:$0x3]
      %v1823 = vsel %vm380, %v1804, 0
      %v1826 = vsel %vm380, %v1805, 0
      %v1829 = vsel %vm380, %v1806, 0
      %v1832 = vsel %vm380, %v1807, 0
      %v1835 = vsel %vm380, %v1808, 0
      %v1838 = vsel %vm380, %v1809, 0
      %v1841 = vsel %vm380, %v1810, 0
      %v1844 = vsel %vm380, %v1811, 0
      %v1847 = vsel %vm380, %v1812, 0
      %v1850 = vsel %vm380, %v1813, 0
      %v1853 = vsel %vm380, %v1814, 0
      %v1856 = vsel %vm380, %v1815, 0
      %v1859 = vsel %vm380, %v1816, 0
      %v1862 = vsel %vm380, %v1817, 0
      %v1865 = vsel %vm380, %v1818, 0
      %v1868 = vsel %vm380, %v1819, 0
      %v1871 = vsel %vm1427, %v1821, 0
      %1873 = vmatprep.subr.bf16.mxu0 0
      %1874 = vmatpush1.bf16.msra.mxu0 %v1871
      %1875 = vmatprep.subr.bf16.mxu0 0
      %1876 = vmatpush1.bf16.msra.mxu0 0
      %1877 = vmatprep.subr.bf16.mxu0 0
      %1878 = vmatpush1.bf16.msra.mxu0 0
      %1879 = vmatprep.subr.bf16.mxu0 0
      %1880 = vmatpush1.bf16.msra.mxu0 0
      %1881 = vmatprep.subr.bf16.mxu0 0
      %1882 = vmatpush1.bf16.msra.mxu0 0
      %1883 = vmatprep.subr.bf16.mxu0 0
      %1884 = vmatpush1.bf16.msra.mxu0 0
      %1885 = vmatprep.subr.bf16.mxu0 0
      %1886 = vmatpush1.bf16.msra.mxu0 0
      %1887 = vmatprep.subr.bf16.mxu0 0
      %1888 = vmatpush1.bf16.msra.mxu0 0
      %1889 = vmatprep.subr.bf16.mxu0 0
      %1890 = vmatpush1.bf16.msra.mxu0 0
      %1891 = vmatprep.subr.bf16.mxu0 0
      %1892 = vmatpush1.bf16.msra.mxu0 0
      %1893 = vmatprep.subr.bf16.mxu0 0
      %1894 = vmatpush1.bf16.msra.mxu0 0
      %1895 = vmatprep.subr.bf16.mxu0 0
      %1896 = vmatpush1.bf16.msra.mxu0 0
      %1897 = vmatprep.subr.bf16.mxu0 0
      %1898 = vmatpush1.bf16.msra.mxu0 0
      %1899 = vmatprep.subr.bf16.mxu0 0
      %1900 = vmatpush1.bf16.msra.mxu0 0
      %1901 = vmatprep.subr.bf16.mxu0 0
      %1902 = vmatpush1.bf16.msra.mxu0 0
      %1903 = vmatprep.subr.bf16.mxu0 0
      %1904 = vmatpush1.bf16.msra.mxu0 0
      %1905 = vmatprep.mubr.bf16.mxu0 0
      %1906 = vmatmul.mubr.bf16.gmra.mrb[0].mxu0 %v1823
      %v1907 = vpop.f32.mrb[0].mxu0
      %v1908 = vadd.f32 0.0, %v1907
      %v1909 = vpop.f32.mrb[0].mxu0
      %v1910 = vpop.f32.mrb[0].mxu0
      %v1911 = vadd.f32 0.0, %v1910
      %v1912 = vpop.f32.mrb[0].mxu0
      %1913 = vmatprep.mubr.bf16.mxu0 0
      %1914 = vmatmul.mubr.bf16.gmra.mrb[0].mxu0 %v1826
      %v1915 = vpop.f32.mrb[0].mxu0
      %v1916 = vadd.f32 0.0, %v1915
      %v1917 = vpop.f32.mrb[0].mxu0
      %v1918 = vpop.f32.mrb[0].mxu0
      %v1919 = vadd.f32 0.0, %v1918
      %v1920 = vpop.f32.mrb[0].mxu0
      %1921 = vmatprep.mubr.bf16.mxu0 0
      %1922 = vmatmul.mubr.bf16.gmra.mrb[0].mxu0 %v1829
      %v1923 = vpop.f32.mrb[0].mxu0
      %v1924 = vadd.f32 0.0, %v1923
      %v1925 = vpop.f32.mrb[0].mxu0
      %v1926 = vpop.f32.mrb[0].mxu0
      %v1927 = vadd.f32 0.0, %v1926
      %v1928 = vpop.f32.mrb[0].mxu0
      %1929 = vmatprep.mubr.bf16.mxu0 0
      %1930 = vmatmul.mubr.bf16.gmra.mrb[0].mxu0 %v1832
      %v1931 = vpop.f32.mrb[0].mxu0
      %v1932 = vadd.f32 0.0, %v1931
      %v1933 = vpop.f32.mrb[0].mxu0
      %v1934 = vpop.f32.mrb[0].mxu0
      %v1935 = vadd.f32 0.0, %v1934
      %v1936 = vpop.f32.mrb[0].mxu0
      %1937 = vmatprep.mubr.bf16.mxu0 0
      %1938 = vmatmul.mubr.bf16.gmra.mrb[0].mxu0 %v1835
      %v1939 = vpop.f32.mrb[0].mxu0
      %v1940 = vadd.f32 0.0, %v1939
      %v1941 = vpop.f32.mrb[0].mxu0
      %v1942 = vpop.f32.mrb[0].mxu0
      %v1943 = vadd.f32 0.0, %v1942
      %v1944 = vpop.f32.mrb[0].mxu0
      %1945 = vmatprep.mubr.bf16.mxu0 0
      %1946 = vmatmul.mubr.bf16.gmra.mrb[0].mxu0 %v1838
      %v1947 = vpop.f32.mrb[0].mxu0
      %v1948 = vadd.f32 0.0, %v1947
      %v1949 = vpop.f32.mrb[0].mxu0
      %v1950 = vpop.f32.mrb[0].mxu0
      %v1951 = vadd.f32 0.0, %v1950
      %v1952 = vpop.f32.mrb[0].mxu0
      %1953 = vmatprep.mubr.bf16.mxu0 0
      %1954 = vmatmul.mubr.bf16.gmra.mrb[0].mxu0 %v1841
      %v1955 = vpop.f32.mrb[0].mxu0
      %v1956 = vadd.f32 0.0, %v1955
      %v1957 = vpop.f32.mrb[0].mxu0
      %v1958 = vpop.f32.mrb[0].mxu0
      %v1959 = vadd.f32 0.0, %v1958
      %v1960 = vpop.f32.mrb[0].mxu0
      %1961 = vmatprep.mubr.bf16.mxu0 0
      %1962 = vmatmul.mubr.bf16.gmra.mrb[0].mxu0 %v1844
      %v1963 = vpop.f32.mrb[0].mxu0
      %v1964 = vadd.f32 0.0, %v1963
      %v1965 = vpop.f32.mrb[0].mxu0
      %v1966 = vpop.f32.mrb[0].mxu0
      %v1967 = vadd.f32 0.0, %v1966
      %v1968 = vpop.f32.mrb[0].mxu0
      %1969 = vmatprep.mubr.bf16.mxu0 0
      %1970 = vmatmul.mubr.bf16.gmra.mrb[0].mxu0 %v1847
      %v1971 = vpop.f32.mrb[0].mxu0
      %v1972 = vadd.f32 0.0, %v1971
      %v1973 = vpop.f32.mrb[0].mxu0
      %v1974 = vpop.f32.mrb[0].mxu0
      %v1975 = vadd.f32 0.0, %v1974
      %v1976 = vpop.f32.mrb[0].mxu0
      %1977 = vmatprep.mubr.bf16.mxu0 0
      %1978 = vmatmul.mubr.bf16.gmra.mrb[0].mxu0 %v1850
      %v1979 = vpop.f32.mrb[0].mxu0
      %v1980 = vadd.f32 0.0, %v1979
      %v1981 = vpop.f32.mrb[0].mxu0
      %v1982 = vpop.f32.mrb[0].mxu0
      %v1983 = vadd.f32 0.0, %v1982
      %v1984 = vpop.f32.mrb[0].mxu0
      %1985 = vmatprep.mubr.bf16.mxu0 0
      %1986 = vmatmul.mubr.bf16.gmra.mrb[0].mxu0 %v1853
      %v1987 = vpop.f32.mrb[0].mxu0
      %v1988 = vadd.f32 0.0, %v1987
      %v1989 = vpop.f32.mrb[0].mxu0
      %v1990 = vpop.f32.mrb[0].mxu0
      %v1991 = vadd.f32 0.0, %v1990
      %v1992 = vpop.f32.mrb[0].mxu0
      %1993 = vmatprep.mubr.bf16.mxu0 0
      %1994 = vmatmul.mubr.bf16.gmra.mrb[0].mxu0 %v1856
      %v1995 = vpop.f32.mrb[0].mxu0
      %v1996 = vadd.f32 0.0, %v1995
      %v1997 = vpop.f32.mrb[0].mxu0
      %v1998 = vpop.f32.mrb[0].mxu0
      %v1999 = vadd.f32 0.0, %v1998
      %v2000 = vpop.f32.mrb[0].mxu0
      %2001 = vmatprep.mubr.bf16.mxu0 0
      %2002 = vmatmul.mubr.bf16.gmra.mrb[0].mxu0 %v1859
      %v2003 = vpop.f32.mrb[0].mxu0
      %v2004 = vadd.f32 0.0, %v2003
      %v2005 = vpop.f32.mrb[0].mxu0
      %v2006 = vpop.f32.mrb[0].mxu0
      %v2007 = vadd.f32 0.0, %v2006
      %v2008 = vpop.f32.mrb[0].mxu0
      %2009 = vmatprep.mubr.bf16.mxu0 0
      %2010 = vmatmul.mubr.bf16.gmra.mrb[0].mxu0 %v1862
      %v2011 = vpop.f32.mrb[0].mxu0
      %v2012 = vadd.f32 0.0, %v2011
      %v2013 = vpop.f32.mrb[0].mxu0
      %v2014 = vpop.f32.mrb[0].mxu0
      %v2015 = vadd.f32 0.0, %v2014
      %v2016 = vpop.f32.mrb[0].mxu0
      %2017 = vmatprep.mubr.bf16.mxu0 0
      %2018 = vmatmul.mubr.bf16.gmra.mrb[0].mxu0 %v1865
      %v2019 = vpop.f32.mrb[0].mxu0
      %v2020 = vadd.f32 0.0, %v2019
      %v2021 = vpop.f32.mrb[0].mxu0
      %v2022 = vpop.f32.mrb[0].mxu0
      %v2023 = vadd.f32 0.0, %v2022
      %v2024 = vpop.f32.mrb[0].mxu0
      %2025 = vmatprep.mubr.bf16.mxu0 0
      %2026 = vmatmul.mubr.bf16.gmra.mrb[0].mxu0 %v1868
      %v2027 = vpop.f32.mrb[0].mxu0
      %v2028 = vadd.f32 0.0, %v2027
      %v2029 = vpop.f32.mrb[0].mxu0
      %v2030 = vpop.f32.mrb[0].mxu0
      %v2031 = vadd.f32 0.0, %v2030
      %v2032 = vpop.f32.mrb[0].mxu0
      %2033 = vdwg.mxu0
      %v2034 = vadd.f32 %v1678, %v1908
      %v2035 = vadd.f32 %v1681, %v1911
      %v2036 = vadd.f32 %v1686, %v1916
      %v2037 = vadd.f32 %v1689, %v1919
      %v2038 = vadd.f32 %v1694, %v1924
      %v2039 = vadd.f32 %v1697, %v1927
      %v2040 = vadd.f32 %v1702, %v1932
      %v2041 = vadd.f32 %v1705, %v1935
      %v2042 = vadd.f32 %v1710, %v1940
      %v2043 = vadd.f32 %v1713, %v1943
      %v2044 = vadd.f32 %v1718, %v1948
      %v2045 = vadd.f32 %v1721, %v1951
      %v2046 = vadd.f32 %v1726, %v1956
      %v2047 = vadd.f32 %v1729, %v1959
      %v2048 = vadd.f32 %v1734, %v1964
      %v2049 = vadd.f32 %v1737, %v1967
      %v2050 = vadd.f32 %v1742, %v1972
      %v2051 = vadd.f32 %v1745, %v1975
      %v2052 = vadd.f32 %v1750, %v1980
      %v2053 = vadd.f32 %v1753, %v1983
      %v2054 = vadd.f32 %v1758, %v1988
      %v2055 = vadd.f32 %v1761, %v1991
      %v2056 = vadd.f32 %v1766, %v1996
      %v2057 = vadd.f32 %v1769, %v1999
      %v2058 = vadd.f32 %v1774, %v2004
      %v2059 = vadd.f32 %v1777, %v2007
      %v2060 = vadd.f32 %v1782, %v2012
      %v2061 = vadd.f32 %v1785, %v2015
      %v2062 = vadd.f32 %v1790, %v2020
      %v2063 = vadd.f32 %v1793, %v2023
      %v2064 = vadd.f32 %v1798, %v2028
      %v2065 = vadd.f32 %v1801, %v2031
      %v2066 = vpack.c.bf16 %v1197, %v1196
      %v2067 = vpack.c.bf16 %v1199, %v1198
      %v2068 = vpack.c.bf16 %v1201, %v1200
      %v2069 = vpack.c.bf16 %v1203, %v1202
      %v2070 = vpack.c.bf16 %v1205, %v1204
      %v2071 = vpack.c.bf16 %v1207, %v1206
      %v2072 = vpack.c.bf16 %v1209, %v1208
      %v2073 = vpack.c.bf16 %v1211, %v1210
      %v2074 = vpack.c.bf16 %v1213, %v1212
      %v2075 = vpack.c.bf16 %v1215, %v1214
      %v2076 = vpack.c.bf16 %v1217, %v1216
      %v2077 = vpack.c.bf16 %v1219, %v1218
      %v2078 = vpack.c.bf16 %v1221, %v1220
      %v2079 = vpack.c.bf16 %v1223, %v1222
      %v2080 = vpack.c.bf16 %v1225, %v1224
      %v2081 = vpack.c.bf16 %v1227, %v1226
      %s2082 = scalar_lea.vmem %s2, 6
      %v2083 = vld [vmem:[%s2082] sm:$0x3]
      %v2085 = vsel %vm380, %v2066, 0
      %v2088 = vsel %vm380, %v2067, 0
      %v2091 = vsel %vm380, %v2068, 0
      %v2094 = vsel %vm380, %v2069, 0
      %v2097 = vsel %vm380, %v2070, 0
      %v2100 = vsel %vm380, %v2071, 0
      %v2103 = vsel %vm380, %v2072, 0
      %v2106 = vsel %vm380, %v2073, 0
      %v2109 = vsel %vm380, %v2074, 0
      %v2112 = vsel %vm380, %v2075, 0
      %v2115 = vsel %vm380, %v2076, 0
      %v2118 = vsel %vm380, %v2077, 0
      %v2121 = vsel %vm380, %v2078, 0
      %v2124 = vsel %vm380, %v2079, 0
      %v2127 = vsel %vm380, %v2080, 0
      %v2130 = vsel %vm380, %v2081, 0
      %v2133 = vsel %vm1427, %v2083, 0
      %2135 = vmatprep.subr.bf16.mxu0 0
      %2136 = vmatpush1.bf16.msra.mxu0 %v2133
      %2137 = vmatprep.subr.bf16.mxu0 0
      %2138 = vmatpush1.bf16.msra.mxu0 0
      %2139 = vmatprep.subr.bf16.mxu0 0
      %2140 = vmatpush1.bf16.msra.mxu0 0
      %2141 = vmatprep.subr.bf16.mxu0 0
      %2142 = vmatpush1.bf16.msra.mxu0 0
      %2143 = vmatprep.subr.bf16.mxu0 0
      %2144 = vmatpush1.bf16.msra.mxu0 0
      %2145 = vmatprep.subr.bf16.mxu0 0
      %2146 = vmatpush1.bf16.msra.mxu0 0
      %2147 = vmatprep.subr.bf16.mxu0 0
      %2148 = vmatpush1.bf16.msra.mxu0 0
      %2149 = vmatprep.subr.bf16.mxu0 0
      %2150 = vmatpush1.bf16.msra.mxu0 0
      %2151 = vmatprep.subr.bf16.mxu0 0
      %2152 = vmatpush1.bf16.msra.mxu0 0
      %2153 = vmatprep.subr.bf16.mxu0 0
      %2154 = vmatpush1.bf16.msra.mxu0 0
      %2155 = vmatprep.subr.bf16.mxu0 0
      %2156 = vmatpush1.bf16.msra.mxu0 0
      %2157 = vmatprep.subr.bf16.mxu0 0
      %2158 = vmatpush1.bf16.msra.mxu0 0
      %2159 = vmatprep.subr.bf16.mxu0 0
      %2160 = vmatpush1.bf16.msra.mxu0 0
      %2161 = vmatprep.subr.bf16.mxu0 0
      %2162 = vmatpush1.bf16.msra.mxu0 0
      %2163 = vmatprep.subr.bf16.mxu0 0
      %2164 = vmatpush1.bf16.msra.mxu0 0
      %2165 = vmatprep.subr.bf16.mxu0 0
      %2166 = vmatpush1.bf16.msra.mxu0 0
      %2167 = vmatprep.mubr.bf16.mxu0 0
      %2168 = vmatmul.mubr.bf16.gmra.mrb[0].mxu0 %v2085
      %v2169 = vpop.f32.mrb[0].mxu0
      %v2170 = vadd.f32 0.0, %v2169
      %v2171 = vpop.f32.mrb[0].mxu0
      %v2172 = vpop.f32.mrb[0].mxu0
      %v2173 = vadd.f32 0.0, %v2172
      %v2174 = vpop.f32.mrb[0].mxu0
      %2175 = vmatprep.mubr.bf16.mxu0 0
      %2176 = vmatmul.mubr.bf16.gmra.mrb[0].mxu0 %v2088
      %v2177 = vpop.f32.mrb[0].mxu0
      %v2178 = vadd.f32 0.0, %v2177
      %v2179 = vpop.f32.mrb[0].mxu0
      %v2180 = vpop.f32.mrb[0].mxu0
      %v2181 = vadd.f32 0.0, %v2180
      %v2182 = vpop.f32.mrb[0].mxu0
      %2183 = vmatprep.mubr.bf16.mxu0 0
      %2184 = vmatmul.mubr.bf16.gmra.mrb[0].mxu0 %v2091
      %v2185 = vpop.f32.mrb[0].mxu0
      %v2186 = vadd.f32 0.0, %v2185
      %v2187 = vpop.f32.mrb[0].mxu0
      %v2188 = vpop.f32.mrb[0].mxu0
      %v2189 = vadd.f32 0.0, %v2188
      %v2190 = vpop.f32.mrb[0].mxu0
      %2191 = vmatprep.mubr.bf16.mxu0 0
      %2192 = vmatmul.mubr.bf16.gmra.mrb[0].mxu0 %v2094
      %v2193 = vpop.f32.mrb[0].mxu0
      %v2194 = vadd.f32 0.0, %v2193
      %v2195 = vpop.f32.mrb[0].mxu0
      %v2196 = vpop.f32.mrb[0].mxu0
      %v2197 = vadd.f32 0.0, %v2196
      %v2198 = vpop.f32.mrb[0].mxu0
      %2199 = vmatprep.mubr.bf16.mxu0 0
      %2200 = vmatmul.mubr.bf16.gmra.mrb[0].mxu0 %v2097
      %v2201 = vpop.f32.mrb[0].mxu0
      %v2202 = vadd.f32 0.0, %v2201
      %v2203 = vpop.f32.mrb[0].mxu0
      %v2204 = vpop.f32.mrb[0].mxu0
      %v2205 = vadd.f32 0.0, %v2204
      %v2206 = vpop.f32.mrb[0].mxu0
      %2207 = vmatprep.mubr.bf16.mxu0 0
      %2208 = vmatmul.mubr.bf16.gmra.mrb[0].mxu0 %v2100
      %v2209 = vpop.f32.mrb[0].mxu0
      %v2210 = vadd.f32 0.0, %v2209
      %v2211 = vpop.f32.mrb[0].mxu0
      %v2212 = vpop.f32.mrb[0].mxu0
      %v2213 = vadd.f32 0.0, %v2212
      %v2214 = vpop.f32.mrb[0].mxu0
      %2215 = vmatprep.mubr.bf16.mxu0 0
      %2216 = vmatmul.mubr.bf16.gmra.mrb[0].mxu0 %v2103
      %v2217 = vpop.f32.mrb[0].mxu0
      %v2218 = vadd.f32 0.0, %v2217
      %v2219 = vpop.f32.mrb[0].mxu0
      %v2220 = vpop.f32.mrb[0].mxu0
      %v2221 = vadd.f32 0.0, %v2220
      %v2222 = vpop.f32.mrb[0].mxu0
      %2223 = vmatprep.mubr.bf16.mxu0 0
      %2224 = vmatmul.mubr.bf16.gmra.mrb[0].mxu0 %v2106
      %v2225 = vpop.f32.mrb[0].mxu0
      %v2226 = vadd.f32 0.0, %v2225
      %v2227 = vpop.f32.mrb[0].mxu0
      %v2228 = vpop.f32.mrb[0].mxu0
      %v2229 = vadd.f32 0.0, %v2228
      %v2230 = vpop.f32.mrb[0].mxu0
      %2231 = vmatprep.mubr.bf16.mxu0 0
      %2232 = vmatmul.mubr.bf16.gmra.mrb[0].mxu0 %v2109
      %v2233 = vpop.f32.mrb[0].mxu0
      %v2234 = vadd.f32 0.0, %v2233
      %v2235 = vpop.f32.mrb[0].mxu0
      %v2236 = vpop.f32.mrb[0].mxu0
      %v2237 = vadd.f32 0.0, %v2236
      %v2238 = vpop.f32.mrb[0].mxu0
      %2239 = vmatprep.mubr.bf16.mxu0 0
      %2240 = vmatmul.mubr.bf16.gmra.mrb[0].mxu0 %v2112
      %v2241 = vpop.f32.mrb[0].mxu0
      %v2242 = vadd.f32 0.0, %v2241
      %v2243 = vpop.f32.mrb[0].mxu0
      %v2244 = vpop.f32.mrb[0].mxu0
      %v2245 = vadd.f32 0.0, %v2244
      %v2246 = vpop.f32.mrb[0].mxu0
      %2247 = vmatprep.mubr.bf16.mxu0 0
      %2248 = vmatmul.mubr.bf16.gmra.mrb[0].mxu0 %v2115
      %v2249 = vpop.f32.mrb[0].mxu0
      %v2250 = vadd.f32 0.0, %v2249
      %v2251 = vpop.f32.mrb[0].mxu0
      %v2252 = vpop.f32.mrb[0].mxu0
      %v2253 = vadd.f32 0.0, %v2252
      %v2254 = vpop.f32.mrb[0].mxu0
      %2255 = vmatprep.mubr.bf16.mxu0 0
      %2256 = vmatmul.mubr.bf16.gmra.mrb[0].mxu0 %v2118
      %v2257 = vpop.f32.mrb[0].mxu0
      %v2258 = vadd.f32 0.0, %v2257
      %v2259 = vpop.f32.mrb[0].mxu0
      %v2260 = vpop.f32.mrb[0].mxu0
      %v2261 = vadd.f32 0.0, %v2260
      %v2262 = vpop.f32.mrb[0].mxu0
      %2263 = vmatprep.mubr.bf16.mxu0 0
      %2264 = vmatmul.mubr.bf16.gmra.mrb[0].mxu0 %v2121
      %v2265 = vpop.f32.mrb[0].mxu0
      %v2266 = vadd.f32 0.0, %v2265
      %v2267 = vpop.f32.mrb[0].mxu0
      %v2268 = vpop.f32.mrb[0].mxu0
      %v2269 = vadd.f32 0.0, %v2268
      %v2270 = vpop.f32.mrb[0].mxu0
      %2271 = vmatprep.mubr.bf16.mxu0 0
      %2272 = vmatmul.mubr.bf16.gmra.mrb[0].mxu0 %v2124
      %v2273 = vpop.f32.mrb[0].mxu0
      %v2274 = vadd.f32 0.0, %v2273
      %v2275 = vpop.f32.mrb[0].mxu0
      %v2276 = vpop.f32.mrb[0].mxu0
      %v2277 = vadd.f32 0.0, %v2276
      %v2278 = vpop.f32.mrb[0].mxu0
      %2279 = vmatprep.mubr.bf16.mxu0 0
      %2280 = vmatmul.mubr.bf16.gmra.mrb[0].mxu0 %v2127
      %v2281 = vpop.f32.mrb[0].mxu0
      %v2282 = vadd.f32 0.0, %v2281
      %v2283 = vpop.f32.mrb[0].mxu0
      %v2284 = vpop.f32.mrb[0].mxu0
      %v2285 = vadd.f32 0.0, %v2284
      %v2286 = vpop.f32.mrb[0].mxu0
      %2287 = vmatprep.mubr.bf16.mxu0 0
      %2288 = vmatmul.mubr.bf16.gmra.mrb[0].mxu0 %v2130
      %v2289 = vpop.f32.mrb[0].mxu0
      %v2290 = vadd.f32 0.0, %v2289
      %v2291 = vpop.f32.mrb[0].mxu0
      %v2292 = vpop.f32.mrb[0].mxu0
      %v2293 = vadd.f32 0.0, %v2292
      %v2294 = vpop.f32.mrb[0].mxu0
      %2295 = vdwg.mxu0
      %v2296 = vadd.f32 %v2034, %v2170
      %v2297 = vadd.f32 %v2035, %v2173
      %v2298 = vadd.f32 %v2036, %v2178
      %v2299 = vadd.f32 %v2037, %v2181
      %v2300 = vadd.f32 %v2038, %v2186
      %v2301 = vadd.f32 %v2039, %v2189
      %v2302 = vadd.f32 %v2040, %v2194
      %v2303 = vadd.f32 %v2041, %v2197
      %v2304 = vadd.f32 %v2042, %v2202
      %v2305 = vadd.f32 %v2043, %v2205
      %v2306 = vadd.f32 %v2044, %v2210
      %v2307 = vadd.f32 %v2045, %v2213
      %v2308 = vadd.f32 %v2046, %v2218
      %v2309 = vadd.f32 %v2047, %v2221
      %v2310 = vadd.f32 %v2048, %v2226
      %v2311 = vadd.f32 %v2049, %v2229
      %v2312 = vadd.f32 %v2050, %v2234
      %v2313 = vadd.f32 %v2051, %v2237
      %v2314 = vadd.f32 %v2052, %v2242
      %v2315 = vadd.f32 %v2053, %v2245
      %v2316 = vadd.f32 %v2054, %v2250
      %v2317 = vadd.f32 %v2055, %v2253
      %v2318 = vadd.f32 %v2056, %v2258
      %v2319 = vadd.f32 %v2057, %v2261
      %v2320 = vadd.f32 %v2058, %v2266
      %v2321 = vadd.f32 %v2059, %v2269
      %v2322 = vadd.f32 %v2060, %v2274
      %v2323 = vadd.f32 %v2061, %v2277
      %v2324 = vadd.f32 %v2062, %v2282
      %v2325 = vadd.f32 %v2063, %v2285
      %v2326 = vadd.f32 %v2064, %v2290
      %v2327 = vadd.f32 %v2065, %v2293
      %v2328 = vpack.c.bf16 %v1229, %v1228
      %v2329 = vpack.c.bf16 %v1231, %v1230
      %s2330 = scalar_lea.vmem %s2, 8
      %v2331 = vld [vmem:[%s2330] sm:$0x3]
      %v2333 = vsel %vm380, %v2328, 0
      %v2336 = vsel %vm380, %v2329, 0
      %v2339 = vsel %vm1427, %v2331, 0
      %2341 = vmatprep.subr.bf16.mxu0 0
      %2342 = vmatpush1.bf16.msra.mxu0 %v2339
      %2343 = vmatprep.subr.bf16.mxu0 0
      %2344 = vmatpush1.bf16.msra.mxu0 0
      %2345 = vmatprep.subr.bf16.mxu0 0
      %2346 = vmatpush1.bf16.msra.mxu0 0
      %2347 = vmatprep.subr.bf16.mxu0 0
      %2348 = vmatpush1.bf16.msra.mxu0 0
      %2349 = vmatprep.subr.bf16.mxu0 0
      %2350 = vmatpush1.bf16.msra.mxu0 0
      %2351 = vmatprep.subr.bf16.mxu0 0
      %2352 = vmatpush1.bf16.msra.mxu0 0
      %2353 = vmatprep.subr.bf16.mxu0 0
      %2354 = vmatpush1.bf16.msra.mxu0 0
      %2355 = vmatprep.subr.bf16.mxu0 0
      %2356 = vmatpush1.bf16.msra.mxu0 0
      %2357 = vmatprep.subr.bf16.mxu0 0
      %2358 = vmatpush1.bf16.msra.mxu0 0
      %2359 = vmatprep.subr.bf16.mxu0 0
      %2360 = vmatpush1.bf16.msra.mxu0 0
      %2361 = vmatprep.subr.bf16.mxu0 0
      %2362 = vmatpush1.bf16.msra.mxu0 0
      %2363 = vmatprep.subr.bf16.mxu0 0
      %2364 = vmatpush1.bf16.msra.mxu0 0
      %2365 = vmatprep.subr.bf16.mxu0 0
      %2366 = vmatpush1.bf16.msra.mxu0 0
      %2367 = vmatprep.subr.bf16.mxu0 0
      %2368 = vmatpush1.bf16.msra.mxu0 0
      %2369 = vmatprep.subr.bf16.mxu0 0
      %2370 = vmatpush1.bf16.msra.mxu0 0
      %2371 = vmatprep.subr.bf16.mxu0 0
      %2372 = vmatpush1.bf16.msra.mxu0 0
      %2373 = vmatprep.mubr.bf16.mxu0 0
      %2374 = vmatmul.mubr.bf16.gmra.mrb[0].mxu0 %v1386
      %v2375 = vpop.f32.mrb[0].mxu0
      %v2376 = vadd.f32 0.0, %v2375
      %v2377 = vpop.f32.mrb[0].mxu0
      %v2378 = vpop.f32.mrb[0].mxu0
      %v2379 = vadd.f32 0.0, %v2378
      %v2380 = vpop.f32.mrb[0].mxu0
      %2381 = vmatprep.mubr.bf16.mxu0 0
      %2382 = vmatmul.mubr.bf16.gmra.mrb[0].mxu0 %v1389
      %v2383 = vpop.f32.mrb[0].mxu0
      %v2384 = vadd.f32 0.0, %v2383
      %v2385 = vpop.f32.mrb[0].mxu0
      %v2386 = vpop.f32.mrb[0].mxu0
      %v2387 = vadd.f32 0.0, %v2386
      %v2388 = vpop.f32.mrb[0].mxu0
      %2389 = vmatprep.mubr.bf16.mxu0 0
      %2390 = vmatmul.mubr.bf16.gmra.mrb[0].mxu0 %v1392
      %v2391 = vpop.f32.mrb[0].mxu0
      %v2392 = vadd.f32 0.0, %v2391
      %v2393 = vpop.f32.mrb[0].mxu0
      %v2394 = vpop.f32.mrb[0].mxu0
      %v2395 = vadd.f32 0.0, %v2394
      %v2396 = vpop.f32.mrb[0].mxu0
      %2397 = vmatprep.mubr.bf16.mxu0 0
      %2398 = vmatmul.mubr.bf16.gmra.mrb[0].mxu0 %v1395
      %v2399 = vpop.f32.mrb[0].mxu0
      %v2400 = vadd.f32 0.0, %v2399
      %v2401 = vpop.f32.mrb[0].mxu0
      %v2402 = vpop.f32.mrb[0].mxu0
      %v2403 = vadd.f32 0.0, %v2402
      %v2404 = vpop.f32.mrb[0].mxu0
      %2405 = vmatprep.mubr.bf16.mxu0 0
      %2406 = vmatmul.mubr.bf16.gmra.mrb[0].mxu0 %v1398
      %v2407 = vpop.f32.mrb[0].mxu0
      %v2408 = vadd.f32 0.0, %v2407
      %v2409 = vpop.f32.mrb[0].mxu0
      %v2410 = vpop.f32.mrb[0].mxu0
      %v2411 = vadd.f32 0.0, %v2410
      %v2412 = vpop.f32.mrb[0].mxu0
      %2413 = vmatprep.mubr.bf16.mxu0 0
      %2414 = vmatmul.mubr.bf16.gmra.mrb[0].mxu0 %v1401
      %v2415 = vpop.f32.mrb[0].mxu0
      %v2416 = vadd.f32 0.0, %v2415
      %v2417 = vpop.f32.mrb[0].mxu0
      %v2418 = vpop.f32.mrb[0].mxu0
      %v2419 = vadd.f32 0.0, %v2418
      %v2420 = vpop.f32.mrb[0].mxu0
      %2421 = vmatprep.mubr.bf16.mxu0 0
      %2422 = vmatmul.mubr.bf16.gmra.mrb[0].mxu0 %v1404
      %v2423 = vpop.f32.mrb[0].mxu0
      %v2424 = vadd.f32 0.0, %v2423
      %v2425 = vpop.f32.mrb[0].mxu0
      %v2426 = vpop.f32.mrb[0].mxu0
      %v2427 = vadd.f32 0.0, %v2426
      %v2428 = vpop.f32.mrb[0].mxu0
      %2429 = vmatprep.mubr.bf16.mxu0 0
      %2430 = vmatmul.mubr.bf16.gmra.mrb[0].mxu0 %v1407
      %v2431 = vpop.f32.mrb[0].mxu0
      %v2432 = vadd.f32 0.0, %v2431
      %v2433 = vpop.f32.mrb[0].mxu0
      %v2434 = vpop.f32.mrb[0].mxu0
      %v2435 = vadd.f32 0.0, %v2434
      %v2436 = vpop.f32.mrb[0].mxu0
      %2437 = vmatprep.mubr.bf16.mxu0 0
      %2438 = vmatmul.mubr.bf16.gmra.mrb[0].mxu0 %v1410
      %v2439 = vpop.f32.mrb[0].mxu0
      %v2440 = vadd.f32 0.0, %v2439
      %v2441 = vpop.f32.mrb[0].mxu0
      %v2442 = vpop.f32.mrb[0].mxu0
      %v2443 = vadd.f32 0.0, %v2442
      %v2444 = vpop.f32.mrb[0].mxu0
      %2445 = vmatprep.mubr.bf16.mxu0 0
      %2446 = vmatmul.mubr.bf16.gmra.mrb[0].mxu0 %v1413
      %v2447 = vpop.f32.mrb[0].mxu0
      %v2448 = vadd.f32 0.0, %v2447
      %v2449 = vpop.f32.mrb[0].mxu0
      %v2450 = vpop.f32.mrb[0].mxu0
      %v2451 = vadd.f32 0.0, %v2450
      %v2452 = vpop.f32.mrb[0].mxu0
      %2453 = vmatprep.mubr.bf16.mxu0 0
      %2454 = vmatmul.mubr.bf16.gmra.mrb[0].mxu0 %v1416
      %v2455 = vpop.f32.mrb[0].mxu0
      %v2456 = vadd.f32 0.0, %v2455
      %v2457 = vpop.f32.mrb[0].mxu0
      %v2458 = vpop.f32.mrb[0].mxu0
      %v2459 = vadd.f32 0.0, %v2458
      %v2460 = vpop.f32.mrb[0].mxu0
      %2461 = vmatprep.mubr.bf16.mxu0 0
      %2462 = vmatmul.mubr.bf16.gmra.mrb[0].mxu0 %v1419
      %v2463 = vpop.f32.mrb[0].mxu0
      %v2464 = vadd.f32 0.0, %v2463
      %v2465 = vpop.f32.mrb[0].mxu0
      %v2466 = vpop.f32.mrb[0].mxu0
      %v2467 = vadd.f32 0.0, %v2466
      %v2468 = vpop.f32.mrb[0].mxu0
      %2469 = vmatprep.mubr.bf16.mxu0 0
      %2470 = vmatmul.mubr.bf16.gmra.mrb[0].mxu0 %v1422
      %v2471 = vpop.f32.mrb[0].mxu0
      %v2472 = vadd.f32 0.0, %v2471
      %v2473 = vpop.f32.mrb[0].mxu0
      %v2474 = vpop.f32.mrb[0].mxu0
      %v2475 = vadd.f32 0.0, %v2474
      %v2476 = vpop.f32.mrb[0].mxu0
      %2477 = vmatprep.mubr.bf16.mxu0 0
      %2478 = vmatmul.mubr.bf16.gmra.mrb[0].mxu0 %v1425
      %v2479 = vpop.f32.mrb[0].mxu0
      %v2480 = vadd.f32 0.0, %v2479
      %v2481 = vpop.f32.mrb[0].mxu0
      %v2482 = vpop.f32.mrb[0].mxu0
      %v2483 = vadd.f32 0.0, %v2482
      %v2484 = vpop.f32.mrb[0].mxu0
      %2485 = vmatprep.mubr.bf16.mxu0 0
      %2486 = vmatmul.mubr.bf16.gmra.mrb[0].mxu0 %v2333
      %v2487 = vpop.f32.mrb[0].mxu0
      %v2488 = vadd.f32 0.0, %v2487
      %v2489 = vpop.f32.mrb[0].mxu0
      %v2490 = vpop.f32.mrb[0].mxu0
      %v2491 = vadd.f32 0.0, %v2490
      %v2492 = vpop.f32.mrb[0].mxu0
      %2493 = vmatprep.mubr.bf16.mxu0 0
      %2494 = vmatmul.mubr.bf16.gmra.mrb[0].mxu0 %v2336
      %v2495 = vpop.f32.mrb[0].mxu0
      %v2496 = vadd.f32 0.0, %v2495
      %v2497 = vpop.f32.mrb[0].mxu0
      %v2498 = vpop.f32.mrb[0].mxu0
      %v2499 = vadd.f32 0.0, %v2498
      %v2500 = vpop.f32.mrb[0].mxu0
      %2501 = vdwg.mxu0
      %v2502 = vadd.f32 %v2296, %v2376
      %v2503 = vadd.f32 %v2297, %v2379
      %v2504 = vadd.f32 %v2298, %v2384
      %v2505 = vadd.f32 %v2299, %v2387
      %v2506 = vadd.f32 %v2300, %v2392
      %v2507 = vadd.f32 %v2301, %v2395
      %v2508 = vadd.f32 %v2302, %v2400
      %v2509 = vadd.f32 %v2303, %v2403
      %v2510 = vadd.f32 %v2304, %v2408
      %v2511 = vadd.f32 %v2305, %v2411
      %v2512 = vadd.f32 %v2306, %v2416
      %v2513 = vadd.f32 %v2307, %v2419
      %v2514 = vadd.f32 %v2308, %v2424
      %v2515 = vadd.f32 %v2309, %v2427
      %v2516 = vadd.f32 %v2310, %v2432
      %v2517 = vadd.f32 %v2311, %v2435
      %v2518 = vadd.f32 %v2312, %v2440
      %v2519 = vadd.f32 %v2313, %v2443
      %v2520 = vadd.f32 %v2314, %v2448
      %v2521 = vadd.f32 %v2315, %v2451
      %v2522 = vadd.f32 %v2316, %v2456
      %v2523 = vadd.f32 %v2317, %v2459
      %v2524 = vadd.f32 %v2318, %v2464
      %v2525 = vadd.f32 %v2319, %v2467
      %v2526 = vadd.f32 %v2320, %v2472
      %v2527 = vadd.f32 %v2321, %v2475
      %v2528 = vadd.f32 %v2322, %v2480
      %v2529 = vadd.f32 %v2323, %v2483
      %v2530 = vadd.f32 %v2324, %v2488
      %v2531 = vadd.f32 %v2325, %v2491
      %v2532 = vadd.f32 %v2326, %v2496
      %v2533 = vadd.f32 %v2327, %v2499
      %v2534 = vpack.c.bf16 %v1237, %v1236
      %v2535 = vpack.c.bf16 %v1239, %v1238
      %v2536 = vpack.c.bf16 %v1241, %v1240
      %v2537 = vpack.c.bf16 %v1243, %v1242
      %v2538 = vpack.c.bf16 %v1245, %v1244
      %v2539 = vpack.c.bf16 %v1247, %v1246
      %v2540 = vpack.c.bf16 %v1249, %v1248
      %v2541 = vpack.c.bf16 %v1251, %v1250
      %v2542 = vpack.c.bf16 %v1253, %v1252
      %v2543 = vpack.c.bf16 %v1255, %v1254
      %v2544 = vpack.c.bf16 %v1257, %v1256
      %v2545 = vpack.c.bf16 %v1259, %v1258
      %v2546 = vpack.c.bf16 %v1261, %v1260
      %v2547 = vpack.c.bf16 %v1263, %v1262
      %v2548 = vpack.c.bf16 %v1265, %v1264
      %v2549 = vpack.c.bf16 %v1267, %v1266
      %s2550 = scalar_lea.vmem %s2, 10
      %v2551 = vld [vmem:[%s2550] sm:$0x3]
      %v2553 = vsel %vm380, %v2534, 0
      %v2556 = vsel %vm380, %v2535, 0
      %v2559 = vsel %vm380, %v2536, 0
      %v2562 = vsel %vm380, %v2537, 0
      %v2565 = vsel %vm380, %v2538, 0
      %v2568 = vsel %vm380, %v2539, 0
      %v2571 = vsel %vm380, %v2540, 0
      %v2574 = vsel %vm380, %v2541, 0
      %v2577 = vsel %vm380, %v2542, 0
      %v2580 = vsel %vm380, %v2543, 0
      %v2583 = vsel %vm380, %v2544, 0
      %v2586 = vsel %vm380, %v2545, 0
      %v2589 = vsel %vm380, %v2546, 0
      %v2592 = vsel %vm380, %v2547, 0
      %v2595 = vsel %vm380, %v2548, 0
      %v2598 = vsel %vm380, %v2549, 0
      %v2601 = vsel %vm1427, %v2551, 0
      %2603 = vmatprep.subr.bf16.mxu0 0
      %2604 = vmatpush1.bf16.msra.mxu0 %v2601
      %2605 = vmatprep.subr.bf16.mxu0 0
      %2606 = vmatpush1.bf16.msra.mxu0 0
      %2607 = vmatprep.subr.bf16.mxu0 0
      %2608 = vmatpush1.bf16.msra.mxu0 0
      %2609 = vmatprep.subr.bf16.mxu0 0
      %2610 = vmatpush1.bf16.msra.mxu0 0
      %2611 = vmatprep.subr.bf16.mxu0 0
      %2612 = vmatpush1.bf16.msra.mxu0 0
      %2613 = vmatprep.subr.bf16.mxu0 0
      %2614 = vmatpush1.bf16.msra.mxu0 0
      %2615 = vmatprep.subr.bf16.mxu0 0
      %2616 = vmatpush1.bf16.msra.mxu0 0
      %2617 = vmatprep.subr.bf16.mxu0 0
      %2618 = vmatpush1.bf16.msra.mxu0 0
      %2619 = vmatprep.subr.bf16.mxu0 0
      %2620 = vmatpush1.bf16.msra.mxu0 0
      %2621 = vmatprep.subr.bf16.mxu0 0
      %2622 = vmatpush1.bf16.msra.mxu0 0
      %2623 = vmatprep.subr.bf16.mxu0 0
      %2624 = vmatpush1.bf16.msra.mxu0 0
      %2625 = vmatprep.subr.bf16.mxu0 0
      %2626 = vmatpush1.bf16.msra.mxu0 0
      %2627 = vmatprep.subr.bf16.mxu0 0
      %2628 = vmatpush1.bf16.msra.mxu0 0
      %2629 = vmatprep.subr.bf16.mxu0 0
      %2630 = vmatpush1.bf16.msra.mxu0 0
      %2631 = vmatprep.subr.bf16.mxu0 0
      %2632 = vmatpush1.bf16.msra.mxu0 0
      %2633 = vmatprep.subr.bf16.mxu0 0
      %2634 = vmatpush1.bf16.msra.mxu0 0
      %2635 = vmatprep.mubr.bf16.mxu0 0
      %2636 = vmatmul.mubr.bf16.gmra.mrb[0].mxu0 %v2553
      %v2637 = vpop.f32.mrb[0].mxu0
      %v2638 = vadd.f32 0.0, %v2637
      %v2639 = vpop.f32.mrb[0].mxu0
      %v2640 = vpop.f32.mrb[0].mxu0
      %v2641 = vadd.f32 0.0, %v2640
      %v2642 = vpop.f32.mrb[0].mxu0
      %2643 = vmatprep.mubr.bf16.mxu0 0
      %2644 = vmatmul.mubr.bf16.gmra.mrb[0].mxu0 %v2556
      %v2645 = vpop.f32.mrb[0].mxu0
      %v2646 = vadd.f32 0.0, %v2645
      %v2647 = vpop.f32.mrb[0].mxu0
      %v2648 = vpop.f32.mrb[0].mxu0
      %v2649 = vadd.f32 0.0, %v2648
      %v2650 = vpop.f32.mrb[0].mxu0
      %2651 = vmatprep.mubr.bf16.mxu0 0
      %2652 = vmatmul.mubr.bf16.gmra.mrb[0].mxu0 %v2559
      %v2653 = vpop.f32.mrb[0].mxu0
      %v2654 = vadd.f32 0.0, %v2653
      %v2655 = vpop.f32.mrb[0].mxu0
      %v2656 = vpop.f32.mrb[0].mxu0
      %v2657 = vadd.f32 0.0, %v2656
      %v2658 = vpop.f32.mrb[0].mxu0
      %2659 = vmatprep.mubr.bf16.mxu0 0
      %2660 = vmatmul.mubr.bf16.gmra.mrb[0].mxu0 %v2562
      %v2661 = vpop.f32.mrb[0].mxu0
      %v2662 = vadd.f32 0.0, %v2661
      %v2663 = vpop.f32.mrb[0].mxu0
      %v2664 = vpop.f32.mrb[0].mxu0
      %v2665 = vadd.f32 0.0, %v2664
      %v2666 = vpop.f32.mrb[0].mxu0
      %2667 = vmatprep.mubr.bf16.mxu0 0
      %2668 = vmatmul.mubr.bf16.gmra.mrb[0].mxu0 %v2565
      %v2669 = vpop.f32.mrb[0].mxu0
      %v2670 = vadd.f32 0.0, %v2669
      %v2671 = vpop.f32.mrb[0].mxu0
      %v2672 = vpop.f32.mrb[0].mxu0
      %v2673 = vadd.f32 0.0, %v2672
      %v2674 = vpop.f32.mrb[0].mxu0
      %2675 = vmatprep.mubr.bf16.mxu0 0
      %2676 = vmatmul.mubr.bf16.gmra.mrb[0].mxu0 %v2568
      %v2677 = vpop.f32.mrb[0].mxu0
      %v2678 = vadd.f32 0.0, %v2677
      %v2679 = vpop.f32.mrb[0].mxu0
      %v2680 = vpop.f32.mrb[0].mxu0
      %v2681 = vadd.f32 0.0, %v2680
      %v2682 = vpop.f32.mrb[0].mxu0
      %2683 = vmatprep.mubr.bf16.mxu0 0
      %2684 = vmatmul.mubr.bf16.gmra.mrb[0].mxu0 %v2571
      %v2685 = vpop.f32.mrb[0].mxu0
      %v2686 = vadd.f32 0.0, %v2685
      %v2687 = vpop.f32.mrb[0].mxu0
      %v2688 = vpop.f32.mrb[0].mxu0
      %v2689 = vadd.f32 0.0, %v2688
      %v2690 = vpop.f32.mrb[0].mxu0
      %2691 = vmatprep.mubr.bf16.mxu0 0
      %2692 = vmatmul.mubr.bf16.gmra.mrb[0].mxu0 %v2574
      %v2693 = vpop.f32.mrb[0].mxu0
      %v2694 = vadd.f32 0.0, %v2693
      %v2695 = vpop.f32.mrb[0].mxu0
      %v2696 = vpop.f32.mrb[0].mxu0
      %v2697 = vadd.f32 0.0, %v2696
      %v2698 = vpop.f32.mrb[0].mxu0
      %2699 = vmatprep.mubr.bf16.mxu0 0
      %2700 = vmatmul.mubr.bf16.gmra.mrb[0].mxu0 %v2577
      %v2701 = vpop.f32.mrb[0].mxu0
      %v2702 = vadd.f32 0.0, %v2701
      %v2703 = vpop.f32.mrb[0].mxu0
      %v2704 = vpop.f32.mrb[0].mxu0
      %v2705 = vadd.f32 0.0, %v2704
      %v2706 = vpop.f32.mrb[0].mxu0
      %2707 = vmatprep.mubr.bf16.mxu0 0
      %2708 = vmatmul.mubr.bf16.gmra.mrb[0].mxu0 %v2580
      %v2709 = vpop.f32.mrb[0].mxu0
      %v2710 = vadd.f32 0.0, %v2709
      %v2711 = vpop.f32.mrb[0].mxu0
      %v2712 = vpop.f32.mrb[0].mxu0
      %v2713 = vadd.f32 0.0, %v2712
      %v2714 = vpop.f32.mrb[0].mxu0
      %2715 = vmatprep.mubr.bf16.mxu0 0
      %2716 = vmatmul.mubr.bf16.gmra.mrb[0].mxu0 %v2583
      %v2717 = vpop.f32.mrb[0].mxu0
      %v2718 = vadd.f32 0.0, %v2717
      %v2719 = vpop.f32.mrb[0].mxu0
      %v2720 = vpop.f32.mrb[0].mxu0
      %v2721 = vadd.f32 0.0, %v2720
      %v2722 = vpop.f32.mrb[0].mxu0
      %2723 = vmatprep.mubr.bf16.mxu0 0
      %2724 = vmatmul.mubr.bf16.gmra.mrb[0].mxu0 %v2586
      %v2725 = vpop.f32.mrb[0].mxu0
      %v2726 = vadd.f32 0.0, %v2725
      %v2727 = vpop.f32.mrb[0].mxu0
      %v2728 = vpop.f32.mrb[0].mxu0
      %v2729 = vadd.f32 0.0, %v2728
      %v2730 = vpop.f32.mrb[0].mxu0
      %2731 = vmatprep.mubr.bf16.mxu0 0
      %2732 = vmatmul.mubr.bf16.gmra.mrb[0].mxu0 %v2589
      %v2733 = vpop.f32.mrb[0].mxu0
      %v2734 = vadd.f32 0.0, %v2733
      %v2735 = vpop.f32.mrb[0].mxu0
      %v2736 = vpop.f32.mrb[0].mxu0
      %v2737 = vadd.f32 0.0, %v2736
      %v2738 = vpop.f32.mrb[0].mxu0
      %2739 = vmatprep.mubr.bf16.mxu0 0
      %2740 = vmatmul.mubr.bf16.gmra.mrb[0].mxu0 %v2592
      %v2741 = vpop.f32.mrb[0].mxu0
      %v2742 = vadd.f32 0.0, %v2741
      %v2743 = vpop.f32.mrb[0].mxu0
      %v2744 = vpop.f32.mrb[0].mxu0
      %v2745 = vadd.f32 0.0, %v2744
      %v2746 = vpop.f32.mrb[0].mxu0
      %2747 = vmatprep.mubr.bf16.mxu0 0
      %2748 = vmatmul.mubr.bf16.gmra.mrb[0].mxu0 %v2595
      %v2749 = vpop.f32.mrb[0].mxu0
      %v2750 = vadd.f32 0.0, %v2749
      %v2751 = vpop.f32.mrb[0].mxu0
      %v2752 = vpop.f32.mrb[0].mxu0
      %v2753 = vadd.f32 0.0, %v2752
      %v2754 = vpop.f32.mrb[0].mxu0
      %2755 = vmatprep.mubr.bf16.mxu0 0
      %2756 = vmatmul.mubr.bf16.gmra.mrb[0].mxu0 %v2598
      %v2757 = vpop.f32.mrb[0].mxu0
      %v2758 = vadd.f32 0.0, %v2757
      %v2759 = vpop.f32.mrb[0].mxu0
      %v2760 = vpop.f32.mrb[0].mxu0
      %v2761 = vadd.f32 0.0, %v2760
      %v2762 = vpop.f32.mrb[0].mxu0
      %2763 = vdwg.mxu0
      %v2764 = vadd.f32 %v2502, %v2638
      %v2765 = vadd.f32 %v2503, %v2641
      %v2766 = vadd.f32 %v2504, %v2646
      %v2767 = vadd.f32 %v2505, %v2649
      %v2768 = vadd.f32 %v2506, %v2654
      %v2769 = vadd.f32 %v2507, %v2657
      %v2770 = vadd.f32 %v2508, %v2662
      %v2771 = vadd.f32 %v2509, %v2665
      %v2772 = vadd.f32 %v2510, %v2670
      %v2773 = vadd.f32 %v2511, %v2673
      %v2774 = vadd.f32 %v2512, %v2678
      %v2775 = vadd.f32 %v2513, %v2681
      %v2776 = vadd.f32 %v2514, %v2686
      %v2777 = vadd.f32 %v2515, %v2689
      %v2778 = vadd.f32 %v2516, %v2694
      %v2779 = vadd.f32 %v2517, %v2697
      %v2780 = vadd.f32 %v2518, %v2702
      %v2781 = vadd.f32 %v2519, %v2705
      %v2782 = vadd.f32 %v2520, %v2710
      %v2783 = vadd.f32 %v2521, %v2713
      %v2784 = vadd.f32 %v2522, %v2718
      %v2785 = vadd.f32 %v2523, %v2721
      %v2786 = vadd.f32 %v2524, %v2726
      %v2787 = vadd.f32 %v2525, %v2729
      %v2788 = vadd.f32 %v2526, %v2734
      %v2789 = vadd.f32 %v2527, %v2737
      %v2790 = vadd.f32 %v2528, %v2742
      %v2791 = vadd.f32 %v2529, %v2745
      %v2792 = vadd.f32 %v2530, %v2750
      %v2793 = vadd.f32 %v2531, %v2753
      %v2794 = vadd.f32 %v2532, %v2758
      %v2795 = vadd.f32 %v2533, %v2761
      %v2796 = vpack.c.bf16 %v1273, %v1272
      %v2797 = vpack.c.bf16 %v1275, %v1274
      %v2798 = vpack.c.bf16 %v1277, %v1276
      %v2799 = vpack.c.bf16 %v1279, %v1278
      %v2800 = vpack.c.bf16 %v1281, %v1280
      %v2801 = vpack.c.bf16 %v1283, %v1282
      %v2802 = vpack.c.bf16 %v1285, %v1284
      %v2803 = vpack.c.bf16 %v1287, %v1286
      %v2804 = vpack.c.bf16 %v1289, %v1288
      %v2805 = vpack.c.bf16 %v1291, %v1290
      %v2806 = vpack.c.bf16 %v1293, %v1292
      %v2807 = vpack.c.bf16 %v1295, %v1294
      %v2808 = vpack.c.bf16 %v1297, %v1296
      %v2809 = vpack.c.bf16 %v1299, %v1298
      %v2810 = vpack.c.bf16 %v1301, %v1300
      %v2811 = vpack.c.bf16 %v1303, %v1302
      %s2812 = scalar_lea.vmem %s2, 12
      %v2813 = vld [vmem:[%s2812] sm:$0x3]
      %v2815 = vsel %vm380, %v2796, 0
      %v2818 = vsel %vm380, %v2797, 0
      %v2821 = vsel %vm380, %v2798, 0
      %v2824 = vsel %vm380, %v2799, 0
      %v2827 = vsel %vm380, %v2800, 0
      %v2830 = vsel %vm380, %v2801, 0
      %v2833 = vsel %vm380, %v2802, 0
      %v2836 = vsel %vm380, %v2803, 0
      %v2839 = vsel %vm380, %v2804, 0
      %v2842 = vsel %vm380, %v2805, 0
      %v2845 = vsel %vm380, %v2806, 0
      %v2848 = vsel %vm380, %v2807, 0
      %v2851 = vsel %vm380, %v2808, 0
      %v2854 = vsel %vm380, %v2809, 0
      %v2857 = vsel %vm380, %v2810, 0
      %v2860 = vsel %vm380, %v2811, 0
      %v2863 = vsel %vm1427, %v2813, 0
      %2865 = vmatprep.subr.bf16.mxu0 0
      %2866 = vmatpush1.bf16.msra.mxu0 %v2863
      %2867 = vmatprep.subr.bf16.mxu0 0
      %2868 = vmatpush1.bf16.msra.mxu0 0
      %2869 = vmatprep.subr.bf16.mxu0 0
      %2870 = vmatpush1.bf16.msra.mxu0 0
      %2871 = vmatprep.subr.bf16.mxu0 0
      %2872 = vmatpush1.bf16.msra.mxu0 0
      %2873 = vmatprep.subr.bf16.mxu0 0
      %2874 = vmatpush1.bf16.msra.mxu0 0
      %2875 = vmatprep.subr.bf16.mxu0 0
      %2876 = vmatpush1.bf16.msra.mxu0 0
      %2877 = vmatprep.subr.bf16.mxu0 0
      %2878 = vmatpush1.bf16.msra.mxu0 0
      %2879 = vmatprep.subr.bf16.mxu0 0
      %2880 = vmatpush1.bf16.msra.mxu0 0
      %2881 = vmatprep.subr.bf16.mxu0 0
      %2882 = vmatpush1.bf16.msra.mxu0 0
      %2883 = vmatprep.subr.bf16.mxu0 0
      %2884 = vmatpush1.bf16.msra.mxu0 0
      %2885 = vmatprep.subr.bf16.mxu0 0
      %2886 = vmatpush1.bf16.msra.mxu0 0
      %2887 = vmatprep.subr.bf16.mxu0 0
      %2888 = vmatpush1.bf16.msra.mxu0 0
      %2889 = vmatprep.subr.bf16.mxu0 0
      %2890 = vmatpush1.bf16.msra.mxu0 0
      %2891 = vmatprep.subr.bf16.mxu0 0
      %2892 = vmatpush1.bf16.msra.mxu0 0
      %2893 = vmatprep.subr.bf16.mxu0 0
      %2894 = vmatpush1.bf16.msra.mxu0 0
      %2895 = vmatprep.subr.bf16.mxu0 0
      %2896 = vmatpush1.bf16.msra.mxu0 0
      %2897 = vmatprep.mubr.bf16.mxu0 0
      %2898 = vmatmul.mubr.bf16.gmra.mrb[0].mxu0 %v2815
      %v2899 = vpop.f32.mrb[0].mxu0
      %v2900 = vadd.f32 0.0, %v2899
      %v2901 = vpop.f32.mrb[0].mxu0
      %v2902 = vpop.f32.mrb[0].mxu0
      %v2903 = vadd.f32 0.0, %v2902
      %v2904 = vpop.f32.mrb[0].mxu0
      %2905 = vmatprep.mubr.bf16.mxu0 0
      %2906 = vmatmul.mubr.bf16.gmra.mrb[0].mxu0 %v2818
      %v2907 = vpop.f32.mrb[0].mxu0
      %v2908 = vadd.f32 0.0, %v2907
      %v2909 = vpop.f32.mrb[0].mxu0
      %v2910 = vpop.f32.mrb[0].mxu0
      %v2911 = vadd.f32 0.0, %v2910
      %v2912 = vpop.f32.mrb[0].mxu0
      %2913 = vmatprep.mubr.bf16.mxu0 0
      %2914 = vmatmul.mubr.bf16.gmra.mrb[0].mxu0 %v2821
      %v2915 = vpop.f32.mrb[0].mxu0
      %v2916 = vadd.f32 0.0, %v2915
      %v2917 = vpop.f32.mrb[0].mxu0
      %v2918 = vpop.f32.mrb[0].mxu0
      %v2919 = vadd.f32 0.0, %v2918
      %v2920 = vpop.f32.mrb[0].mxu0
      %2921 = vmatprep.mubr.bf16.mxu0 0
      %2922 = vmatmul.mubr.bf16.gmra.mrb[0].mxu0 %v2824
      %v2923 = vpop.f32.mrb[0].mxu0
      %v2924 = vadd.f32 0.0, %v2923
      %v2925 = vpop.f32.mrb[0].mxu0
      %v2926 = vpop.f32.mrb[0].mxu0
      %v2927 = vadd.f32 0.0, %v2926
      %v2928 = vpop.f32.mrb[0].mxu0
      %2929 = vmatprep.mubr.bf16.mxu0 0
      %2930 = vmatmul.mubr.bf16.gmra.mrb[0].mxu0 %v2827
      %v2931 = vpop.f32.mrb[0].mxu0
      %v2932 = vadd.f32 0.0, %v2931
      %v2933 = vpop.f32.mrb[0].mxu0
      %v2934 = vpop.f32.mrb[0].mxu0
      %v2935 = vadd.f32 0.0, %v2934
      %v2936 = vpop.f32.mrb[0].mxu0
      %2937 = vmatprep.mubr.bf16.mxu0 0
      %2938 = vmatmul.mubr.bf16.gmra.mrb[0].mxu0 %v2830
      %v2939 = vpop.f32.mrb[0].mxu0
      %v2940 = vadd.f32 0.0, %v2939
      %v2941 = vpop.f32.mrb[0].mxu0
      %v2942 = vpop.f32.mrb[0].mxu0
      %v2943 = vadd.f32 0.0, %v2942
      %v2944 = vpop.f32.mrb[0].mxu0
      %2945 = vmatprep.mubr.bf16.mxu0 0
      %2946 = vmatmul.mubr.bf16.gmra.mrb[0].mxu0 %v2833
      %v2947 = vpop.f32.mrb[0].mxu0
      %v2948 = vadd.f32 0.0, %v2947
      %v2949 = vpop.f32.mrb[0].mxu0
      %v2950 = vpop.f32.mrb[0].mxu0
      %v2951 = vadd.f32 0.0, %v2950
      %v2952 = vpop.f32.mrb[0].mxu0
      %2953 = vmatprep.mubr.bf16.mxu0 0
      %2954 = vmatmul.mubr.bf16.gmra.mrb[0].mxu0 %v2836
      %v2955 = vpop.f32.mrb[0].mxu0
      %v2956 = vadd.f32 0.0, %v2955
      %v2957 = vpop.f32.mrb[0].mxu0
      %v2958 = vpop.f32.mrb[0].mxu0
      %v2959 = vadd.f32 0.0, %v2958
      %v2960 = vpop.f32.mrb[0].mxu0
      %2961 = vmatprep.mubr.bf16.mxu0 0
      %2962 = vmatmul.mubr.bf16.gmra.mrb[0].mxu0 %v2839
      %v2963 = vpop.f32.mrb[0].mxu0
      %v2964 = vadd.f32 0.0, %v2963
      %v2965 = vpop.f32.mrb[0].mxu0
      %v2966 = vpop.f32.mrb[0].mxu0
      %v2967 = vadd.f32 0.0, %v2966
      %v2968 = vpop.f32.mrb[0].mxu0
      %2969 = vmatprep.mubr.bf16.mxu0 0
      %2970 = vmatmul.mubr.bf16.gmra.mrb[0].mxu0 %v2842
      %v2971 = vpop.f32.mrb[0].mxu0
      %v2972 = vadd.f32 0.0, %v2971
      %v2973 = vpop.f32.mrb[0].mxu0
      %v2974 = vpop.f32.mrb[0].mxu0
      %v2975 = vadd.f32 0.0, %v2974
      %v2976 = vpop.f32.mrb[0].mxu0
      %2977 = vmatprep.mubr.bf16.mxu0 0
      %2978 = vmatmul.mubr.bf16.gmra.mrb[0].mxu0 %v2845
      %v2979 = vpop.f32.mrb[0].mxu0
      %v2980 = vadd.f32 0.0, %v2979
      %v2981 = vpop.f32.mrb[0].mxu0
      %v2982 = vpop.f32.mrb[0].mxu0
      %v2983 = vadd.f32 0.0, %v2982
      %v2984 = vpop.f32.mrb[0].mxu0
      %2985 = vmatprep.mubr.bf16.mxu0 0
      %2986 = vmatmul.mubr.bf16.gmra.mrb[0].mxu0 %v2848
      %v2987 = vpop.f32.mrb[0].mxu0
      %v2988 = vadd.f32 0.0, %v2987
      %v2989 = vpop.f32.mrb[0].mxu0
      %v2990 = vpop.f32.mrb[0].mxu0
      %v2991 = vadd.f32 0.0, %v2990
      %v2992 = vpop.f32.mrb[0].mxu0
      %2993 = vmatprep.mubr.bf16.mxu0 0
      %2994 = vmatmul.mubr.bf16.gmra.mrb[0].mxu0 %v2851
      %v2995 = vpop.f32.mrb[0].mxu0
      %v2996 = vadd.f32 0.0, %v2995
      %v2997 = vpop.f32.mrb[0].mxu0
      %v2998 = vpop.f32.mrb[0].mxu0
      %v2999 = vadd.f32 0.0, %v2998
      %v3000 = vpop.f32.mrb[0].mxu0
      %3001 = vmatprep.mubr.bf16.mxu0 0
      %3002 = vmatmul.mubr.bf16.gmra.mrb[0].mxu0 %v2854
      %v3003 = vpop.f32.mrb[0].mxu0
      %v3004 = vadd.f32 0.0, %v3003
      %v3005 = vpop.f32.mrb[0].mxu0
      %v3006 = vpop.f32.mrb[0].mxu0
      %v3007 = vadd.f32 0.0, %v3006
      %v3008 = vpop.f32.mrb[0].mxu0
      %3009 = vmatprep.mubr.bf16.mxu0 0
      %3010 = vmatmul.mubr.bf16.gmra.mrb[0].mxu0 %v2857
      %v3011 = vpop.f32.mrb[0].mxu0
      %v3012 = vadd.f32 0.0, %v3011
      %v3013 = vpop.f32.mrb[0].mxu0
      %v3014 = vpop.f32.mrb[0].mxu0
      %v3015 = vadd.f32 0.0, %v3014
      %v3016 = vpop.f32.mrb[0].mxu0
      %3017 = vmatprep.mubr.bf16.mxu0 0
      %3018 = vmatmul.mubr.bf16.gmra.mrb[0].mxu0 %v2860
      %v3019 = vpop.f32.mrb[0].mxu0
      %v3020 = vadd.f32 0.0, %v3019
      %v3021 = vpop.f32.mrb[0].mxu0
      %v3022 = vpop.f32.mrb[0].mxu0
      %v3023 = vadd.f32 0.0, %v3022
      %v3024 = vpop.f32.mrb[0].mxu0
      %3025 = vdwg.mxu0
      %v3026 = vadd.f32 %v2764, %v2900
      %v3027 = vadd.f32 %v2765, %v2903
      %v3028 = vadd.f32 %v2766, %v2908
      %v3029 = vadd.f32 %v2767, %v2911
      %v3030 = vadd.f32 %v2768, %v2916
      %v3031 = vadd.f32 %v2769, %v2919
      %v3032 = vadd.f32 %v2770, %v2924
      %v3033 = vadd.f32 %v2771, %v2927
      %v3034 = vadd.f32 %v2772, %v2932
      %v3035 = vadd.f32 %v2773, %v2935
      %v3036 = vadd.f32 %v2774, %v2940
      %v3037 = vadd.f32 %v2775, %v2943
      %v3038 = vadd.f32 %v2776, %v2948
      %v3039 = vadd.f32 %v2777, %v2951
      %v3040 = vadd.f32 %v2778, %v2956
      %v3041 = vadd.f32 %v2779, %v2959
      %v3042 = vadd.f32 %v2780, %v2964
      %v3043 = vadd.f32 %v2781, %v2967
      %v3044 = vadd.f32 %v2782, %v2972
      %v3045 = vadd.f32 %v2783, %v2975
      %v3046 = vadd.f32 %v2784, %v2980
      %v3047 = vadd.f32 %v2785, %v2983
      %v3048 = vadd.f32 %v2786, %v2988
      %v3049 = vadd.f32 %v2787, %v2991
      %v3050 = vadd.f32 %v2788, %v2996
      %v3051 = vadd.f32 %v2789, %v2999
      %v3052 = vadd.f32 %v2790, %v3004
      %v3053 = vadd.f32 %v2791, %v3007
      %v3054 = vadd.f32 %v2792, %v3012
      %v3055 = vadd.f32 %v2793, %v3015
      %v3056 = vadd.f32 %v2794, %v3020
      %v3057 = vadd.f32 %v2795, %v3023
      %v3058 = vpack.c.bf16 %v1305, %v1304
      %v3059 = vpack.c.bf16 %v1307, %v1306
      %s3060 = scalar_lea.vmem %s2, 14
      %v3061 = vld [vmem:[%s3060] sm:$0x3]
      %v3063 = vsel %vm380, %v3058, 0
      %v3066 = vsel %vm380, %v3059, 0
      %v3069 = vsel %vm1427, %v3061, 0
      %3071 = vmatprep.subr.bf16.mxu0 0
      %3072 = vmatpush1.bf16.msra.mxu0 %v3069
      %3073 = vmatprep.subr.bf16.mxu0 0
      %3074 = vmatpush1.bf16.msra.mxu0 0
      %3075 = vmatprep.subr.bf16.mxu0 0
      %3076 = vmatpush1.bf16.msra.mxu0 0
      %3077 = vmatprep.subr.bf16.mxu0 0
      %3078 = vmatpush1.bf16.msra.mxu0 0
      %3079 = vmatprep.subr.bf16.mxu0 0
      %3080 = vmatpush1.bf16.msra.mxu0 0
      %3081 = vmatprep.subr.bf16.mxu0 0
      %3082 = vmatpush1.bf16.msra.mxu0 0
      %3083 = vmatprep.subr.bf16.mxu0 0
      %3084 = vmatpush1.bf16.msra.mxu0 0
      %3085 = vmatprep.subr.bf16.mxu0 0
      %3086 = vmatpush1.bf16.msra.mxu0 0
      %3087 = vmatprep.subr.bf16.mxu0 0
      %3088 = vmatpush1.bf16.msra.mxu0 0
      %3089 = vmatprep.subr.bf16.mxu0 0
      %3090 = vmatpush1.bf16.msra.mxu0 0
      %3091 = vmatprep.subr.bf16.mxu0 0
      %3092 = vmatpush1.bf16.msra.mxu0 0
      %3093 = vmatprep.subr.bf16.mxu0 0
      %3094 = vmatpush1.bf16.msra.mxu0 0
      %3095 = vmatprep.subr.bf16.mxu0 0
      %3096 = vmatpush1.bf16.msra.mxu0 0
      %3097 = vmatprep.subr.bf16.mxu0 0
      %3098 = vmatpush1.bf16.msra.mxu0 0
      %3099 = vmatprep.subr.bf16.mxu0 0
      %3100 = vmatpush1.bf16.msra.mxu0 0
      %3101 = vmatprep.subr.bf16.mxu0 0
      %3102 = vmatpush1.bf16.msra.mxu0 0
      %3103 = vmatprep.mubr.bf16.mxu0 0
      %3104 = vmatmul.mubr.bf16.gmra.mrb[0].mxu0 %v1392
      %v3105 = vpop.f32.mrb[0].mxu0
      %v3106 = vadd.f32 0.0, %v3105
      %v3107 = vpop.f32.mrb[0].mxu0
      %v3108 = vpop.f32.mrb[0].mxu0
      %v3109 = vadd.f32 0.0, %v3108
      %v3110 = vpop.f32.mrb[0].mxu0
      %3111 = vmatprep.mubr.bf16.mxu0 0
      %3112 = vmatmul.mubr.bf16.gmra.mrb[0].mxu0 %v1395
      %v3113 = vpop.f32.mrb[0].mxu0
      %v3114 = vadd.f32 0.0, %v3113
      %v3115 = vpop.f32.mrb[0].mxu0
      %v3116 = vpop.f32.mrb[0].mxu0
      %v3117 = vadd.f32 0.0, %v3116
      %v3118 = vpop.f32.mrb[0].mxu0
      %3119 = vmatprep.mubr.bf16.mxu0 0
      %3120 = vmatmul.mubr.bf16.gmra.mrb[0].mxu0 %v1398
      %v3121 = vpop.f32.mrb[0].mxu0
      %v3122 = vadd.f32 0.0, %v3121
      %v3123 = vpop.f32.mrb[0].mxu0
      %v3124 = vpop.f32.mrb[0].mxu0
      %v3125 = vadd.f32 0.0, %v3124
      %v3126 = vpop.f32.mrb[0].mxu0
      %3127 = vmatprep.mubr.bf16.mxu0 0
      %3128 = vmatmul.mubr.bf16.gmra.mrb[0].mxu0 %v1401
      %v3129 = vpop.f32.mrb[0].mxu0
      %v3130 = vadd.f32 0.0, %v3129
      %v3131 = vpop.f32.mrb[0].mxu0
      %v3132 = vpop.f32.mrb[0].mxu0
      %v3133 = vadd.f32 0.0, %v3132
      %v3134 = vpop.f32.mrb[0].mxu0
      %3135 = vmatprep.mubr.bf16.mxu0 0
      %3136 = vmatmul.mubr.bf16.gmra.mrb[0].mxu0 %v1404
      %v3137 = vpop.f32.mrb[0].mxu0
      %v3138 = vadd.f32 0.0, %v3137
      %v3139 = vpop.f32.mrb[0].mxu0
      %v3140 = vpop.f32.mrb[0].mxu0
      %v3141 = vadd.f32 0.0, %v3140
      %v3142 = vpop.f32.mrb[0].mxu0
      %3143 = vmatprep.mubr.bf16.mxu0 0
      %3144 = vmatmul.mubr.bf16.gmra.mrb[0].mxu0 %v1407
      %v3145 = vpop.f32.mrb[0].mxu0
      %v3146 = vadd.f32 0.0, %v3145
      %v3147 = vpop.f32.mrb[0].mxu0
      %v3148 = vpop.f32.mrb[0].mxu0
      %v3149 = vadd.f32 0.0, %v3148
      %v3150 = vpop.f32.mrb[0].mxu0
      %3151 = vmatprep.mubr.bf16.mxu0 0
      %3152 = vmatmul.mubr.bf16.gmra.mrb[0].mxu0 %v1410
      %v3153 = vpop.f32.mrb[0].mxu0
      %v3154 = vadd.f32 0.0, %v3153
      %v3155 = vpop.f32.mrb[0].mxu0
      %v3156 = vpop.f32.mrb[0].mxu0
      %v3157 = vadd.f32 0.0, %v3156
      %v3158 = vpop.f32.mrb[0].mxu0
      %3159 = vmatprep.mubr.bf16.mxu0 0
      %3160 = vmatmul.mubr.bf16.gmra.mrb[0].mxu0 %v1413
      %v3161 = vpop.f32.mrb[0].mxu0
      %v3162 = vadd.f32 0.0, %v3161
      %v3163 = vpop.f32.mrb[0].mxu0
      %v3164 = vpop.f32.mrb[0].mxu0
      %v3165 = vadd.f32 0.0, %v3164
      %v3166 = vpop.f32.mrb[0].mxu0
      %3167 = vmatprep.mubr.bf16.mxu0 0
      %3168 = vmatmul.mubr.bf16.gmra.mrb[0].mxu0 %v1416
      %v3169 = vpop.f32.mrb[0].mxu0
      %v3170 = vadd.f32 0.0, %v3169
      %v3171 = vpop.f32.mrb[0].mxu0
      %v3172 = vpop.f32.mrb[0].mxu0
      %v3173 = vadd.f32 0.0, %v3172
      %v3174 = vpop.f32.mrb[0].mxu0
      %3175 = vmatprep.mubr.bf16.mxu0 0
      %3176 = vmatmul.mubr.bf16.gmra.mrb[0].mxu0 %v1419
      %v3177 = vpop.f32.mrb[0].mxu0
      %v3178 = vadd.f32 0.0, %v3177
      %v3179 = vpop.f32.mrb[0].mxu0
      %v3180 = vpop.f32.mrb[0].mxu0
      %v3181 = vadd.f32 0.0, %v3180
      %v3182 = vpop.f32.mrb[0].mxu0
      %3183 = vmatprep.mubr.bf16.mxu0 0
      %3184 = vmatmul.mubr.bf16.gmra.mrb[0].mxu0 %v1422
      %v3185 = vpop.f32.mrb[0].mxu0
      %v3186 = vadd.f32 0.0, %v3185
      %v3187 = vpop.f32.mrb[0].mxu0
      %v3188 = vpop.f32.mrb[0].mxu0
      %v3189 = vadd.f32 0.0, %v3188
      %v3190 = vpop.f32.mrb[0].mxu0
      %3191 = vmatprep.mubr.bf16.mxu0 0
      %3192 = vmatmul.mubr.bf16.gmra.mrb[0].mxu0 %v1425
      %v3193 = vpop.f32.mrb[0].mxu0
      %v3194 = vadd.f32 0.0, %v3193
      %v3195 = vpop.f32.mrb[0].mxu0
      %v3196 = vpop.f32.mrb[0].mxu0
      %v3197 = vadd.f32 0.0, %v3196
      %v3198 = vpop.f32.mrb[0].mxu0
      %3199 = vmatprep.mubr.bf16.mxu0 0
      %3200 = vmatmul.mubr.bf16.gmra.mrb[0].mxu0 %v2333
      %v3201 = vpop.f32.mrb[0].mxu0
      %v3202 = vadd.f32 0.0, %v3201
      %v3203 = vpop.f32.mrb[0].mxu0
      %v3204 = vpop.f32.mrb[0].mxu0
      %v3205 = vadd.f32 0.0, %v3204
      %v3206 = vpop.f32.mrb[0].mxu0
      %3207 = vmatprep.mubr.bf16.mxu0 0
      %3208 = vmatmul.mubr.bf16.gmra.mrb[0].mxu0 %v2336
      %v3209 = vpop.f32.mrb[0].mxu0
      %v3210 = vadd.f32 0.0, %v3209
      %v3211 = vpop.f32.mrb[0].mxu0
      %v3212 = vpop.f32.mrb[0].mxu0
      %v3213 = vadd.f32 0.0, %v3212
      %v3214 = vpop.f32.mrb[0].mxu0
      %3215 = vmatprep.mubr.bf16.mxu0 0
      %3216 = vmatmul.mubr.bf16.gmra.mrb[0].mxu0 %v3063
      %v3217 = vpop.f32.mrb[0].mxu0
      %v3218 = vadd.f32 0.0, %v3217
      %v3219 = vpop.f32.mrb[0].mxu0
      %v3220 = vpop.f32.mrb[0].mxu0
      %v3221 = vadd.f32 0.0, %v3220
      %v3222 = vpop.f32.mrb[0].mxu0
      %3223 = vmatprep.mubr.bf16.mxu0 0
      %3224 = vmatmul.mubr.bf16.gmra.mrb[0].mxu0 %v3066
      %v3225 = vpop.f32.mrb[0].mxu0
      %v3226 = vadd.f32 0.0, %v3225
      %v3227 = vpop.f32.mrb[0].mxu0
      %v3228 = vpop.f32.mrb[0].mxu0
      %v3229 = vadd.f32 0.0, %v3228
      %v3230 = vpop.f32.mrb[0].mxu0
      %3231 = vdwg.mxu0
      %v3232 = vadd.f32 %v3026, %v3106
      %v3233 = vadd.f32 %v3027, %v3109
      %v3234 = vadd.f32 %v3028, %v3114
      %v3235 = vadd.f32 %v3029, %v3117
      %v3236 = vadd.f32 %v3030, %v3122
      %v3237 = vadd.f32 %v3031, %v3125
      %v3238 = vadd.f32 %v3032, %v3130
      %v3239 = vadd.f32 %v3033, %v3133
      %v3240 = vadd.f32 %v3034, %v3138
      %v3241 = vadd.f32 %v3035, %v3141
      %v3242 = vadd.f32 %v3036, %v3146
      %v3243 = vadd.f32 %v3037, %v3149
      %v3244 = vadd.f32 %v3038, %v3154
      %v3245 = vadd.f32 %v3039, %v3157
      %v3246 = vadd.f32 %v3040, %v3162
      %v3247 = vadd.f32 %v3041, %v3165
      %v3248 = vadd.f32 %v3042, %v3170
      %v3249 = vadd.f32 %v3043, %v3173
      %v3250 = vadd.f32 %v3044, %v3178
      %v3251 = vadd.f32 %v3045, %v3181
      %v3252 = vadd.f32 %v3046, %v3186
      %v3253 = vadd.f32 %v3047, %v3189
      %v3254 = vadd.f32 %v3048, %v3194
      %v3255 = vadd.f32 %v3049, %v3197
      %v3256 = vadd.f32 %v3050, %v3202
      %v3257 = vadd.f32 %v3051, %v3205
      %v3258 = vadd.f32 %v3052, %v3210
      %v3259 = vadd.f32 %v3053, %v3213
      %v3260 = vadd.f32 %v3054, %v3218
      %v3261 = vadd.f32 %v3055, %v3221
      %v3262 = vadd.f32 %v3056, %v3226
      %v3263 = vadd.f32 %v3057, %v3229
      %v3264 = vpack.c.bf16 %v1313, %v1312
      %v3265 = vpack.c.bf16 %v1315, %v1314
      %v3266 = vpack.c.bf16 %v1317, %v1316
      %v3267 = vpack.c.bf16 %v1319, %v1318
      %v3268 = vpack.c.bf16 %v1321, %v1320
      %v3269 = vpack.c.bf16 %v1323, %v1322
      %v3270 = vpack.c.bf16 %v1325, %v1324
      %v3271 = vpack.c.bf16 %v1327, %v1326
      %v3272 = vpack.c.bf16 %v1329, %v1328
      %v3273 = vpack.c.bf16 %v1331, %v1330
      %v3274 = vpack.c.bf16 %v1333, %v1332
      %v3275 = vpack.c.bf16 %v1335, %v1334
      %v3276 = vpack.c.bf16 %v1337, %v1336
      %v3277 = vpack.c.bf16 %v1339, %v1338
      %v3278 = vpack.c.bf16 %v1341, %v1340
      %v3279 = vpack.c.bf16 %v1343, %v1342
      %s3280 = scalar_lea.vmem %s2, 16
      %v3281 = vld [vmem:[%s3280] sm:$0x3]
      %v3283 = vsel %vm380, %v3264, 0
      %v3286 = vsel %vm380, %v3265, 0
      %v3289 = vsel %vm380, %v3266, 0
      %v3292 = vsel %vm380, %v3267, 0
      %v3295 = vsel %vm380, %v3268, 0
      %v3298 = vsel %vm380, %v3269, 0
      %v3301 = vsel %vm380, %v3270, 0
      %v3304 = vsel %vm380, %v3271, 0
      %v3307 = vsel %vm380, %v3272, 0
      %v3310 = vsel %vm380, %v3273, 0
      %v3313 = vsel %vm380, %v3274, 0
      %v3316 = vsel %vm380, %v3275, 0
      %v3319 = vsel %vm380, %v3276, 0
      %v3322 = vsel %vm380, %v3277, 0
      %v3325 = vsel %vm380, %v3278, 0
      %v3328 = vsel %vm380, %v3279, 0
      %v3331 = vsel %vm1427, %v3281, 0
      %3333 = vmatprep.subr.bf16.mxu0 0
      %3334 = vmatpush1.bf16.msra.mxu0 %v3331
      %3335 = vmatprep.subr.bf16.mxu0 0
      %3336 = vmatpush1.bf16.msra.mxu0 0
      %3337 = vmatprep.subr.bf16.mxu0 0
      %3338 = vmatpush1.bf16.msra.mxu0 0
      %3339 = vmatprep.subr.bf16.mxu0 0
      %3340 = vmatpush1.bf16.msra.mxu0 0
      %3341 = vmatprep.subr.bf16.mxu0 0
      %3342 = vmatpush1.bf16.msra.mxu0 0
      %3343 = vmatprep.subr.bf16.mxu0 0
      %3344 = vmatpush1.bf16.msra.mxu0 0
      %3345 = vmatprep.subr.bf16.mxu0 0
      %3346 = vmatpush1.bf16.msra.mxu0 0
      %3347 = vmatprep.subr.bf16.mxu0 0
      %3348 = vmatpush1.bf16.msra.mxu0 0
      %3349 = vmatprep.subr.bf16.mxu0 0
      %3350 = vmatpush1.bf16.msra.mxu0 0
      %3351 = vmatprep.subr.bf16.mxu0 0
      %3352 = vmatpush1.bf16.msra.mxu0 0
      %3353 = vmatprep.subr.bf16.mxu0 0
      %3354 = vmatpush1.bf16.msra.mxu0 0
      %3355 = vmatprep.subr.bf16.mxu0 0
      %3356 = vmatpush1.bf16.msra.mxu0 0
      %3357 = vmatprep.subr.bf16.mxu0 0
      %3358 = vmatpush1.bf16.msra.mxu0 0
      %3359 = vmatprep.subr.bf16.mxu0 0
      %3360 = vmatpush1.bf16.msra.mxu0 0
      %3361 = vmatprep.subr.bf16.mxu0 0
      %3362 = vmatpush1.bf16.msra.mxu0 0
      %3363 = vmatprep.subr.bf16.mxu0 0
      %3364 = vmatpush1.bf16.msra.mxu0 0
      %3365 = vmatprep.mubr.bf16.mxu0 0
      %3366 = vmatmul.mubr.bf16.gmra.mrb[0].mxu0 %v3283
      %v3367 = vpop.f32.mrb[0].mxu0
      %v3368 = vadd.f32 0.0, %v3367
      %v3369 = vpop.f32.mrb[0].mxu0
      %v3370 = vpop.f32.mrb[0].mxu0
      %v3371 = vadd.f32 0.0, %v3370
      %v3372 = vpop.f32.mrb[0].mxu0
      %3373 = vmatprep.mubr.bf16.mxu0 0
      %3374 = vmatmul.mubr.bf16.gmra.mrb[0].mxu0 %v3286
      %v3375 = vpop.f32.mrb[0].mxu0
      %v3376 = vadd.f32 0.0, %v3375
      %v3377 = vpop.f32.mrb[0].mxu0
      %v3378 = vpop.f32.mrb[0].mxu0
      %v3379 = vadd.f32 0.0, %v3378
      %v3380 = vpop.f32.mrb[0].mxu0
      %3381 = vmatprep.mubr.bf16.mxu0 0
      %3382 = vmatmul.mubr.bf16.gmra.mrb[0].mxu0 %v3289
      %v3383 = vpop.f32.mrb[0].mxu0
      %v3384 = vadd.f32 0.0, %v3383
      %v3385 = vpop.f32.mrb[0].mxu0
      %v3386 = vpop.f32.mrb[0].mxu0
      %v3387 = vadd.f32 0.0, %v3386
      %v3388 = vpop.f32.mrb[0].mxu0
      %3389 = vmatprep.mubr.bf16.mxu0 0
      %3390 = vmatmul.mubr.bf16.gmra.mrb[0].mxu0 %v3292
      %v3391 = vpop.f32.mrb[0].mxu0
      %v3392 = vadd.f32 0.0, %v3391
      %v3393 = vpop.f32.mrb[0].mxu0
      %v3394 = vpop.f32.mrb[0].mxu0
      %v3395 = vadd.f32 0.0, %v3394
      %v3396 = vpop.f32.mrb[0].mxu0
      %3397 = vmatprep.mubr.bf16.mxu0 0
      %3398 = vmatmul.mubr.bf16.gmra.mrb[0].mxu0 %v3295
      %v3399 = vpop.f32.mrb[0].mxu0
      %v3400 = vadd.f32 0.0, %v3399
      %v3401 = vpop.f32.mrb[0].mxu0
      %v3402 = vpop.f32.mrb[0].mxu0
      %v3403 = vadd.f32 0.0, %v3402
      %v3404 = vpop.f32.mrb[0].mxu0
      %3405 = vmatprep.mubr.bf16.mxu0 0
      %3406 = vmatmul.mubr.bf16.gmra.mrb[0].mxu0 %v3298
      %v3407 = vpop.f32.mrb[0].mxu0
      %v3408 = vadd.f32 0.0, %v3407
      %v3409 = vpop.f32.mrb[0].mxu0
      %v3410 = vpop.f32.mrb[0].mxu0
      %v3411 = vadd.f32 0.0, %v3410
      %v3412 = vpop.f32.mrb[0].mxu0
      %3413 = vmatprep.mubr.bf16.mxu0 0
      %3414 = vmatmul.mubr.bf16.gmra.mrb[0].mxu0 %v3301
      %v3415 = vpop.f32.mrb[0].mxu0
      %v3416 = vadd.f32 0.0, %v3415
      %v3417 = vpop.f32.mrb[0].mxu0
      %v3418 = vpop.f32.mrb[0].mxu0
      %v3419 = vadd.f32 0.0, %v3418
      %v3420 = vpop.f32.mrb[0].mxu0
      %3421 = vmatprep.mubr.bf16.mxu0 0
      %3422 = vmatmul.mubr.bf16.gmra.mrb[0].mxu0 %v3304
      %v3423 = vpop.f32.mrb[0].mxu0
      %v3424 = vadd.f32 0.0, %v3423
      %v3425 = vpop.f32.mrb[0].mxu0
      %v3426 = vpop.f32.mrb[0].mxu0
      %v3427 = vadd.f32 0.0, %v3426
      %v3428 = vpop.f32.mrb[0].mxu0
      %3429 = vmatprep.mubr.bf16.mxu0 0
      %3430 = vmatmul.mubr.bf16.gmra.mrb[0].mxu0 %v3307
      %v3431 = vpop.f32.mrb[0].mxu0
      %v3432 = vadd.f32 0.0, %v3431
      %v3433 = vpop.f32.mrb[0].mxu0
      %v3434 = vpop.f32.mrb[0].mxu0
      %v3435 = vadd.f32 0.0, %v3434
      %v3436 = vpop.f32.mrb[0].mxu0
      %3437 = vmatprep.mubr.bf16.mxu0 0
      %3438 = vmatmul.mubr.bf16.gmra.mrb[0].mxu0 %v3310
      %v3439 = vpop.f32.mrb[0].mxu0
      %v3440 = vadd.f32 0.0, %v3439
      %v3441 = vpop.f32.mrb[0].mxu0
      %v3442 = vpop.f32.mrb[0].mxu0
      %v3443 = vadd.f32 0.0, %v3442
      %v3444 = vpop.f32.mrb[0].mxu0
      %3445 = vmatprep.mubr.bf16.mxu0 0
      %3446 = vmatmul.mubr.bf16.gmra.mrb[0].mxu0 %v3313
      %v3447 = vpop.f32.mrb[0].mxu0
      %v3448 = vadd.f32 0.0, %v3447
      %v3449 = vpop.f32.mrb[0].mxu0
      %v3450 = vpop.f32.mrb[0].mxu0
      %v3451 = vadd.f32 0.0, %v3450
      %v3452 = vpop.f32.mrb[0].mxu0
      %3453 = vmatprep.mubr.bf16.mxu0 0
      %3454 = vmatmul.mubr.bf16.gmra.mrb[0].mxu0 %v3316
      %v3455 = vpop.f32.mrb[0].mxu0
      %v3456 = vadd.f32 0.0, %v3455
      %v3457 = vpop.f32.mrb[0].mxu0
      %v3458 = vpop.f32.mrb[0].mxu0
      %v3459 = vadd.f32 0.0, %v3458
      %v3460 = vpop.f32.mrb[0].mxu0
      %3461 = vmatprep.mubr.bf16.mxu0 0
      %3462 = vmatmul.mubr.bf16.gmra.mrb[0].mxu0 %v3319
      %v3463 = vpop.f32.mrb[0].mxu0
      %v3464 = vadd.f32 0.0, %v3463
      %v3465 = vpop.f32.mrb[0].mxu0
      %v3466 = vpop.f32.mrb[0].mxu0
      %v3467 = vadd.f32 0.0, %v3466
      %v3468 = vpop.f32.mrb[0].mxu0
      %3469 = vmatprep.mubr.bf16.mxu0 0
      %3470 = vmatmul.mubr.bf16.gmra.mrb[0].mxu0 %v3322
      %v3471 = vpop.f32.mrb[0].mxu0
      %v3472 = vadd.f32 0.0, %v3471
      %v3473 = vpop.f32.mrb[0].mxu0
      %v3474 = vpop.f32.mrb[0].mxu0
      %v3475 = vadd.f32 0.0, %v3474
      %v3476 = vpop.f32.mrb[0].mxu0
      %3477 = vmatprep.mubr.bf16.mxu0 0
      %3478 = vmatmul.mubr.bf16.gmra.mrb[0].mxu0 %v3325
      %v3479 = vpop.f32.mrb[0].mxu0
      %v3480 = vadd.f32 0.0, %v3479
      %v3481 = vpop.f32.mrb[0].mxu0
      %v3482 = vpop.f32.mrb[0].mxu0
      %v3483 = vadd.f32 0.0, %v3482
      %v3484 = vpop.f32.mrb[0].mxu0
      %3485 = vmatprep.mubr.bf16.mxu0 0
      %3486 = vmatmul.mubr.bf16.gmra.mrb[0].mxu0 %v3328
      %v3487 = vpop.f32.mrb[0].mxu0
      %v3488 = vadd.f32 0.0, %v3487
      %v3489 = vpop.f32.mrb[0].mxu0
      %v3490 = vpop.f32.mrb[0].mxu0
      %v3491 = vadd.f32 0.0, %v3490
      %v3492 = vpop.f32.mrb[0].mxu0
      %3493 = vdwg.mxu0
      %v3494 = vadd.f32 %v3232, %v3368
      %v3495 = vadd.f32 %v3233, %v3371
      %v3496 = vadd.f32 %v3234, %v3376
      %v3497 = vadd.f32 %v3235, %v3379
      %v3498 = vadd.f32 %v3236, %v3384
      %v3499 = vadd.f32 %v3237, %v3387
      %v3500 = vadd.f32 %v3238, %v3392
      %v3501 = vadd.f32 %v3239, %v3395
      %v3502 = vadd.f32 %v3240, %v3400
      %v3503 = vadd.f32 %v3241, %v3403
      %v3504 = vadd.f32 %v3242, %v3408
      %v3505 = vadd.f32 %v3243, %v3411
      %v3506 = vadd.f32 %v3244, %v3416
      %v3507 = vadd.f32 %v3245, %v3419
      %v3508 = vadd.f32 %v3246, %v3424
      %v3509 = vadd.f32 %v3247, %v3427
      %v3510 = vadd.f32 %v3248, %v3432
      %v3511 = vadd.f32 %v3249, %v3435
      %v3512 = vadd.f32 %v3250, %v3440
      %v3513 = vadd.f32 %v3251, %v3443
      %v3514 = vadd.f32 %v3252, %v3448
      %v3515 = vadd.f32 %v3253, %v3451
      %v3516 = vadd.f32 %v3254, %v3456
      %v3517 = vadd.f32 %v3255, %v3459
      %v3518 = vadd.f32 %v3256, %v3464
      %v3519 = vadd.f32 %v3257, %v3467
      %v3520 = vadd.f32 %v3258, %v3472
      %v3521 = vadd.f32 %v3259, %v3475
      %v3522 = vadd.f32 %v3260, %v3480
      %v3523 = vadd.f32 %v3261, %v3483
      %v3524 = vadd.f32 %v3262, %v3488
      %v3525 = vadd.f32 %v3263, %v3491
      %v3526 = vpack.c.bf16 %v3495, %v3494
      %v3527 = vpack.c.bf16 %v3497, %v3496
      %v3528 = vpack.c.bf16 %v3499, %v3498
      %v3529 = vpack.c.bf16 %v3501, %v3500
      %v3530 = vpack.c.bf16 %v3503, %v3502
      %v3531 = vpack.c.bf16 %v3505, %v3504
      %v3532 = vpack.c.bf16 %v3507, %v3506
      %v3533 = vpack.c.bf16 %v3509, %v3508
      %v3534 = vpack.c.bf16 %v3511, %v3510
      %v3535 = vpack.c.bf16 %v3513, %v3512
      %v3536 = vpack.c.bf16 %v3515, %v3514
      %v3537 = vpack.c.bf16 %v3517, %v3516
      %v3538 = vpack.c.bf16 %v3519, %v3518
      %v3539 = vpack.c.bf16 %v3521, %v3520
      %v3540 = vpack.c.bf16 %v3523, %v3522
      %v3541 = vpack.c.bf16 %v3525, %v3524
      %v3558 = vunpack.c.l.b16 %v3526
      %v3559 = vunpack.c.h.b16 %v3526
      %v3560 = vunpack.c.l.b16 %v3527
      %v3561 = vunpack.c.h.b16 %v3527
      %v3562 = vunpack.c.l.b16 %v3528
      %v3563 = vunpack.c.h.b16 %v3528
      %v3564 = vunpack.c.l.b16 %v3529
      %v3565 = vunpack.c.h.b16 %v3529
      %v3566 = vunpack.c.l.b16 %v3530
      %v3567 = vunpack.c.h.b16 %v3530
      %v3568 = vunpack.c.l.b16 %v3531
      %v3569 = vunpack.c.h.b16 %v3531
      %v3570 = vunpack.c.l.b16 %v3532
      %v3571 = vunpack.c.h.b16 %v3532
      %v3572 = vunpack.c.l.b16 %v3533
      %v3573 = vunpack.c.h.b16 %v3533
      %v3574 = vunpack.c.l.b16 %v3534
      %v3575 = vunpack.c.h.b16 %v3534
      %v3576 = vunpack.c.l.b16 %v3535
      %v3577 = vunpack.c.h.b16 %v3535
      %v3578 = vunpack.c.l.b16 %v3536
      %v3579 = vunpack.c.h.b16 %v3536
      %v3580 = vunpack.c.l.b16 %v3537
      %v3581 = vunpack.c.h.b16 %v3537
      %v3582 = vunpack.c.l.b16 %v3538
      %v3583 = vunpack.c.h.b16 %v3538
      %v3584 = vunpack.c.l.b16 %v3539
      %v3585 = vunpack.c.h.b16 %v3539
      %v3586 = vunpack.c.l.b16 %v3540
      %v3587 = vunpack.c.h.b16 %v3540
      %v3588 = vunpack.c.l.b16 %v3541
      %v3589 = vunpack.c.h.b16 %v3541
      %v3590 = vpack.c.b16 %v3558, %v3558
      %v3591 = vpack.c.b16 %v3559, %v3559
      %v3592 = vpack.c.b16 %v3560, %v3560
      %v3593 = vpack.c.b16 %v3561, %v3561
      %v3594 = vpack.c.b16 %v3562, %v3562
      %v3595 = vpack.c.b16 %v3563, %v3563
      %v3596 = vpack.c.b16 %v3564, %v3564
      %v3597 = vpack.c.b16 %v3565, %v3565
      %v3598 = vpack.c.b16 %v3566, %v3566
      %v3599 = vpack.c.b16 %v3567, %v3567
      %v3600 = vpack.c.b16 %v3568, %v3568
      %v3601 = vpack.c.b16 %v3569, %v3569
      %v3602 = vpack.c.b16 %v3570, %v3570
      %v3603 = vpack.c.b16 %v3571, %v3571
      %v3604 = vpack.c.b16 %v3572, %v3572
      %v3605 = vpack.c.b16 %v3573, %v3573
      %v3606 = vpack.c.b16 %v3574, %v3574
      %v3607 = vpack.c.b16 %v3575, %v3575
      %v3608 = vpack.c.b16 %v3576, %v3576
      %v3609 = vpack.c.b16 %v3577, %v3577
      %v3610 = vpack.c.b16 %v3578, %v3578
      %v3611 = vpack.c.b16 %v3579, %v3579
      %v3612 = vpack.c.b16 %v3580, %v3580
      %v3613 = vpack.c.b16 %v3581, %v3581
      %v3614 = vpack.c.b16 %v3582, %v3582
      %v3615 = vpack.c.b16 %v3583, %v3583
      %v3616 = vpack.c.b16 %v3584, %v3584
      %v3617 = vpack.c.b16 %v3585, %v3585
      %v3618 = vpack.c.b16 %v3586, %v3586
      %v3619 = vpack.c.b16 %v3587, %v3587
      %v3620 = vpack.c.b16 %v3588, %v3588
      %v3621 = vpack.c.b16 %v3589, %v3589
      %vm3654 = vcmask 27648
      %3655 = vst.msk [vmem:[%s204] sm:$0xf] %vm3654, %v3590
      %3656 = vst.msk [vmem:[%s204 + $0x4] sm:$0xf] %vm3654, %v3591
      %3657 = vst.msk [vmem:[%s204 + $0x8] sm:$0xf] %vm3654, %v3592
      %3658 = vst.msk [vmem:[%s204 + $0xc] sm:$0xf] %vm3654, %v3593
      %3659 = vst.msk [vmem:[%s204 + $0x10] sm:$0xf] %vm3654, %v3594
      %3660 = vst.msk [vmem:[%s204 + $0x14] sm:$0xf] %vm3654, %v3595
      %3661 = vst.msk [vmem:[%s204 + $0x18] sm:$0xf] %vm3654, %v3596
      %3662 = vst.msk [vmem:[%s204 + $0x1c] sm:$0xf] %vm3654, %v3597
      %3663 = vst.msk [vmem:[%s204 + $0x20] sm:$0xf] %vm3654, %v3598
      %3664 = vst.msk [vmem:[%s204 + $0x24] sm:$0xf] %vm3654, %v3599
      %3665 = vst.msk [vmem:[%s204 + $0x28] sm:$0xf] %vm3654, %v3600
      %3666 = vst.msk [vmem:[%s204 + $0x2c] sm:$0xf] %vm3654, %v3601
      %3667 = vst.msk [vmem:[%s204 + $0x30] sm:$0xf] %vm3654, %v3602
      %3668 = vst.msk [vmem:[%s204 + $0x34] sm:$0xf] %vm3654, %v3603
      %3669 = vst.msk [vmem:[%s204 + $0x38] sm:$0xf] %vm3654, %v3604
      %3670 = vst.msk [vmem:[%s204 + $0x3c] sm:$0xf] %vm3654, %v3605
      %3671 = vst.msk [vmem:[%s204 + $0x40] sm:$0xf] %vm3654, %v3606
      %3672 = vst.msk [vmem:[%s204 + $0x44] sm:$0xf] %vm3654, %v3607
      %3673 = vst.msk [vmem:[%s204 + $0x48] sm:$0xf] %vm3654, %v3608
      %3674 = vst.msk [vmem:[%s204 + $0x4c] sm:$0xf] %vm3654, %v3609
      %3675 = vst.msk [vmem:[%s204 + $0x50] sm:$0xf] %vm3654, %v3610
      %3676 = vst.msk [vmem:[%s204 + $0x54] sm:$0xf] %vm3654, %v3611
      %3677 = vst.msk [vmem:[%s204 + $0x58] sm:$0xf] %vm3654, %v3612
      %3678 = vst.msk [vmem:[%s204 + $0x5c] sm:$0xf] %vm3654, %v3613
      %3679 = vst.msk [vmem:[%s204 + $0x60] sm:$0xf] %vm3654, %v3614
      %3680 = vst.msk [vmem:[%s204 + $0x64] sm:$0xf] %vm3654, %v3615
      %3681 = vst.msk [vmem:[%s204 + $0x68] sm:$0xf] %vm3654, %v3616
      %3682 = vst.msk [vmem:[%s204 + $0x6c] sm:$0xf] %vm3654, %v3617
      %3683 = vst.msk [vmem:[%s204 + $0x70] sm:$0xf] %vm3654, %v3618
      %3684 = vst.msk [vmem:[%s204 + $0x74] sm:$0xf] %vm3654, %v3619
      %3685 = vst.msk [vmem:[%s204 + $0x78] sm:$0xf] %vm3654, %v3620
      %3686 = vst.msk [vmem:[%s204 + $0x7c] sm:$0xf] %vm3654, %v3621
      %v3687 = vsel %vm380, %v3494, 0.0
      %v3688 = vsel %vm380, %v3495, 0.0
      %v3689 = vadd.f32 %v3687, %v3688
      %v3690 = vsel %vm380, %v3496, 0.0
      %v3691 = vadd.f32 %v3689, %v3690
      %v3692 = vsel %vm380, %v3497, 0.0
      %v3693 = vadd.f32 %v3691, %v3692
      %v3694 = vsel %vm380, %v3498, 0.0
      %v3695 = vadd.f32 %v3693, %v3694
      %v3696 = vsel %vm380, %v3499, 0.0
      %v3697 = vadd.f32 %v3695, %v3696
      %v3698 = vsel %vm380, %v3500, 0.0
      %v3699 = vadd.f32 %v3697, %v3698
      %v3700 = vsel %vm380, %v3501, 0.0
      %v3701 = vadd.f32 %v3699, %v3700
      %v3702 = vsel %vm380, %v3502, 0.0
      %v3703 = vadd.f32 %v3701, %v3702
      %v3704 = vsel %vm380, %v3503, 0.0
      %v3705 = vadd.f32 %v3703, %v3704
      %v3706 = vsel %vm380, %v3504, 0.0
      %v3707 = vadd.f32 %v3705, %v3706
      %v3708 = vsel %vm380, %v3505, 0.0
      %v3709 = vadd.f32 %v3707, %v3708
      %v3710 = vsel %vm380, %v3506, 0.0
      %v3711 = vadd.f32 %v3709, %v3710
      %v3712 = vsel %vm380, %v3507, 0.0
      %v3713 = vadd.f32 %v3711, %v3712
      %v3714 = vsel %vm380, %v3508, 0.0
      %v3715 = vadd.f32 %v3713, %v3714
      %v3716 = vsel %vm380, %v3509, 0.0
      %v3717 = vadd.f32 %v3715, %v3716
      %v3718 = vsel %vm380, %v3510, 0.0
      %v3719 = vadd.f32 %v3717, %v3718
      %v3720 = vsel %vm380, %v3511, 0.0
      %v3721 = vadd.f32 %v3719, %v3720
      %v3722 = vsel %vm380, %v3512, 0.0
      %v3723 = vadd.f32 %v3721, %v3722
      %v3724 = vsel %vm380, %v3513, 0.0
      %v3725 = vadd.f32 %v3723, %v3724
      %v3726 = vsel %vm380, %v3514, 0.0
      %v3727 = vadd.f32 %v3725, %v3726
      %v3728 = vsel %vm380, %v3515, 0.0
      %v3729 = vadd.f32 %v3727, %v3728
      %v3730 = vsel %vm380, %v3516, 0.0
      %v3731 = vadd.f32 %v3729, %v3730
      %v3732 = vsel %vm380, %v3517, 0.0
      %v3733 = vadd.f32 %v3731, %v3732
      %v3734 = vsel %vm380, %v3518, 0.0
      %v3735 = vadd.f32 %v3733, %v3734
      %v3736 = vsel %vm380, %v3519, 0.0
      %v3737 = vadd.f32 %v3735, %v3736
      %v3738 = vsel %vm380, %v3520, 0.0
      %v3739 = vadd.f32 %v3737, %v3738
      %v3740 = vsel %vm380, %v3521, 0.0
      %v3741 = vadd.f32 %v3739, %v3740
      %v3742 = vsel %vm380, %v3522, 0.0
      %v3743 = vadd.f32 %v3741, %v3742
      %v3744 = vsel %vm380, %v3523, 0.0
      %v3745 = vadd.f32 %v3743, %v3744
      %v3746 = vsel %vm380, %v3524, 0.0
      %v3747 = vadd.f32 %v3745, %v3746
      %v3748 = vsel %vm380, %v3525, 0.0
      %v3749 = vadd.f32 %v3747, %v3748
      %v3750 = vrot.slane %v3749, 4
      %v3751 = vadd.f32 %v3749, %v3750
      %v3752 = vrot.slane %v3751, 2
      %v3753 = vadd.f32 %v3751, %v3752
      %v3754 = vrot.slane %v3753, 1
      %v3755 = vadd.f32 %v3753, %v3754
      %v3756 = vmul.f32 %v3494, %v3494
      %v3757 = vmul.f32 %v3495, %v3495
      %v3758 = vmul.f32 %v3496, %v3496
      %v3759 = vmul.f32 %v3497, %v3497
      %v3760 = vmul.f32 %v3498, %v3498
      %v3761 = vmul.f32 %v3499, %v3499
      %v3762 = vmul.f32 %v3500, %v3500
      %v3763 = vmul.f32 %v3501, %v3501
      %v3764 = vmul.f32 %v3502, %v3502
      %v3765 = vmul.f32 %v3503, %v3503
      %v3766 = vmul.f32 %v3504, %v3504
      %v3767 = vmul.f32 %v3505, %v3505
      %v3768 = vmul.f32 %v3506, %v3506
      %v3769 = vmul.f32 %v3507, %v3507
      %v3770 = vmul.f32 %v3508, %v3508
      %v3771 = vmul.f32 %v3509, %v3509
      %v3772 = vmul.f32 %v3510, %v3510
      %v3773 = vmul.f32 %v3511, %v3511
      %v3774 = vmul.f32 %v3512, %v3512
      %v3775 = vmul.f32 %v3513, %v3513
      %v3776 = vmul.f32 %v3514, %v3514
      %v3777 = vmul.f32 %v3515, %v3515
      %v3778 = vmul.f32 %v3516, %v3516
      %v3779 = vmul.f32 %v3517, %v3517
      %v3780 = vmul.f32 %v3518, %v3518
      %v3781 = vmul.f32 %v3519, %v3519
      %v3782 = vmul.f32 %v3520, %v3520
      %v3783 = vmul.f32 %v3521, %v3521
      %v3784 = vmul.f32 %v3522, %v3522
      %v3785 = vmul.f32 %v3523, %v3523
      %v3786 = vmul.f32 %v3524, %v3524
      %v3787 = vmul.f32 %v3525, %v3525
      %v3788 = vsel %vm380, %v3756, 0.0
      %v3789 = vsel %vm380, %v3757, 0.0
      %v3790 = vadd.f32 %v3788, %v3789
      %v3791 = vsel %vm380, %v3758, 0.0
      %v3792 = vadd.f32 %v3790, %v3791
      %v3793 = vsel %vm380, %v3759, 0.0
      %v3794 = vadd.f32 %v3792, %v3793
      %v3795 = vsel %vm380, %v3760, 0.0
      %v3796 = vadd.f32 %v3794, %v3795
      %v3797 = vsel %vm380, %v3761, 0.0
      %v3798 = vadd.f32 %v3796, %v3797
      %v3799 = vsel %vm380, %v3762, 0.0
      %v3800 = vadd.f32 %v3798, %v3799
      %v3801 = vsel %vm380, %v3763, 0.0
      %v3802 = vadd.f32 %v3800, %v3801
      %v3803 = vsel %vm380, %v3764, 0.0
      %v3804 = vadd.f32 %v3802, %v3803
      %v3805 = vsel %vm380, %v3765, 0.0
      %v3806 = vadd.f32 %v3804, %v3805
      %v3807 = vsel %vm380, %v3766, 0.0
      %v3808 = vadd.f32 %v3806, %v3807
      %v3809 = vsel %vm380, %v3767, 0.0
      %v3810 = vadd.f32 %v3808, %v3809
      %v3811 = vsel %vm380, %v3768, 0.0
      %v3812 = vadd.f32 %v3810, %v3811
      %v3813 = vsel %vm380, %v3769, 0.0
      %v3814 = vadd.f32 %v3812, %v3813
      %v3815 = vsel %vm380, %v3770, 0.0
      %v3816 = vadd.f32 %v3814, %v3815
      %v3817 = vsel %vm380, %v3771, 0.0
      %v3818 = vadd.f32 %v3816, %v3817
      %v3819 = vsel %vm380, %v3772, 0.0
      %v3820 = vadd.f32 %v3818, %v3819
      %v3821 = vsel %vm380, %v3773, 0.0
      %v3822 = vadd.f32 %v3820, %v3821
      %v3823 = vsel %vm380, %v3774, 0.0
      %v3824 = vadd.f32 %v3822, %v3823
      %v3825 = vsel %vm380, %v3775, 0.0
      %v3826 = vadd.f32 %v3824, %v3825
      %v3827 = vsel %vm380, %v3776, 0.0
      %v3828 = vadd.f32 %v3826, %v3827
      %v3829 = vsel %vm380, %v3777, 0.0
      %v3830 = vadd.f32 %v3828, %v3829
      %v3831 = vsel %vm380, %v3778, 0.0
      %v3832 = vadd.f32 %v3830, %v3831
      %v3833 = vsel %vm380, %v3779, 0.0
      %v3834 = vadd.f32 %v3832, %v3833
      %v3835 = vsel %vm380, %v3780, 0.0
      %v3836 = vadd.f32 %v3834, %v3835
      %v3837 = vsel %vm380, %v3781, 0.0
      %v3838 = vadd.f32 %v3836, %v3837
      %v3839 = vsel %vm380, %v3782, 0.0
      %v3840 = vadd.f32 %v3838, %v3839
      %v3841 = vsel %vm380, %v3783, 0.0
      %v3842 = vadd.f32 %v3840, %v3841
      %v3843 = vsel %vm380, %v3784, 0.0
      %v3844 = vadd.f32 %v3842, %v3843
      %v3845 = vsel %vm380, %v3785, 0.0
      %v3846 = vadd.f32 %v3844, %v3845
      %v3847 = vsel %vm380, %v3786, 0.0
      %v3848 = vadd.f32 %v3846, %v3847
      %v3849 = vsel %vm380, %v3787, 0.0
      %v3850 = vadd.f32 %v3848, %v3849
      %v3851 = vrot.slane %v3850, 4
      %v3852 = vadd.f32 %v3850, %v3851
      %v3853 = vrot.slane %v3852, 2
      %v3854 = vadd.f32 %v3852, %v3853
      %v3855 = vrot.slane %v3854, 1
      %v3856 = vadd.f32 %v3854, %v3855
      %vm3857 = vcmask 1040384
      %v3858 = vsel %vm3857, %v3755, %v3856
      %vm3859 = vcmask 25600
      %3860 = vst.msk [vmem:[%s208] sm:$0x3] %vm3859, %v3858
      %p3861 = scmp.lt.s32.totalorder %s16, 1
      %s3862 = scalar_select %p3861, %s16, 1
      %s3863 = smul.addr %s3862, 32
      %s3864 = smul.addr %s3863, 4
      %s3865 = scalar_lea.vmem %s3, %s3864
      %p3866 = scmp.lt.s32.totalorder %s16, 1
      %s3867 = scalar_select %p3866, %s16, 1
      %s3868 = smul.addr %s3867, 2
      %s3869 = scalar_lea.vmem %s4, %s3868
      // Predicated region
      $region33: #{bottleneck_forward.5} parent=31 // pred_check
        %p3870 = pneg %p102
      $region34: #{bottleneck_forward.5} parent=31 // pred_check_branch
        %3872 = sbr.rel (%p3870) target = $region36
      $region35: #{bottleneck_forward.5} parent=31 // pred_region
        _
      $region36: #{bottleneck_forward.5} parent=31 // pred_fallthru
        _
      // Predicated region
      $region37: #{bottleneck_forward.5} parent=31 // pred_check
        %p3873 = pneg %p128
      $region38: #{bottleneck_forward.5} parent=31 // pred_check_branch
        %3875 = sbr.rel (%p3873) target = $region40
      $region39: #{bottleneck_forward.5} parent=31 // pred_region
        _
      $region40: #{bottleneck_forward.5} parent=31 // pred_fallthru
        _
    $region32: #{bottleneck_forward.5} parent=5 // pred_fallthru
      _
    %p3876 = scmp.le.s32.totalorder 2, %s11
    // Predicated region
    $region41: #{bottleneck_forward.5} parent=5 // pred_check
      %p3877 = pneg %p3876
    $region42: #{bottleneck_forward.5} parent=5 // pred_check_branch
      %3879 = sbr.rel (%p3877) target = $region44
    $region43: #{bottleneck_forward.5} parent=5 // pred_region
      %s3880 = ssub.s32 %s11, 2
      // Predicated region
      $region45: #{bottleneck_forward.5} parent=43 // pred_check
        %p3881 = pneg %p108
      $region46: #{bottleneck_forward.5} parent=43 // pred_check_branch
        %3883 = sbr.rel (%p3881) target = $region48
      $region47: #{bottleneck_forward.5} parent=43 // pred_region
        %p3884 = scmp.lt.s32.totalorder %s17, 1
        %s3885 = scalar_select %p3884, %s17, 1
        %s3886 = smul.addr %s3885, 32
        %s3887 = smul.addr %s3886, 4
        %s3888 = scalar_lea.vmem %s3, %s3887
      $region48: #{bottleneck_forward.5} parent=43 // pred_fallthru
        _
      // Predicated region
      $region49: #{bottleneck_forward.5} parent=43 // pred_check
        %p3889 = pneg %p134
      $region50: #{bottleneck_forward.5} parent=43 // pred_check_branch
        %3891 = sbr.rel (%p3889) target = $region52
      $region51: #{bottleneck_forward.5} parent=43 // pred_region
        %p3892 = scmp.lt.s32.totalorder %s17, 1
        %s3893 = scalar_select %p3892, %s17, 1
        %s3894 = smul.addr %s3893, 2
        %s3895 = scalar_lea.vmem %s4, %s3894
      $region52: #{bottleneck_forward.5} parent=43 // pred_fallthru
        _
    $region44: #{bottleneck_forward.5} parent=5 // pred_fallthru
      _
  $region6: #{bottleneck_forward.5} parent=0 // loop_footer
    %s15 = sadd.s32 1, %s11
  $region7: #{bottleneck_forward.5} parent=0 // loop_footer_branch
    %10 = sbr.rel target = $region3
  $region8: #{bottleneck_forward.5} parent=0 // loop_exit
    _

</llo_original>
